<compile_context>
chip_gen: v6e
topology: v6e:2x2x1
jax: 0.10.0
libtpu: 0.0.40
codegen_flags: <defaults>
</compile_context>

<pallas_src>
import jax
import jax.numpy as jnp
import numpy as np
from jax.experimental import pallas as pl
from jax.experimental.pallas import tpu as pltpu

WINDOW = 3
SINGLE_MLP = [768, 128]        # per-frame MLP widths
JOINT_MLP = [64, 2]            # classifier widths
F_SINGLE = SINGLE_MLP[-1]      # 128 features per frame
F_CAT = F_SINGLE * WINDOW      # 384 concatenated features


def _round_up(a, b):
    return (a + b - 1) // b * b


def _vmem_budget_bytes():
    """(usable budget for tiles, vmem_limit_bytes to request)."""
    try:
        cap = int(pltpu.get_tpu_info().vmem_capacity_bytes)
    except Exception:
        cap = 64 * 1024 * 1024                      # conservative: v7x per-TC VMEM
    limit = min(cap, 100 * 1024 * 1024)             # never request > ~100 MiB scoped
    budget = min(int(cap * 3 // 4), 96 * 1024 * 1024)
    return budget, limit


def _pick_tiles(M, D_in, budget_bytes):
    """Choose (tm, tk). tm is always a multiple of WINDOW."""
    H1, F1 = SINGLE_MLP
    # Single M tile for small problems; 384 (= 128 batches * WINDOW, multiple of
    # the bf16 (16,128) sublane tile) otherwise.
    tm = M if M <= 768 else 384
    # Grid-invariant operands, double-buffered by the default pipeliner.
    small = 2 * (H1 * F1 * 2                         # w2 (bf16)
                 + F_CAT * JOINT_MLP[0] * 4          # w3
                 + JOINT_MLP[0] * JOINT_MLP[1] * 4   # w4
                 + (H1 + F1 + JOINT_MLP[0] + JOINT_MLP[1]) * 4)   # biases
    acc = tm * H1 * 4                                # f32 K-accumulator scratch
    fixed = small + acc + (2 << 20)                  # 2 MiB slack (out blocks, internals)
    per_tk = 4 * (tm + H1)                           # bf16 x tile + bf16 w1 tile, x2 buffers
    tk = (budget_bytes - fixed) // per_tk
    tk = max(128, (tk // 128) * 128)                 # lane / bf16-sublane aligned
    tk = min(tk, _round_up(D_in, 128))
    return tm, tk


def _multi_image_kernel(x_ref,           # (tm, tk)  bf16, rows ordered (b, w)
                        w1_ref, b1_ref,  # (tk, 768) bf16, (1, 768) f32
                        w2_ref, b2_ref,  # (768, 128) bf16, (1, 128) f32
                        w3_ref, b3_ref,  # (384, 64) f32,  (1, 64) f32
                        w4_ref, b4_ref,  # (64, 2) f32,    (1, 2) f32
                        out_ref,         # (bm, 2) f32
                        acc_ref):        # VMEM scratch (tm, 768) f32 — K accumulator
    k = pl.program_id(1)

    @pl.when(k == 0)
    def _():
        acc_ref[...] = jnp.zeros_like(acc_ref)

    # First Linear of SingleImageModel, K-tiled over D_in.
    # Native bf16 x bf16 MXU matmul with f32 accumulation (no in-kernel upcast).
    acc_ref[...] += jnp.dot(x_ref[...], w1_ref[...],
                            preferred_element_type=jnp.float32)

    @pl.when(k == pl.num_programs(1) - 1)
    def _():
        # ReLU + second Linear over all frames of this M tile at once.
        h = jnp.maximum(acc_ref[...] + b1_ref[...], 0.0)                   # (tm, 768) f32
        f = jnp.dot(h.astype(jnp.bfloat16), w2_ref[...],
                    preferred_element_type=jnp.float32) + b2_ref[...]      # (tm, 128) f32

        tm = f.shape[0]
        bm = tm // WINDOW

        # Classifier on the concatenated features without materializing the
        # concat: cat[b] @ W3 = sum_w f[b*WINDOW + w] @ W3[w*128:(w+1)*128].
        # Row selection is a tiny tile-local 0/1 matmul ((bm, tm) @ (tm, 128));
        # with M-tiling its cost is O(B) overall and negligible vs. the main GEMM.
        row = jax.lax.broadcasted_iota(jnp.int32, (bm, tm), 1)
        bat = jax.lax.broadcasted_iota(jnp.int32, (bm, tm), 0)
        h2 = jnp.zeros((bm, JOINT_MLP[0]), jnp.float32)
        for w in range(WINDOW):
            sel_w = (row == bat * WINDOW + w).astype(jnp.float32)          # (bm, tm)
            f_w = jnp.dot(sel_w, f, preferred_element_type=jnp.float32)    # (bm, 128)
            h2 = h2 + jnp.dot(
                f_w, w3_ref[pl.ds(w * F_SINGLE, F_SINGLE), :],
                preferred_element_type=jnp.float32)                        # (bm, 64)

        h2 = jnp.maximum(h2 + b3_ref[...], 0.0)
        out_ref[...] = (jnp.dot(h2, w4_ref[...],
                                preferred_element_type=jnp.float32)
                        + b4_ref[...])


@jax.jit
def multi_image_forward(x, params):
    """x: (B, window, C, H, W) float32 (PyTorch NCHW frames)."""
    B, Wn, C, H, Wd = x.shape
    assert Wn == WINDOW
    D_in = C * H * Wd
    M = B * Wn

    w1, b1, w2, b2, w3, b3, w4, b4 = params

    budget, vmem_limit = _vmem_budget_bytes()
    tm, tk = _pick_tiles(M, D_in, budget)
    nm = pl.cdiv(M, tm)
    nk = pl.cdiv(D_in, tk)
    M_pad = nm * tm
    D_pad = nk * tk
    bm = tm // WINDOW
    B_pad = M_pad // WINDOW

    # Layout-preserving flatten (row r = b*WINDOW + w); bf16 halves x HBM bytes.
    x2 = x.reshape(M, D_in).astype(jnp.bfloat16)
    if M_pad > M or D_pad > D_in:
        x2 = jnp.pad(x2, ((0, M_pad - M), (0, D_pad - D_in)))
    w1p = jnp.pad(w1, ((0, D_pad - D_in), (0, 0))) if D_pad > D_in else w1

    grid_spec = pltpu.PrefetchScalarGridSpec(
        num_scalar_prefetch=0,
        grid=(nm, nk),
        in_specs=[
            pl.BlockSpec((tm, tk), lambda m, k: (m, k)),                 # x (bf16)
            pl.BlockSpec((tk, SINGLE_MLP[0]), lambda m, k: (k, 0)),      # w1 (bf16, K-tiled)
            pl.BlockSpec(b1.shape, lambda m, k: (0, 0)),
            pl.BlockSpec(w2.shape, lambda m, k: (0, 0)),
            pl.BlockSpec(b2.shape, lambda m, k: (0, 0)),
            pl.BlockSpec(w3.shape, lambda m, k: (0, 0)),
            pl.BlockSpec(b3.shape, lambda m, k: (0, 0)),
            pl.BlockSpec(w4.shape, lambda m, k: (0, 0)),
            pl.BlockSpec(b4.shape, lambda m, k: (0, 0)),
        ],
        out_specs=pl.BlockSpec((bm, JOINT_MLP[-1]), lambda m, k: (m, 0)),
        scratch_shapes=[pltpu.VMEM((tm, SINGLE_MLP[0]), jnp.float32)],
    )

    out = pl.pallas_call(
        _multi_image_kernel,
        grid_spec=grid_spec,
        out_shape=jax.ShapeDtypeStruct((B_pad, JOINT_MLP[-1]), jnp.float32),
        compiler_params=pltpu.CompilerParams(
            dimension_semantics=("parallel", "arbitrary"),
            vmem_limit_bytes=int(vmem_limit)),
    )(x2, w1p, b1, w2, b2, w3, b3, w4, b4)

    return out[:B]


def make_params(D_in, key):
    ks = jax.random.split(key, 8)
    scale = 0.02
    # Large per-frame weights stored in bf16 (streamed at half the HBM bytes and
    # consumed natively by the MXU); biases / tiny classifier weights stay f32.
    w1 = (jax.random.normal(ks[0], (D_in, SINGLE_MLP[0]), jnp.float32) * scale
          ).astype(jnp.bfloat16)
    b1 = jax.random.normal(ks[1], (1, SINGLE_MLP[0]), jnp.float32) * scale
    w2 = (jax.random.normal(ks[2], (SINGLE_MLP[0], SINGLE_MLP[1]), jnp.float32) * scale
          ).astype(jnp.bfloat16)
    b2 = jax.random.normal(ks[3], (1, SINGLE_MLP[1]), jnp.float32) * scale
    w3 = jax.random.normal(ks[4], (F_CAT, JOINT_MLP[0]), jnp.float32) * scale
    b3 = jax.random.normal(ks[5], (1, JOINT_MLP[0]), jnp.float32) * scale
    w4 = jax.random.normal(ks[6], (JOINT_MLP[0], JOINT_MLP[1]), jnp.float32) * scale
    b4 = jax.random.normal(ks[7], (1, JOINT_MLP[1]), jnp.float32) * scale
    return (w1, b1, w2, b2, w3, b3, w4, b4)


def reference_forward(x, params):
    """Pure-JAX mirror of the assumed PyTorch forward (same bf16 quantization)."""
    w1, b1, w2, b2, w3, b3, w4, b4 = params
    B, Wn = x.shape[0], x.shape[1]
    xw = jnp.transpose(x.astype(jnp.bfloat16), (1, 0, 2, 3, 4)).reshape(Wn, B, -1)
    feats = []
    for w in range(Wn):
        h = jnp.maximum(
            jnp.dot(xw[w], w1, preferred_element_type=jnp.float32) + b1, 0.0)
        feats.append(
            jnp.dot(h.astype(jnp.bfloat16), w2,
                    preferred_element_type=jnp.float32) + b2)
    cat = jnp.concatenate(feats, axis=1)
    h = jnp.maximum(cat @ w3 + b3, 0.0)
    return h @ w4 + b4


if __name__ == "__main__":
    key = jax.random.PRNGKey(0)
    kx, kp = jax.random.split(key)

    B, C, H, W = 2, 4, 16, 16            # small shapes; D_in = 4*16*16 = 1024
    x = jax.random.normal(kx, (B, WINDOW, C, H, W), jnp.float32)
    params = make_params(C * H * W, kp)

    out = jax.block_until_ready(multi_image_forward(x, params))

    ref = reference_forward(x, params)
    np.testing.assert_allclose(np.asarray(out), np.asarray(ref), rtol=5e-3, atol=1e-4)
    assert out.shape == (B, JOINT_MLP[-1])
    print("KERNEL_OK")
</pallas_src>

<mosaic_0001>
module attributes {stable_mosaic.version = 11 : i64} {
  func.func @_multi_image_kernel(%arg0: i32, %arg1: i32, %arg2: memref<6x1024xbf16, #tpu.memory_space<vmem>>, %arg3: memref<1024x768xbf16, #tpu.memory_space<vmem>>, %arg4: memref<1x768xf32, #tpu.memory_space<vmem>>, %arg5: memref<768x128xbf16, #tpu.memory_space<vmem>>, %arg6: memref<1x128xf32, #tpu.memory_space<vmem>>, %arg7: memref<384x64xf32, #tpu.memory_space<vmem>>, %arg8: memref<1x64xf32, #tpu.memory_space<vmem>>, %arg9: memref<64x2xf32, #tpu.memory_space<vmem>>, %arg10: memref<1x2xf32, #tpu.memory_space<vmem>>, %arg11: memref<2x2xf32, #tpu.memory_space<vmem>>, %arg12: memref<6x768xf32, #tpu.memory_space<vmem>>) attributes {dimension_semantics = [#tpu.dimension_semantics<parallel>, #tpu.dimension_semantics<arbitrary>], iteration_bounds = array<i64: 1, 1>, scalar_prefetch = 0 : i64, scratch_operands = 1 : i64, tpu.core_type = #tpu.core_type<tc>, window_params = [{transform_indices = @transform_0, window_bounds = array<i64: 6, 1024>}, {transform_indices = @transform_1, window_bounds = array<i64: 1024, 768>}, {pipeline_mode = #tpu.pipeline_mode<synchronous>, transform_indices = @transform_2, window_bounds = array<i64: 1, 768>}, {pipeline_mode = #tpu.pipeline_mode<synchronous>, transform_indices = @transform_3, window_bounds = array<i64: 768, 128>}, {pipeline_mode = #tpu.pipeline_mode<synchronous>, transform_indices = @transform_4, window_bounds = array<i64: 1, 128>}, {pipeline_mode = #tpu.pipeline_mode<synchronous>, transform_indices = @transform_5, window_bounds = array<i64: 384, 64>}, {pipeline_mode = #tpu.pipeline_mode<synchronous>, transform_indices = @transform_6, window_bounds = array<i64: 1, 64>}, {pipeline_mode = #tpu.pipeline_mode<synchronous>, transform_indices = @transform_7, window_bounds = array<i64: 64, 2>}, {pipeline_mode = #tpu.pipeline_mode<synchronous>, transform_indices = @transform_8, window_bounds = array<i64: 1, 2>}, {transform_indices = @transform_9, window_bounds = array<i64: 2, 2>}]} {
    %c0_i32 = arith.constant 0 : i32
    %0 = arith.cmpi eq, %arg1, %c0_i32 : i32
    %1 = arith.extui %0 : i1 to i32
    %c0_i32_0 = arith.constant 0 : i32
    %2 = arith.cmpi ne, %1, %c0_i32_0 : i32
    scf.if %2 {
      %cst_10 = arith.constant 0.000000e+00 : f32
      %12 = vector.broadcast %cst_10 : f32 to vector<6x768xf32>
      %c0_11 = arith.constant 0 : index
      %c0_12 = arith.constant 0 : index
      %13 = vector.load %arg12[%c0_11, %c0_12] : memref<6x768xf32, #tpu.memory_space<vmem>>, vector<6x768xf32>
      tpu.vector_store %arg12[%c0_11, %c0_12], %12 {strides = array<i32>} : memref<6x768xf32, #tpu.memory_space<vmem>>, vector<6x768xf32>,
    } else {
    }
    %c0 = arith.constant 0 : index
    %c0_1 = arith.constant 0 : index
    %3 = vector.load %arg12[%c0, %c0_1] : memref<6x768xf32, #tpu.memory_space<vmem>>, vector<6x768xf32>
    %c0_2 = arith.constant 0 : index
    %c0_3 = arith.constant 0 : index
    %4 = vector.load %arg2[%c0_2, %c0_3] : memref<6x1024xbf16, #tpu.memory_space<vmem>>, vector<6x1024xbf16>
    %c0_4 = arith.constant 0 : index
    %c0_5 = arith.constant 0 : index
    %5 = vector.load %arg3[%c0_4, %c0_5] : memref<1024x768xbf16, #tpu.memory_space<vmem>>, vector<1024x768xbf16>
    %cst = arith.constant dense<0.000000e+00> : vector<6x768xf32>
    %6 = tpu.matmul %4, %5, %cst {dimension_numbers = #tpu.dot_dimension_numbers<[1], [0], [0], [1], [0, 0, 1, 1], [], []>} : vector<6x1024xbf16>, vector<1024x768xbf16>, vector<6x768xf32> -> vector<6x768xf32>
    %7 = arith.addf %3, %6 : vector<6x768xf32>
    %c0_6 = arith.constant 0 : index
    %c0_7 = arith.constant 0 : index
    %8 = vector.load %arg12[%c0_6, %c0_7] : memref<6x768xf32, #tpu.memory_space<vmem>>, vector<6x768xf32>
    tpu.vector_store %arg12[%c0_6, %c0_7], %7 {strides = array<i32>} : memref<6x768xf32, #tpu.memory_space<vmem>>, vector<6x768xf32>,
    %c0_i32_8 = arith.constant 0 : i32
    %9 = arith.cmpi eq, %arg1, %c0_i32_8 : i32
    %10 = arith.extui %9 : i1 to i32
    %c0_i32_9 = arith.constant 0 : i32
    %11 = arith.cmpi ne, %10, %c0_i32_9 : i32
    scf.if %11 {
      %c0_10 = arith.constant 0 : index
      %c0_11 = arith.constant 0 : index
      %12 = vector.load %arg12[%c0_10, %c0_11] : memref<6x768xf32, #tpu.memory_space<vmem>>, vector<6x768xf32>
      %c0_12 = arith.constant 0 : index
      %c0_13 = arith.constant 0 : index
      %13 = vector.load %arg4[%c0_12, %c0_13] : memref<1x768xf32, #tpu.memory_space<vmem>>, vector<1x768xf32>
      %14 = vector.broadcast %13 : vector<1x768xf32> to vector<6x768xf32>
      %15 = arith.addf %12, %14 : vector<6x768xf32>
      %cst_14 = arith.constant 0.000000e+00 : f32
      %16 = vector.broadcast %cst_14 : f32 to vector<6x768xf32>
      %17 = arith.maximumf %15, %16 : vector<6x768xf32>
      %18 = arith.truncf %17 : vector<6x768xf32> to vector<6x768xbf16>
      %c0_15 = arith.constant 0 : index
      %c0_16 = arith.constant 0 : index
      %19 = vector.load %arg5[%c0_15, %c0_16] : memref<768x128xbf16, #tpu.memory_space<vmem>>, vector<768x128xbf16>
      %cst_17 = arith.constant dense<0.000000e+00> : vector<6x128xf32>
      %20 = tpu.matmul %18, %19, %cst_17 {dimension_numbers = #tpu.dot_dimension_numbers<[1], [0], [0], [1], [0, 0, 1, 1], [], []>} : vector<6x768xbf16>, vector<768x128xbf16>, vector<6x128xf32> -> vector<6x128xf32>
      %c0_18 = arith.constant 0 : index
      %c0_19 = arith.constant 0 : index
      %21 = vector.load %arg6[%c0_18, %c0_19] : memref<1x128xf32, #tpu.memory_space<vmem>>, vector<1x128xf32>
      %22 = vector.broadcast %21 : vector<1x128xf32> to vector<6x128xf32>
      %23 = arith.addf %20, %22 : vector<6x128xf32>
      %24 = tpu.iota {dimensions = array<i32: 1>} : vector<2x6xi32>
      %25 = tpu.iota {dimensions = array<i32: 0>} : vector<2x6xi32>
      %cst_20 = arith.constant 0.000000e+00 : f32
      %26 = vector.broadcast %cst_20 : f32 to vector<2x64xf32>
      %c3_i32 = arith.constant 3 : i32
      %27 = vector.broadcast %c3_i32 : i32 to vector<2x6xi32>
      %28 = arith.muli %25, %27 : vector<2x6xi32>
      %c0_i32_21 = arith.constant 0 : i32
      %29 = vector.broadcast %c0_i32_21 : i32 to vector<2x6xi32>
      %30 = arith.addi %28, %29 : vector<2x6xi32>
      %31 = arith.cmpi eq, %24, %30 : vector<2x6xi32>
      %32 = arith.extui %31 : vector<2x6xi1> to vector<2x6xi32>
      %33 = arith.sitofp %32 : vector<2x6xi32> to vector<2x6xf32>
      %cst_22 = arith.constant dense<0.000000e+00> : vector<2x128xf32>
      %34 = tpu.matmul %33, %23, %cst_22 {dimension_numbers = #tpu.dot_dimension_numbers<[1], [0], [0], [1], [0, 0, 1, 1], [], []>} : vector<2x6xf32>, vector<6x128xf32>, vector<2x128xf32> -> vector<2x128xf32>
      %c0_23 = arith.constant 0 : index
      %c0_24 = arith.constant 0 : index
      %35 = vector.load %arg7[%c0_23, %c0_24] : memref<384x64xf32, #tpu.memory_space<vmem>>, vector<128x64xf32>
      %cst_25 = arith.constant dense<0.000000e+00> : vector<2x64xf32>
      %36 = tpu.matmul %34, %35, %cst_25 {dimension_numbers = #tpu.dot_dimension_numbers<[1], [0], [0], [1], [0, 0, 1, 1], [], []>} : vector<2x128xf32>, vector<128x64xf32>, vector<2x64xf32> -> vector<2x64xf32>
      %37 = arith.addf %26, %36 : vector<2x64xf32>
      %c3_i32_26 = arith.constant 3 : i32
      %38 = vector.broadcast %c3_i32_26 : i32 to vector<2x6xi32>
      %39 = arith.muli %25, %38 : vector<2x6xi32>
      %c1_i32 = arith.constant 1 : i32
      %40 = vector.broadcast %c1_i32 : i32 to vector<2x6xi32>
      %41 = arith.addi %39, %40 : vector<2x6xi32>
      %42 = arith.cmpi eq, %24, %41 : vector<2x6xi32>
      %43 = arith.extui %42 : vector<2x6xi1> to vector<2x6xi32>
      %44 = arith.sitofp %43 : vector<2x6xi32> to vector<2x6xf32>
      %cst_27 = arith.constant dense<0.000000e+00> : vector<2x128xf32>
      %45 = tpu.matmul %44, %23, %cst_27 {dimension_numbers = #tpu.dot_dimension_numbers<[1], [0], [0], [1], [0, 0, 1, 1], [], []>} : vector<2x6xf32>, vector<6x128xf32>, vector<2x128xf32> -> vector<2x128xf32>
      %c128 = arith.constant 128 : index
      %c0_28 = arith.constant 0 : index
      %46 = vector.load %arg7[%c128, %c0_28] : memref<384x64xf32, #tpu.memory_space<vmem>>, vector<128x64xf32>
      %cst_29 = arith.constant dense<0.000000e+00> : vector<2x64xf32>
      %47 = tpu.matmul %45, %46, %cst_29 {dimension_numbers = #tpu.dot_dimension_numbers<[1], [0], [0], [1], [0, 0, 1, 1], [], []>} : vector<2x128xf32>, vector<128x64xf32>, vector<2x64xf32> -> vector<2x64xf32>
      %48 = arith.addf %37, %47 : vector<2x64xf32>
      %c3_i32_30 = arith.constant 3 : i32
      %49 = vector.broadcast %c3_i32_30 : i32 to vector<2x6xi32>
      %50 = arith.muli %25, %49 : vector<2x6xi32>
      %c2_i32 = arith.constant 2 : i32
      %51 = vector.broadcast %c2_i32 : i32 to vector<2x6xi32>
      %52 = arith.addi %50, %51 : vector<2x6xi32>
      %53 = arith.cmpi eq, %24, %52 : vector<2x6xi32>
      %54 = arith.extui %53 : vector<2x6xi1> to vector<2x6xi32>
      %55 = arith.sitofp %54 : vector<2x6xi32> to vector<2x6xf32>
      %cst_31 = arith.constant dense<0.000000e+00> : vector<2x128xf32>
      %56 = tpu.matmul %55, %23, %cst_31 {dimension_numbers = #tpu.dot_dimension_numbers<[1], [0], [0], [1], [0, 0, 1, 1], [], []>} : vector<2x6xf32>, vector<6x128xf32>, vector<2x128xf32> -> vector<2x128xf32>
      %c256 = arith.constant 256 : index
      %c0_32 = arith.constant 0 : index
      %57 = vector.load %arg7[%c256, %c0_32] : memref<384x64xf32, #tpu.memory_space<vmem>>, vector<128x64xf32>
      %cst_33 = arith.constant dense<0.000000e+00> : vector<2x64xf32>
      %58 = tpu.matmul %56, %57, %cst_33 {dimension_numbers = #tpu.dot_dimension_numbers<[1], [0], [0], [1], [0, 0, 1, 1], [], []>} : vector<2x128xf32>, vector<128x64xf32>, vector<2x64xf32> -> vector<2x64xf32>
      %59 = arith.addf %48, %58 : vector<2x64xf32>
      %c0_34 = arith.constant 0 : index
      %c0_35 = arith.constant 0 : index
      %60 = vector.load %arg8[%c0_34, %c0_35] : memref<1x64xf32, #tpu.memory_space<vmem>>, vector<1x64xf32>
      %61 = vector.broadcast %60 : vector<1x64xf32> to vector<2x64xf32>
      %62 = arith.addf %59, %61 : vector<2x64xf32>
      %cst_36 = arith.constant 0.000000e+00 : f32
      %63 = vector.broadcast %cst_36 : f32 to vector<2x64xf32>
      %64 = arith.maximumf %62, %63 : vector<2x64xf32>
      %c0_37 = arith.constant 0 : index
      %c0_38 = arith.constant 0 : index
      %65 = vector.load %arg9[%c0_37, %c0_38] : memref<64x2xf32, #tpu.memory_space<vmem>>, vector<64x2xf32>
      %cst_39 = arith.constant dense<0.000000e+00> : vector<2x2xf32>
      %66 = tpu.matmul %64, %65, %cst_39 {dimension_numbers = #tpu.dot_dimension_numbers<[1], [0], [0], [1], [0, 0, 1, 1], [], []>} : vector<2x64xf32>, vector<64x2xf32>, vector<2x2xf32> -> vector<2x2xf32>
      %c0_40 = arith.constant 0 : index
      %c0_41 = arith.constant 0 : index
      %67 = vector.load %arg10[%c0_40, %c0_41] : memref<1x2xf32, #tpu.memory_space<vmem>>, vector<1x2xf32>
      %68 = vector.broadcast %67 : vector<1x2xf32> to vector<2x2xf32>
      %69 = arith.addf %66, %68 : vector<2x2xf32>
      %c0_42 = arith.constant 0 : index
      %c0_43 = arith.constant 0 : index
      %70 = vector.load %arg11[%c0_42, %c0_43] : memref<2x2xf32, #tpu.memory_space<vmem>>, vector<2x2xf32>
      tpu.vector_store %arg11[%c0_42, %c0_43], %69 {strides = array<i32>} : memref<2x2xf32, #tpu.memory_space<vmem>>, vector<2x2xf32>,
    } else {
    }
    return
  }
  func.func @transform_0(%arg0: i32, %arg1: i32) -> (i32, i32) {
    %c0_i32 = arith.constant 0 : i32
    return %arg0, %arg1 : i32, i32
  }
  func.func @transform_1(%arg0: i32, %arg1: i32) -> (i32, i32) {
    %c0_i32 = arith.constant 0 : i32
    %c0_i32_0 = arith.constant 0 : i32
    return %arg1, %c0_i32 : i32, i32
  }
  func.func @transform_2(%arg0: i32, %arg1: i32) -> (i32, i32) {
    %c0_i32 = arith.constant 0 : i32
    %c0_i32_0 = arith.constant 0 : i32
    %c0_i32_1 = arith.constant 0 : i32
    return %c0_i32, %c0_i32_0 : i32, i32
  }
  func.func @transform_3(%arg0: i32, %arg1: i32) -> (i32, i32) {
    %c0_i32 = arith.constant 0 : i32
    %c0_i32_0 = arith.constant 0 : i32
    %c0_i32_1 = arith.constant 0 : i32
    return %c0_i32, %c0_i32_0 : i32, i32
  }
  func.func @transform_4(%arg0: i32, %arg1: i32) -> (i32, i32) {
    %c0_i32 = arith.constant 0 : i32
    %c0_i32_0 = arith.constant 0 : i32
    %c0_i32_1 = arith.constant 0 : i32
    return %c0_i32, %c0_i32_0 : i32, i32
  }
  func.func @transform_5(%arg0: i32, %arg1: i32) -> (i32, i32) {
    %c0_i32 = arith.constant 0 : i32
    %c0_i32_0 = arith.constant 0 : i32
    %c0_i32_1 = arith.constant 0 : i32
    return %c0_i32, %c0_i32_0 : i32, i32
  }
  func.func @transform_6(%arg0: i32, %arg1: i32) -> (i32, i32) {
    %c0_i32 = arith.constant 0 : i32
    %c0_i32_0 = arith.constant 0 : i32
    %c0_i32_1 = arith.constant 0 : i32
    return %c0_i32, %c0_i32_0 : i32, i32
  }
  func.func @transform_7(%arg0: i32, %arg1: i32) -> (i32, i32) {
    %c0_i32 = arith.constant 0 : i32
    %c0_i32_0 = arith.constant 0 : i32
    %c0_i32_1 = arith.constant 0 : i32
    return %c0_i32, %c0_i32_0 : i32, i32
  }
  func.func @transform_8(%arg0: i32, %arg1: i32) -> (i32, i32) {
    %c0_i32 = arith.constant 0 : i32
    %c0_i32_0 = arith.constant 0 : i32
    %c0_i32_1 = arith.constant 0 : i32
    return %c0_i32, %c0_i32_0 : i32, i32
  }
  func.func @transform_9(%arg0: i32, %arg1: i32) -> (i32, i32) {
    %c0_i32 = arith.constant 0 : i32
    %c0_i32_0 = arith.constant 0 : i32
    return %arg0, %c0_i32 : i32, i32
  }
}

</mosaic_0001>

<llo_original>
// kernel: multi_image_forward.1
$region0: #{multi_image_forward.1}
  #allocation0 [shape = 'u32[]', space=smem, size = 0x4, offset = 0x4, fixed_abs, tag = 'smem constant byte address 0x4 - core index']
  #allocation1 [shape = 'u32[144,128]{1,0:T(1,128)}', space=vmem, size = 0x12000, scoped, tag = 'internal scratch']
  #allocation2 [shape = 'f32[6,768]{1,0:T(8,128)}', space=vmem, size = 0x6000, scoped, tag = 'scratch operand']
  %s0 = inlined_call_operand.vmem [shape: bf16[6,1024], index: 0, kind: input, shape index: {}]
  %s1 = inlined_call_operand.hbm [shape: bf16[1024,768], index: 1, kind: input, shape index: {}]
  %s2 = inlined_call_operand.hbm [shape: f32[1,768], index: 2, kind: input, shape index: {}]
  %s3 = inlined_call_operand.hbm [shape: bf16[768,128], index: 3, kind: input, shape index: {}]
  %s4 = inlined_call_operand.hbm [shape: f32[1,128], index: 4, kind: input, shape index: {}]
  %s5 = inlined_call_operand.vmem [shape: f32[384,64], index: 5, kind: input, shape index: {}]
  %s6 = inlined_call_operand.hbm [shape: f32[1,64], index: 6, kind: input, shape index: {}]
  %s7 = inlined_call_operand.vmem [shape: f32[64,2], index: 7, kind: input, shape index: {}]
  %s8 = inlined_call_operand.hbm [shape: f32[1,2], index: 8, kind: input, shape index: {}]
  %s9 = inlined_call_operand.hbm [shape: f32[2,2], index: 9, kind: output, shape index: {}]
  %s10 = sld [smem:[#allocation0]]
  $region78: #{multi_image_forward.1} parent=0
    _
  %s12 = ssub.s32 1, %s10
  %s13 = scalar_select 0, %s12, %s10
  $region1: #{multi_image_forward.1} parent=0
    #allocation3 [shape = 'u8[1572864]{0}', space=vmem, size = 0x180000, scoped, tag = 'input window, operand 1, single buffered']
    #allocation4 [shape = 's32[1]{0}', space=sflag, size = 0x4, scoped, tag = 'scoped memory for multi_image_forward.1']
    #allocation5 [shape = 's32[1]{0}', space=sflag, size = 0x4, scoped, tag = 'scoped memory for multi_image_forward.1']
    #allocation6 [shape = 'u8[3072]{0}', space=vmem, size = 0xc00, scoped, tag = 'input window, operand 2, single buffered']
    #allocation7 [shape = 's32[1]{0}', space=sflag, size = 0x4, scoped, tag = 'scoped memory for multi_image_forward.1']
    #allocation8 [shape = 'u8[196608]{0}', space=vmem, size = 0x30000, scoped, tag = 'input window, operand 3, single buffered']
    #allocation9 [shape = 'u8[512]{0}', space=vmem, size = 0x400, scoped, tag = 'input window, operand 4, single buffered']
    #allocation10 [shape = 's32[1]{0}', space=sflag, size = 0x4, scoped, tag = 'scoped memory for multi_image_forward.1']
    #allocation11 [shape = 'u8[512]{0}', space=vmem, size = 0x400, scoped, tag = 'input window, operand 6, single buffered']
    #allocation12 [shape = 'u8[512]{0}', space=vmem, size = 0x400, scoped, tag = 'input window, operand 8, single buffered']
    #allocation13 [shape = 's32[1]{0}', space=sflag, size = 0x4, scoped, tag = 'scoped memory for multi_image_forward.1']
    #allocation14 [shape = 'u8[1024]{0}', space=vmem, size = 0x400, scoped, tag = 'output window, operand 0, single buffered']
    %14 = vsyncpa [#allocation4], 0
    %15 = vsyncpa [#allocation7], 0
    %16 = vsyncpa [#allocation10], 0
    %17 = vsyncpa [#allocation13], 0
    %18 = vsyncpa [#allocation5], 0
    // Predicated region
    $region2: #{multi_image_forward.1} parent=1 // pred_check
      _
    $region3: #{multi_image_forward.1} parent=1 // pred_check_branch
      %20 = sbr.rel (0) target = $region5
    $region4: #{multi_image_forward.1} parent=1 // pred_region
      _
    $region5: #{multi_image_forward.1} parent=1 // pred_fallthru
      _
    // Predicated region
    $region6: #{multi_image_forward.1} parent=1 // pred_check
      _
    $region7: #{multi_image_forward.1} parent=1 // pred_check_branch
      %22 = sbr.rel (0) target = $region9
    $region8: #{multi_image_forward.1} parent=1 // pred_region
      %s24 = ssub.s32 49152, 49152
      %25 = vsyncadd [#allocation4], %s24
      %s26 = sshll.u32 [#allocation3], 4
      %s27 = int_to_ptr.vmem [resolvable:$true] %s26
      %32 = dma.hbm_to_vmem [thread:$0]  %s1, 49152, %s27, [#allocation4], 384, 384, 24
    $region9: #{multi_image_forward.1} parent=1 // pred_fallthru
      _
    // Predicated region
    $region10: #{multi_image_forward.1} parent=1 // pred_check
      _
    $region11: #{multi_image_forward.1} parent=1 // pred_check_branch
      %34 = sbr.rel (0) target = $region13
    $region12: #{multi_image_forward.1} parent=1 // pred_region
      %s36 = ssub.s32 96, 96
      %37 = vsyncadd [#allocation7], %s36
      %s39 = sshll.u32 [#allocation6], 4
      %s40 = int_to_ptr.vmem [resolvable:$true] %s39
      %42 = dma.hbm_to_vmem [thread:$0]  %s2, 96, %s40, [#allocation7]
    $region13: #{multi_image_forward.1} parent=1 // pred_fallthru
      _
    // Predicated region
    $region14: #{multi_image_forward.1} parent=1 // pred_check
      _
    $region15: #{multi_image_forward.1} parent=1 // pred_check_branch
      %44 = sbr.rel (0) target = $region17
    $region16: #{multi_image_forward.1} parent=1 // pred_region
      %s46 = ssub.s32 6144, 6144
      %47 = vsyncadd [#allocation7], %s46
      %s48 = sshll.u32 [#allocation8], 4
      %s49 = int_to_ptr.vmem [resolvable:$true] %s48
      %54 = dma.hbm_to_vmem [thread:$0]  %s3, 6144, %s49, [#allocation7], 64, 64, 4
    $region17: #{multi_image_forward.1} parent=1 // pred_fallthru
      _
    // Predicated region
    $region18: #{multi_image_forward.1} parent=1 // pred_check
      _
    $region19: #{multi_image_forward.1} parent=1 // pred_check_branch
      %56 = sbr.rel (0) target = $region21
    $region20: #{multi_image_forward.1} parent=1 // pred_region
      %s58 = ssub.s32 16, 16
      %59 = vsyncadd [#allocation10], %s58
      %s61 = sshll.u32 [#allocation9], 4
      %s62 = int_to_ptr.vmem [resolvable:$true] %s61
      %64 = dma.hbm_to_vmem [thread:$0]  %s4, 16, %s62, [#allocation10]
    $region21: #{multi_image_forward.1} parent=1 // pred_fallthru
      _
    // Predicated region
    $region22: #{multi_image_forward.1} parent=1 // pred_check
      _
    $region23: #{multi_image_forward.1} parent=1 // pred_check_branch
      %66 = sbr.rel (0) target = $region25
    $region24: #{multi_image_forward.1} parent=1 // pred_region
      _
    $region25: #{multi_image_forward.1} parent=1 // pred_fallthru
      _
    // Predicated region
    $region26: #{multi_image_forward.1} parent=1 // pred_check
      _
    $region27: #{multi_image_forward.1} parent=1 // pred_check_branch
      %68 = sbr.rel (0) target = $region29
    $region28: #{multi_image_forward.1} parent=1 // pred_region
      %s70 = ssub.s32 16, 16
      %71 = vsyncadd [#allocation10], %s70
      %s73 = sshll.u32 [#allocation11], 4
      %s74 = int_to_ptr.vmem [resolvable:$true] %s73
      %76 = dma.hbm_to_vmem [thread:$0]  %s6, 16, %s74, [#allocation10]
    $region29: #{multi_image_forward.1} parent=1 // pred_fallthru
      _
    // Predicated region
    $region30: #{multi_image_forward.1} parent=1 // pred_check
      _
    $region31: #{multi_image_forward.1} parent=1 // pred_check_branch
      %78 = sbr.rel (0) target = $region33
    $region32: #{multi_image_forward.1} parent=1 // pred_region
      _
    $region33: #{multi_image_forward.1} parent=1 // pred_fallthru
      _
    // Predicated region
    $region34: #{multi_image_forward.1} parent=1 // pred_check
      _
    $region35: #{multi_image_forward.1} parent=1 // pred_check_branch
      %80 = sbr.rel (0) target = $region37
    $region36: #{multi_image_forward.1} parent=1 // pred_region
      %s82 = ssub.s32 16, 16
      %83 = vsyncadd [#allocation13], %s82
      %s85 = sshll.u32 [#allocation12], 4
      %s86 = int_to_ptr.vmem [resolvable:$true] %s85
      %88 = dma.hbm_to_vmem [thread:$0]  %s8, 16, %s86, [#allocation13]
    $region37: #{multi_image_forward.1} parent=1 // pred_fallthru
      _
    // Predicated region
    $region38: #{multi_image_forward.1} parent=1 // pred_check
      _
    $region39: #{multi_image_forward.1} parent=1 // pred_check_branch
      %90 = sbr.rel (0) target = $region41
    $region40: #{multi_image_forward.1} parent=1 // pred_region
      %91 = dma.done [#allocation4], 49152
    $region41: #{multi_image_forward.1} parent=1 // pred_fallthru
      _
    // Predicated region
    $region42: #{multi_image_forward.1} parent=1 // pred_check
      _
    $region43: #{multi_image_forward.1} parent=1 // pred_check_branch
      %93 = sbr.rel (0) target = $region45
    $region44: #{multi_image_forward.1} parent=1 // pred_region
      %94 = dma.done [#allocation7], 96
    $region45: #{multi_image_forward.1} parent=1 // pred_fallthru
      _
    // Predicated region
    $region46: #{multi_image_forward.1} parent=1 // pred_check
      _
    $region47: #{multi_image_forward.1} parent=1 // pred_check_branch
      %96 = sbr.rel (0) target = $region49
    $region48: #{multi_image_forward.1} parent=1 // pred_region
      %97 = dma.done [#allocation7], 6144
    $region49: #{multi_image_forward.1} parent=1 // pred_fallthru
      _
    // Predicated region
    $region50: #{multi_image_forward.1} parent=1 // pred_check
      _
    $region51: #{multi_image_forward.1} parent=1 // pred_check_branch
      %99 = sbr.rel (0) target = $region53
    $region52: #{multi_image_forward.1} parent=1 // pred_region
      %100 = dma.done [#allocation10], 16
    $region53: #{multi_image_forward.1} parent=1 // pred_fallthru
      _
    // Predicated region
    $region54: #{multi_image_forward.1} parent=1 // pred_check
      _
    $region55: #{multi_image_forward.1} parent=1 // pred_check_branch
      %102 = sbr.rel (0) target = $region57
    $region56: #{multi_image_forward.1} parent=1 // pred_region
      %103 = dma.done [#allocation10], 16
    $region57: #{multi_image_forward.1} parent=1 // pred_fallthru
      _
    // Predicated region
    $region58: #{multi_image_forward.1} parent=1 // pred_check
      _
    $region59: #{multi_image_forward.1} parent=1 // pred_check_branch
      %105 = sbr.rel (0) target = $region61
    $region60: #{multi_image_forward.1} parent=1 // pred_region
      %106 = dma.done [#allocation13], 16
    $region61: #{multi_image_forward.1} parent=1 // pred_fallthru
      _
    %p108 = scmp.eq.s32.totalorder 0, 0
    // Predicated region
    $region62: #{multi_image_forward.1} parent=1 // pred_check
      %p109 = pneg %p108
    $region63: #{multi_image_forward.1} parent=1 // pred_check_branch
      %111 = sbr.rel (%p109) target = $region65
    $region64: #{multi_image_forward.1} parent=1 // pred_region
      %112 = vst [vmem:[#allocation2] sm:$0x3f] 0.0
      %113 = vst [vmem:[#allocation2 + $0x8] sm:$0x3f] 0.0
      %114 = vst [vmem:[#allocation2 + $0x10] sm:$0x3f] 0.0
      %115 = vst [vmem:[#allocation2 + $0x18] sm:$0x3f] 0.0
      %116 = vst [vmem:[#allocation2 + $0x20] sm:$0x3f] 0.0
      %117 = vst [vmem:[#allocation2 + $0x28] sm:$0x3f] 0.0
    $region65: #{multi_image_forward.1} parent=1 // pred_fallthru
      _
    %v118 = vld [vmem:[#allocation2] sm:$0x3f]
    %v119 = vld [vmem:[#allocation2 + $0x8] sm:$0x3f]
    %v120 = vld [vmem:[#allocation2 + $0x10] sm:$0x3f]
    %v121 = vld [vmem:[#allocation2 + $0x18] sm:$0x3f]
    %v122 = vld [vmem:[#allocation2 + $0x20] sm:$0x3f]
    %v123 = vld [vmem:[#allocation2 + $0x28] sm:$0x3f]
    %v124 = vld [vmem:[%s0] sm:$0x77]
    %v125 = vld [vmem:[%s0 + $0x8] sm:$0x77]
    %v126 = vld [vmem:[%s0 + $0x10] sm:$0x77]
    %v127 = vld [vmem:[%s0 + $0x18] sm:$0x77]
    %v128 = vld [vmem:[#allocation3] sm:$0xff]
    %v129 = vld [vmem:[#allocation3 + $0x8] sm:$0xff]
    %v130 = vld [vmem:[#allocation3 + $0x10] sm:$0xff]
    %v131 = vld [vmem:[#allocation3 + $0x18] sm:$0xff]
    %v132 = vld [vmem:[#allocation3 + $0x20] sm:$0xff]
    %v133 = vld [vmem:[#allocation3 + $0x28] sm:$0xff]
    %v134 = vld [vmem:[#allocation3 + $0x30] sm:$0xff]
    %v135 = vld [vmem:[#allocation3 + $0x38] sm:$0xff]
    %v136 = vld [vmem:[#allocation3 + $0x40] sm:$0xff]
    %v137 = vld [vmem:[#allocation3 + $0x48] sm:$0xff]
    %v138 = vld [vmem:[#allocation3 + $0x50] sm:$0xff]
    %v139 = vld [vmem:[#allocation3 + $0x58] sm:$0xff]
    %v140 = vld [vmem:[#allocation3 + $0x60] sm:$0xff]
    %v141 = vld [vmem:[#allocation3 + $0x68] sm:$0xff]
    %v142 = vld [vmem:[#allocation3 + $0x70] sm:$0xff]
    %v143 = vld [vmem:[#allocation3 + $0x78] sm:$0xff]
    %v144 = vld [vmem:[#allocation3 + $0x80] sm:$0xff]
    %v145 = vld [vmem:[#allocation3 + $0x88] sm:$0xff]
    %v146 = vld [vmem:[#allocation3 + $0x90] sm:$0xff]
    %v147 = vld [vmem:[#allocation3 + $0x98] sm:$0xff]
    %v148 = vld [vmem:[#allocation3 + $0xa0] sm:$0xff]
    %v149 = vld [vmem:[#allocation3 + $0xa8] sm:$0xff]
    %v150 = vld [vmem:[#allocation3 + $0xb0] sm:$0xff]
    %v151 = vld [vmem:[#allocation3 + $0xb8] sm:$0xff]
    %v152 = vld [vmem:[#allocation3 + $0xc0] sm:$0xff]
    %v153 = vld [vmem:[#allocation3 + $0xc8] sm:$0xff]
    %v154 = vld [vmem:[#allocation3 + $0xd0] sm:$0xff]
    %v155 = vld [vmem:[#allocation3 + $0xd8] sm:$0xff]
    %v156 = vld [vmem:[#allocation3 + $0xe0] sm:$0xff]
    %v157 = vld [vmem:[#allocation3 + $0xe8] sm:$0xff]
    %v158 = vld [vmem:[#allocation3 + $0xf0] sm:$0xff]
    %v159 = vld [vmem:[#allocation3 + $0xf8] sm:$0xff]
    %v160 = vld [vmem:[#allocation3 + $0x100] sm:$0xff]
    %v161 = vld [vmem:[#allocation3 + $0x108] sm:$0xff]
    %v162 = vld [vmem:[#allocation3 + $0x110] sm:$0xff]
    %v163 = vld [vmem:[#allocation3 + $0x118] sm:$0xff]
    %v164 = vld [vmem:[#allocation3 + $0x120] sm:$0xff]
    %v165 = vld [vmem:[#allocation3 + $0x128] sm:$0xff]
    %v166 = vld [vmem:[#allocation3 + $0x130] sm:$0xff]
    %v167 = vld [vmem:[#allocation3 + $0x138] sm:$0xff]
    %v168 = vld [vmem:[#allocation3 + $0x140] sm:$0xff]
    %v169 = vld [vmem:[#allocation3 + $0x148] sm:$0xff]
    %v170 = vld [vmem:[#allocation3 + $0x150] sm:$0xff]
    %v171 = vld [vmem:[#allocation3 + $0x158] sm:$0xff]
    %v172 = vld [vmem:[#allocation3 + $0x160] sm:$0xff]
    %v173 = vld [vmem:[#allocation3 + $0x168] sm:$0xff]
    %v174 = vld [vmem:[#allocation3 + $0x170] sm:$0xff]
    %v175 = vld [vmem:[#allocation3 + $0x178] sm:$0xff]
    %v176 = vld [vmem:[#allocation3 + $0x180] sm:$0xff]
    %v177 = vld [vmem:[#allocation3 + $0x188] sm:$0xff]
    %v178 = vld [vmem:[#allocation3 + $0x190] sm:$0xff]
    %v179 = vld [vmem:[#allocation3 + $0x198] sm:$0xff]
    %v180 = vld [vmem:[#allocation3 + $0x1a0] sm:$0xff]
    %v181 = vld [vmem:[#allocation3 + $0x1a8] sm:$0xff]
    %v182 = vld [vmem:[#allocation3 + $0x1b0] sm:$0xff]
    %v183 = vld [vmem:[#allocation3 + $0x1b8] sm:$0xff]
    %v184 = vld [vmem:[#allocation3 + $0x1c0] sm:$0xff]
    %v185 = vld [vmem:[#allocation3 + $0x1c8] sm:$0xff]
    %v186 = vld [vmem:[#allocation3 + $0x1d0] sm:$0xff]
    %v187 = vld [vmem:[#allocation3 + $0x1d8] sm:$0xff]
    %v188 = vld [vmem:[#allocation3 + $0x1e0] sm:$0xff]
    %v189 = vld [vmem:[#allocation3 + $0x1e8] sm:$0xff]
    %v190 = vld [vmem:[#allocation3 + $0x1f0] sm:$0xff]
    %v191 = vld [vmem:[#allocation3 + $0x1f8] sm:$0xff]
    %v192 = vld [vmem:[#allocation3 + $0x200] sm:$0xff]
    %v193 = vld [vmem:[#allocation3 + $0x208] sm:$0xff]
    %v194 = vld [vmem:[#allocation3 + $0x210] sm:$0xff]
    %v195 = vld [vmem:[#allocation3 + $0x218] sm:$0xff]
    %v196 = vld [vmem:[#allocation3 + $0x220] sm:$0xff]
    %v197 = vld [vmem:[#allocation3 + $0x228] sm:$0xff]
    %v198 = vld [vmem:[#allocation3 + $0x230] sm:$0xff]
    %v199 = vld [vmem:[#allocation3 + $0x238] sm:$0xff]
    %v200 = vld [vmem:[#allocation3 + $0x240] sm:$0xff]
    %v201 = vld [vmem:[#allocation3 + $0x248] sm:$0xff]
    %v202 = vld [vmem:[#allocation3 + $0x250] sm:$0xff]
    %v203 = vld [vmem:[#allocation3 + $0x258] sm:$0xff]
    %v204 = vld [vmem:[#allocation3 + $0x260] sm:$0xff]
    %v205 = vld [vmem:[#allocation3 + $0x268] sm:$0xff]
    %v206 = vld [vmem:[#allocation3 + $0x270] sm:$0xff]
    %v207 = vld [vmem:[#allocation3 + $0x278] sm:$0xff]
    %v208 = vld [vmem:[#allocation3 + $0x280] sm:$0xff]
    %v209 = vld [vmem:[#allocation3 + $0x288] sm:$0xff]
    %v210 = vld [vmem:[#allocation3 + $0x290] sm:$0xff]
    %v211 = vld [vmem:[#allocation3 + $0x298] sm:$0xff]
    %v212 = vld [vmem:[#allocation3 + $0x2a0] sm:$0xff]
    %v213 = vld [vmem:[#allocation3 + $0x2a8] sm:$0xff]
    %v214 = vld [vmem:[#allocation3 + $0x2b0] sm:$0xff]
    %v215 = vld [vmem:[#allocation3 + $0x2b8] sm:$0xff]
    %v216 = vld [vmem:[#allocation3 + $0x2c0] sm:$0xff]
    %v217 = vld [vmem:[#allocation3 + $0x2c8] sm:$0xff]
    %v218 = vld [vmem:[#allocation3 + $0x2d0] sm:$0xff]
    %v219 = vld [vmem:[#allocation3 + $0x2d8] sm:$0xff]
    %v220 = vld [vmem:[#allocation3 + $0x2e0] sm:$0xff]
    %v221 = vld [vmem:[#allocation3 + $0x2e8] sm:$0xff]
    %v222 = vld [vmem:[#allocation3 + $0x2f0] sm:$0xff]
    %v223 = vld [vmem:[#allocation3 + $0x2f8] sm:$0xff]
    %v224 = vld [vmem:[#allocation3 + $0x300] sm:$0xff]
    %v225 = vld [vmem:[#allocation3 + $0x308] sm:$0xff]
    %v226 = vld [vmem:[#allocation3 + $0x310] sm:$0xff]
    %v227 = vld [vmem:[#allocation3 + $0x318] sm:$0xff]
    %v228 = vld [vmem:[#allocation3 + $0x320] sm:$0xff]
    %v229 = vld [vmem:[#allocation3 + $0x328] sm:$0xff]
    %v230 = vld [vmem:[#allocation3 + $0x330] sm:$0xff]
    %v231 = vld [vmem:[#allocation3 + $0x338] sm:$0xff]
    %v232 = vld [vmem:[#allocation3 + $0x340] sm:$0xff]
    %v233 = vld [vmem:[#allocation3 + $0x348] sm:$0xff]
    %v234 = vld [vmem:[#allocation3 + $0x350] sm:$0xff]
    %v235 = vld [vmem:[#allocation3 + $0x358] sm:$0xff]
    %v236 = vld [vmem:[#allocation3 + $0x360] sm:$0xff]
    %v237 = vld [vmem:[#allocation3 + $0x368] sm:$0xff]
    %v238 = vld [vmem:[#allocation3 + $0x370] sm:$0xff]
    %v239 = vld [vmem:[#allocation3 + $0x378] sm:$0xff]
    %v240 = vld [vmem:[#allocation3 + $0x380] sm:$0xff]
    %v241 = vld [vmem:[#allocation3 + $0x388] sm:$0xff]
    %v242 = vld [vmem:[#allocation3 + $0x390] sm:$0xff]
    %v243 = vld [vmem:[#allocation3 + $0x398] sm:$0xff]
    %v244 = vld [vmem:[#allocation3 + $0x3a0] sm:$0xff]
    %v245 = vld [vmem:[#allocation3 + $0x3a8] sm:$0xff]
    %v246 = vld [vmem:[#allocation3 + $0x3b0] sm:$0xff]
    %v247 = vld [vmem:[#allocation3 + $0x3b8] sm:$0xff]
    %v248 = vld [vmem:[#allocation3 + $0x3c0] sm:$0xff]
    %v249 = vld [vmem:[#allocation3 + $0x3c8] sm:$0xff]
    %v250 = vld [vmem:[#allocation3 + $0x3d0] sm:$0xff]
    %v251 = vld [vmem:[#allocation3 + $0x3d8] sm:$0xff]
    %v252 = vld [vmem:[#allocation3 + $0x3e0] sm:$0xff]
    %v253 = vld [vmem:[#allocation3 + $0x3e8] sm:$0xff]
    %v254 = vld [vmem:[#allocation3 + $0x3f0] sm:$0xff]
    %v255 = vld [vmem:[#allocation3 + $0x3f8] sm:$0xff]
    %v256 = vld [vmem:[#allocation3 + $0x400] sm:$0xff]
    %v257 = vld [vmem:[#allocation3 + $0x408] sm:$0xff]
    %v258 = vld [vmem:[#allocation3 + $0x410] sm:$0xff]
    %v259 = vld [vmem:[#allocation3 + $0x418] sm:$0xff]
    %v260 = vld [vmem:[#allocation3 + $0x420] sm:$0xff]
    %v261 = vld [vmem:[#allocation3 + $0x428] sm:$0xff]
    %v262 = vld [vmem:[#allocation3 + $0x430] sm:$0xff]
    %v263 = vld [vmem:[#allocation3 + $0x438] sm:$0xff]
    %v264 = vld [vmem:[#allocation3 + $0x440] sm:$0xff]
    %v265 = vld [vmem:[#allocation3 + $0x448] sm:$0xff]
    %v266 = vld [vmem:[#allocation3 + $0x450] sm:$0xff]
    %v267 = vld [vmem:[#allocation3 + $0x458] sm:$0xff]
    %v268 = vld [vmem:[#allocation3 + $0x460] sm:$0xff]
    %v269 = vld [vmem:[#allocation3 + $0x468] sm:$0xff]
    %v270 = vld [vmem:[#allocation3 + $0x470] sm:$0xff]
    %v271 = vld [vmem:[#allocation3 + $0x478] sm:$0xff]
    %v272 = vld [vmem:[#allocation3 + $0x480] sm:$0xff]
    %v273 = vld [vmem:[#allocation3 + $0x488] sm:$0xff]
    %v274 = vld [vmem:[#allocation3 + $0x490] sm:$0xff]
    %v275 = vld [vmem:[#allocation3 + $0x498] sm:$0xff]
    %v276 = vld [vmem:[#allocation3 + $0x4a0] sm:$0xff]
    %v277 = vld [vmem:[#allocation3 + $0x4a8] sm:$0xff]
    %v278 = vld [vmem:[#allocation3 + $0x4b0] sm:$0xff]
    %v279 = vld [vmem:[#allocation3 + $0x4b8] sm:$0xff]
    %v280 = vld [vmem:[#allocation3 + $0x4c0] sm:$0xff]
    %v281 = vld [vmem:[#allocation3 + $0x4c8] sm:$0xff]
    %v282 = vld [vmem:[#allocation3 + $0x4d0] sm:$0xff]
    %v283 = vld [vmem:[#allocation3 + $0x4d8] sm:$0xff]
    %v284 = vld [vmem:[#allocation3 + $0x4e0] sm:$0xff]
    %v285 = vld [vmem:[#allocation3 + $0x4e8] sm:$0xff]
    %v286 = vld [vmem:[#allocation3 + $0x4f0] sm:$0xff]
    %v287 = vld [vmem:[#allocation3 + $0x4f8] sm:$0xff]
    %v288 = vld [vmem:[#allocation3 + $0x500] sm:$0xff]
    %v289 = vld [vmem:[#allocation3 + $0x508] sm:$0xff]
    %v290 = vld [vmem:[#allocation3 + $0x510] sm:$0xff]
    %v291 = vld [vmem:[#allocation3 + $0x518] sm:$0xff]
    %v292 = vld [vmem:[#allocation3 + $0x520] sm:$0xff]
    %v293 = vld [vmem:[#allocation3 + $0x528] sm:$0xff]
    %v294 = vld [vmem:[#allocation3 + $0x530] sm:$0xff]
    %v295 = vld [vmem:[#allocation3 + $0x538] sm:$0xff]
    %v296 = vld [vmem:[#allocation3 + $0x540] sm:$0xff]
    %v297 = vld [vmem:[#allocation3 + $0x548] sm:$0xff]
    %v298 = vld [vmem:[#allocation3 + $0x550] sm:$0xff]
    %v299 = vld [vmem:[#allocation3 + $0x558] sm:$0xff]
    %v300 = vld [vmem:[#allocation3 + $0x560] sm:$0xff]
    %v301 = vld [vmem:[#allocation3 + $0x568] sm:$0xff]
    %v302 = vld [vmem:[#allocation3 + $0x570] sm:$0xff]
    %v303 = vld [vmem:[#allocation3 + $0x578] sm:$0xff]
    %v304 = vld [vmem:[#allocation3 + $0x580] sm:$0xff]
    %v305 = vld [vmem:[#allocation3 + $0x588] sm:$0xff]
    %v306 = vld [vmem:[#allocation3 + $0x590] sm:$0xff]
    %v307 = vld [vmem:[#allocation3 + $0x598] sm:$0xff]
    %v308 = vld [vmem:[#allocation3 + $0x5a0] sm:$0xff]
    %v309 = vld [vmem:[#allocation3 + $0x5a8] sm:$0xff]
    %v310 = vld [vmem:[#allocation3 + $0x5b0] sm:$0xff]
    %v311 = vld [vmem:[#allocation3 + $0x5b8] sm:$0xff]
    %v312 = vld [vmem:[#allocation3 + $0x5c0] sm:$0xff]
    %v313 = vld [vmem:[#allocation3 + $0x5c8] sm:$0xff]
    %v314 = vld [vmem:[#allocation3 + $0x5d0] sm:$0xff]
    %v315 = vld [vmem:[#allocation3 + $0x5d8] sm:$0xff]
    %v316 = vld [vmem:[#allocation3 + $0x5e0] sm:$0xff]
    %v317 = vld [vmem:[#allocation3 + $0x5e8] sm:$0xff]
    %v318 = vld [vmem:[#allocation3 + $0x5f0] sm:$0xff]
    %v319 = vld [vmem:[#allocation3 + $0x5f8] sm:$0xff]
    %v320 = vld [vmem:[#allocation3 + $0x600] sm:$0xff]
    %v321 = vld [vmem:[#allocation3 + $0x608] sm:$0xff]
    %v322 = vld [vmem:[#allocation3 + $0x610] sm:$0xff]
    %v323 = vld [vmem:[#allocation3 + $0x618] sm:$0xff]
    %v324 = vld [vmem:[#allocation3 + $0x620] sm:$0xff]
    %v325 = vld [vmem:[#allocation3 + $0x628] sm:$0xff]
    %v326 = vld [vmem:[#allocation3 + $0x630] sm:$0xff]
    %v327 = vld [vmem:[#allocation3 + $0x638] sm:$0xff]
    %v328 = vld [vmem:[#allocation3 + $0x640] sm:$0xff]
    %v329 = vld [vmem:[#allocation3 + $0x648] sm:$0xff]
    %v330 = vld [vmem:[#allocation3 + $0x650] sm:$0xff]
    %v331 = vld [vmem:[#allocation3 + $0x658] sm:$0xff]
    %v332 = vld [vmem:[#allocation3 + $0x660] sm:$0xff]
    %v333 = vld [vmem:[#allocation3 + $0x668] sm:$0xff]
    %v334 = vld [vmem:[#allocation3 + $0x670] sm:$0xff]
    %v335 = vld [vmem:[#allocation3 + $0x678] sm:$0xff]
    %v336 = vld [vmem:[#allocation3 + $0x680] sm:$0xff]
    %v337 = vld [vmem:[#allocation3 + $0x688] sm:$0xff]
    %v338 = vld [vmem:[#allocation3 + $0x690] sm:$0xff]
    %v339 = vld [vmem:[#allocation3 + $0x698] sm:$0xff]
    %v340 = vld [vmem:[#allocation3 + $0x6a0] sm:$0xff]
    %v341 = vld [vmem:[#allocation3 + $0x6a8] sm:$0xff]
    %v342 = vld [vmem:[#allocation3 + $0x6b0] sm:$0xff]
    %v343 = vld [vmem:[#allocation3 + $0x6b8] sm:$0xff]
    %v344 = vld [vmem:[#allocation3 + $0x6c0] sm:$0xff]
    %v345 = vld [vmem:[#allocation3 + $0x6c8] sm:$0xff]
    %v346 = vld [vmem:[#allocation3 + $0x6d0] sm:$0xff]
    %v347 = vld [vmem:[#allocation3 + $0x6d8] sm:$0xff]
    %v348 = vld [vmem:[#allocation3 + $0x6e0] sm:$0xff]
    %v349 = vld [vmem:[#allocation3 + $0x6e8] sm:$0xff]
    %v350 = vld [vmem:[#allocation3 + $0x6f0] sm:$0xff]
    %v351 = vld [vmem:[#allocation3 + $0x6f8] sm:$0xff]
    %v352 = vld [vmem:[#allocation3 + $0x700] sm:$0xff]
    %v353 = vld [vmem:[#allocation3 + $0x708] sm:$0xff]
    %v354 = vld [vmem:[#allocation3 + $0x710] sm:$0xff]
    %v355 = vld [vmem:[#allocation3 + $0x718] sm:$0xff]
    %v356 = vld [vmem:[#allocation3 + $0x720] sm:$0xff]
    %v357 = vld [vmem:[#allocation3 + $0x728] sm:$0xff]
    %v358 = vld [vmem:[#allocation3 + $0x730] sm:$0xff]
    %v359 = vld [vmem:[#allocation3 + $0x738] sm:$0xff]
    %v360 = vld [vmem:[#allocation3 + $0x740] sm:$0xff]
    %v361 = vld [vmem:[#allocation3 + $0x748] sm:$0xff]
    %v362 = vld [vmem:[#allocation3 + $0x750] sm:$0xff]
    %v363 = vld [vmem:[#allocation3 + $0x758] sm:$0xff]
    %v364 = vld [vmem:[#allocation3 + $0x760] sm:$0xff]
    %v365 = vld [vmem:[#allocation3 + $0x768] sm:$0xff]
    %v366 = vld [vmem:[#allocation3 + $0x770] sm:$0xff]
    %v367 = vld [vmem:[#allocation3 + $0x778] sm:$0xff]
    %v368 = vld [vmem:[#allocation3 + $0x780] sm:$0xff]
    %v369 = vld [vmem:[#allocation3 + $0x788] sm:$0xff]
    %v370 = vld [vmem:[#allocation3 + $0x790] sm:$0xff]
    %v371 = vld [vmem:[#allocation3 + $0x798] sm:$0xff]
    %v372 = vld [vmem:[#allocation3 + $0x7a0] sm:$0xff]
    %v373 = vld [vmem:[#allocation3 + $0x7a8] sm:$0xff]
    %v374 = vld [vmem:[#allocation3 + $0x7b0] sm:$0xff]
    %v375 = vld [vmem:[#allocation3 + $0x7b8] sm:$0xff]
    %v376 = vld [vmem:[#allocation3 + $0x7c0] sm:$0xff]
    %v377 = vld [vmem:[#allocation3 + $0x7c8] sm:$0xff]
    %v378 = vld [vmem:[#allocation3 + $0x7d0] sm:$0xff]
    %v379 = vld [vmem:[#allocation3 + $0x7d8] sm:$0xff]
    %v380 = vld [vmem:[#allocation3 + $0x7e0] sm:$0xff]
    %v381 = vld [vmem:[#allocation3 + $0x7e8] sm:$0xff]
    %v382 = vld [vmem:[#allocation3 + $0x7f0] sm:$0xff]
    %v383 = vld [vmem:[#allocation3 + $0x7f8] sm:$0xff]
    %v384 = vld [vmem:[#allocation3 + $0x800] sm:$0xff]
    %v385 = vld [vmem:[#allocation3 + $0x808] sm:$0xff]
    %v386 = vld [vmem:[#allocation3 + $0x810] sm:$0xff]
    %v387 = vld [vmem:[#allocation3 + $0x818] sm:$0xff]
    %v388 = vld [vmem:[#allocation3 + $0x820] sm:$0xff]
    %v389 = vld [vmem:[#allocation3 + $0x828] sm:$0xff]
    %v390 = vld [vmem:[#allocation3 + $0x830] sm:$0xff]
    %v391 = vld [vmem:[#allocation3 + $0x838] sm:$0xff]
    %v392 = vld [vmem:[#allocation3 + $0x840] sm:$0xff]
    %v393 = vld [vmem:[#allocation3 + $0x848] sm:$0xff]
    %v394 = vld [vmem:[#allocation3 + $0x850] sm:$0xff]
    %v395 = vld [vmem:[#allocation3 + $0x858] sm:$0xff]
    %v396 = vld [vmem:[#allocation3 + $0x860] sm:$0xff]
    %v397 = vld [vmem:[#allocation3 + $0x868] sm:$0xff]
    %v398 = vld [vmem:[#allocation3 + $0x870] sm:$0xff]
    %v399 = vld [vmem:[#allocation3 + $0x878] sm:$0xff]
    %v400 = vld [vmem:[#allocation3 + $0x880] sm:$0xff]
    %v401 = vld [vmem:[#allocation3 + $0x888] sm:$0xff]
    %v402 = vld [vmem:[#allocation3 + $0x890] sm:$0xff]
    %v403 = vld [vmem:[#allocation3 + $0x898] sm:$0xff]
    %v404 = vld [vmem:[#allocation3 + $0x8a0] sm:$0xff]
    %v405 = vld [vmem:[#allocation3 + $0x8a8] sm:$0xff]
    %v406 = vld [vmem:[#allocation3 + $0x8b0] sm:$0xff]
    %v407 = vld [vmem:[#allocation3 + $0x8b8] sm:$0xff]
    %v408 = vld [vmem:[#allocation3 + $0x8c0] sm:$0xff]
    %v409 = vld [vmem:[#allocation3 + $0x8c8] sm:$0xff]
    %v410 = vld [vmem:[#allocation3 + $0x8d0] sm:$0xff]
    %v411 = vld [vmem:[#allocation3 + $0x8d8] sm:$0xff]
    %v412 = vld [vmem:[#allocation3 + $0x8e0] sm:$0xff]
    %v413 = vld [vmem:[#allocation3 + $0x8e8] sm:$0xff]
    %v414 = vld [vmem:[#allocation3 + $0x8f0] sm:$0xff]
    %v415 = vld [vmem:[#allocation3 + $0x8f8] sm:$0xff]
    %v416 = vld [vmem:[#allocation3 + $0x900] sm:$0xff]
    %v417 = vld [vmem:[#allocation3 + $0x908] sm:$0xff]
    %v418 = vld [vmem:[#allocation3 + $0x910] sm:$0xff]
    %v419 = vld [vmem:[#allocation3 + $0x918] sm:$0xff]
    %v420 = vld [vmem:[#allocation3 + $0x920] sm:$0xff]
    %v421 = vld [vmem:[#allocation3 + $0x928] sm:$0xff]
    %v422 = vld [vmem:[#allocation3 + $0x930] sm:$0xff]
    %v423 = vld [vmem:[#allocation3 + $0x938] sm:$0xff]
    %v424 = vld [vmem:[#allocation3 + $0x940] sm:$0xff]
    %v425 = vld [vmem:[#allocation3 + $0x948] sm:$0xff]
    %v426 = vld [vmem:[#allocation3 + $0x950] sm:$0xff]
    %v427 = vld [vmem:[#allocation3 + $0x958] sm:$0xff]
    %v428 = vld [vmem:[#allocation3 + $0x960] sm:$0xff]
    %v429 = vld [vmem:[#allocation3 + $0x968] sm:$0xff]
    %v430 = vld [vmem:[#allocation3 + $0x970] sm:$0xff]
    %v431 = vld [vmem:[#allocation3 + $0x978] sm:$0xff]
    %v432 = vld [vmem:[#allocation3 + $0x980] sm:$0xff]
    %v433 = vld [vmem:[#allocation3 + $0x988] sm:$0xff]
    %v434 = vld [vmem:[#allocation3 + $0x990] sm:$0xff]
    %v435 = vld [vmem:[#allocation3 + $0x998] sm:$0xff]
    %v436 = vld [vmem:[#allocation3 + $0x9a0] sm:$0xff]
    %v437 = vld [vmem:[#allocation3 + $0x9a8] sm:$0xff]
    %v438 = vld [vmem:[#allocation3 + $0x9b0] sm:$0xff]
    %v439 = vld [vmem:[#allocation3 + $0x9b8] sm:$0xff]
    %v440 = vld [vmem:[#allocation3 + $0x9c0] sm:$0xff]
    %v441 = vld [vmem:[#allocation3 + $0x9c8] sm:$0xff]
    %v442 = vld [vmem:[#allocation3 + $0x9d0] sm:$0xff]
    %v443 = vld [vmem:[#allocation3 + $0x9d8] sm:$0xff]
    %v444 = vld [vmem:[#allocation3 + $0x9e0] sm:$0xff]
    %v445 = vld [vmem:[#allocation3 + $0x9e8] sm:$0xff]
    %v446 = vld [vmem:[#allocation3 + $0x9f0] sm:$0xff]
    %v447 = vld [vmem:[#allocation3 + $0x9f8] sm:$0xff]
    %v448 = vld [vmem:[#allocation3 + $0xa00] sm:$0xff]
    %v449 = vld [vmem:[#allocation3 + $0xa08] sm:$0xff]
    %v450 = vld [vmem:[#allocation3 + $0xa10] sm:$0xff]
    %v451 = vld [vmem:[#allocation3 + $0xa18] sm:$0xff]
    %v452 = vld [vmem:[#allocation3 + $0xa20] sm:$0xff]
    %v453 = vld [vmem:[#allocation3 + $0xa28] sm:$0xff]
    %v454 = vld [vmem:[#allocation3 + $0xa30] sm:$0xff]
    %v455 = vld [vmem:[#allocation3 + $0xa38] sm:$0xff]
    %v456 = vld [vmem:[#allocation3 + $0xa40] sm:$0xff]
    %v457 = vld [vmem:[#allocation3 + $0xa48] sm:$0xff]
    %v458 = vld [vmem:[#allocation3 + $0xa50] sm:$0xff]
    %v459 = vld [vmem:[#allocation3 + $0xa58] sm:$0xff]
    %v460 = vld [vmem:[#allocation3 + $0xa60] sm:$0xff]
    %v461 = vld [vmem:[#allocation3 + $0xa68] sm:$0xff]
    %v462 = vld [vmem:[#allocation3 + $0xa70] sm:$0xff]
    %v463 = vld [vmem:[#allocation3 + $0xa78] sm:$0xff]
    %v464 = vld [vmem:[#allocation3 + $0xa80] sm:$0xff]
    %v465 = vld [vmem:[#allocation3 + $0xa88] sm:$0xff]
    %v466 = vld [vmem:[#allocation3 + $0xa90] sm:$0xff]
    %v467 = vld [vmem:[#allocation3 + $0xa98] sm:$0xff]
    %v468 = vld [vmem:[#allocation3 + $0xaa0] sm:$0xff]
    %v469 = vld [vmem:[#allocation3 + $0xaa8] sm:$0xff]
    %v470 = vld [vmem:[#allocation3 + $0xab0] sm:$0xff]
    %v471 = vld [vmem:[#allocation3 + $0xab8] sm:$0xff]
    %v472 = vld [vmem:[#allocation3 + $0xac0] sm:$0xff]
    %v473 = vld [vmem:[#allocation3 + $0xac8] sm:$0xff]
    %v474 = vld [vmem:[#allocation3 + $0xad0] sm:$0xff]
    %v475 = vld [vmem:[#allocation3 + $0xad8] sm:$0xff]
    %v476 = vld [vmem:[#allocation3 + $0xae0] sm:$0xff]
    %v477 = vld [vmem:[#allocation3 + $0xae8] sm:$0xff]
    %v478 = vld [vmem:[#allocation3 + $0xaf0] sm:$0xff]
    %v479 = vld [vmem:[#allocation3 + $0xaf8] sm:$0xff]
    %v480 = vld [vmem:[#allocation3 + $0xb00] sm:$0xff]
    %v481 = vld [vmem:[#allocation3 + $0xb08] sm:$0xff]
    %v482 = vld [vmem:[#allocation3 + $0xb10] sm:$0xff]
    %v483 = vld [vmem:[#allocation3 + $0xb18] sm:$0xff]
    %v484 = vld [vmem:[#allocation3 + $0xb20] sm:$0xff]
    %v485 = vld [vmem:[#allocation3 + $0xb28] sm:$0xff]
    %v486 = vld [vmem:[#allocation3 + $0xb30] sm:$0xff]
    %v487 = vld [vmem:[#allocation3 + $0xb38] sm:$0xff]
    %v488 = vld [vmem:[#allocation3 + $0xb40] sm:$0xff]
    %v489 = vld [vmem:[#allocation3 + $0xb48] sm:$0xff]
    %v490 = vld [vmem:[#allocation3 + $0xb50] sm:$0xff]
    %v491 = vld [vmem:[#allocation3 + $0xb58] sm:$0xff]
    %v492 = vld [vmem:[#allocation3 + $0xb60] sm:$0xff]
    %v493 = vld [vmem:[#allocation3 + $0xb68] sm:$0xff]
    %v494 = vld [vmem:[#allocation3 + $0xb70] sm:$0xff]
    %v495 = vld [vmem:[#allocation3 + $0xb78] sm:$0xff]
    %v496 = vld [vmem:[#allocation3 + $0xb80] sm:$0xff]
    %v497 = vld [vmem:[#allocation3 + $0xb88] sm:$0xff]
    %v498 = vld [vmem:[#allocation3 + $0xb90] sm:$0xff]
    %v499 = vld [vmem:[#allocation3 + $0xb98] sm:$0xff]
    %v500 = vld [vmem:[#allocation3 + $0xba0] sm:$0xff]
    %v501 = vld [vmem:[#allocation3 + $0xba8] sm:$0xff]
    %v502 = vld [vmem:[#allocation3 + $0xbb0] sm:$0xff]
    %v503 = vld [vmem:[#allocation3 + $0xbb8] sm:$0xff]
    %v504 = vld [vmem:[#allocation3 + $0xbc0] sm:$0xff]
    %v505 = vld [vmem:[#allocation3 + $0xbc8] sm:$0xff]
    %v506 = vld [vmem:[#allocation3 + $0xbd0] sm:$0xff]
    %v507 = vld [vmem:[#allocation3 + $0xbd8] sm:$0xff]
    %v508 = vld [vmem:[#allocation3 + $0xbe0] sm:$0xff]
    %v509 = vld [vmem:[#allocation3 + $0xbe8] sm:$0xff]
    %v510 = vld [vmem:[#allocation3 + $0xbf0] sm:$0xff]
    %v511 = vld [vmem:[#allocation3 + $0xbf8] sm:$0xff]
    %v516 = vunpack.c.l.b16 %v124
    %v517 = vunpack.c.h.b16 %v124
    %v518 = vunpack.c.l.b16 %v125
    %v519 = vunpack.c.h.b16 %v125
    %v520 = vunpack.c.l.b16 %v126
    %v521 = vunpack.c.h.b16 %v126
    %v522 = vunpack.c.l.b16 %v127
    %v523 = vunpack.c.h.b16 %v127
    %v524 = vpack.c.b16 %v516, %v516
    %v525 = vpack.c.b16 %v517, %v517
    %v526 = vpack.c.b16 %v518, %v518
    %v527 = vpack.c.b16 %v519, %v519
    %v528 = vpack.c.b16 %v520, %v520
    %v529 = vpack.c.b16 %v521, %v521
    %v530 = vpack.c.b16 %v522, %v522
    %v531 = vpack.c.b16 %v523, %v523
    %v924 = vunpack.c.l.b16 %v128
    %v925 = vunpack.c.h.b16 %v128
    %v926 = vunpack.c.l.b16 %v129
    %v927 = vunpack.c.h.b16 %v129
    %v928 = vunpack.c.l.b16 %v130
    %v929 = vunpack.c.h.b16 %v130
    %v930 = vunpack.c.l.b16 %v131
    %v931 = vunpack.c.h.b16 %v131
    %v932 = vunpack.c.l.b16 %v132
    %v933 = vunpack.c.h.b16 %v132
    %v934 = vunpack.c.l.b16 %v133
    %v935 = vunpack.c.h.b16 %v133
    %v936 = vunpack.c.l.b16 %v134
    %v937 = vunpack.c.h.b16 %v134
    %v938 = vunpack.c.l.b16 %v135
    %v939 = vunpack.c.h.b16 %v135
    %v940 = vunpack.c.l.b16 %v136
    %v941 = vunpack.c.h.b16 %v136
    %v942 = vunpack.c.l.b16 %v137
    %v943 = vunpack.c.h.b16 %v137
    %v944 = vunpack.c.l.b16 %v138
    %v945 = vunpack.c.h.b16 %v138
    %v946 = vunpack.c.l.b16 %v139
    %v947 = vunpack.c.h.b16 %v139
    %v948 = vunpack.c.l.b16 %v140
    %v949 = vunpack.c.h.b16 %v140
    %v950 = vunpack.c.l.b16 %v141
    %v951 = vunpack.c.h.b16 %v141
    %v952 = vunpack.c.l.b16 %v142
    %v953 = vunpack.c.h.b16 %v142
    %v954 = vunpack.c.l.b16 %v143
    %v955 = vunpack.c.h.b16 %v143
    %v956 = vunpack.c.l.b16 %v144
    %v957 = vunpack.c.h.b16 %v144
    %v958 = vunpack.c.l.b16 %v145
    %v959 = vunpack.c.h.b16 %v145
    %v960 = vunpack.c.l.b16 %v146
    %v961 = vunpack.c.h.b16 %v146
    %v962 = vunpack.c.l.b16 %v147
    %v963 = vunpack.c.h.b16 %v147
    %v964 = vunpack.c.l.b16 %v148
    %v965 = vunpack.c.h.b16 %v148
    %v966 = vunpack.c.l.b16 %v149
    %v967 = vunpack.c.h.b16 %v149
    %v968 = vunpack.c.l.b16 %v150
    %v969 = vunpack.c.h.b16 %v150
    %v970 = vunpack.c.l.b16 %v151
    %v971 = vunpack.c.h.b16 %v151
    %v972 = vunpack.c.l.b16 %v152
    %v973 = vunpack.c.h.b16 %v152
    %v974 = vunpack.c.l.b16 %v153
    %v975 = vunpack.c.h.b16 %v153
    %v976 = vunpack.c.l.b16 %v154
    %v977 = vunpack.c.h.b16 %v154
    %v978 = vunpack.c.l.b16 %v155
    %v979 = vunpack.c.h.b16 %v155
    %v980 = vunpack.c.l.b16 %v156
    %v981 = vunpack.c.h.b16 %v156
    %v982 = vunpack.c.l.b16 %v157
    %v983 = vunpack.c.h.b16 %v157
    %v984 = vunpack.c.l.b16 %v158
    %v985 = vunpack.c.h.b16 %v158
    %v986 = vunpack.c.l.b16 %v159
    %v987 = vunpack.c.h.b16 %v159
    %v988 = vunpack.c.l.b16 %v160
    %v989 = vunpack.c.h.b16 %v160
    %v990 = vunpack.c.l.b16 %v161
    %v991 = vunpack.c.h.b16 %v161
    %v992 = vunpack.c.l.b16 %v162
    %v993 = vunpack.c.h.b16 %v162
    %v994 = vunpack.c.l.b16 %v163
    %v995 = vunpack.c.h.b16 %v163
    %v996 = vunpack.c.l.b16 %v164
    %v997 = vunpack.c.h.b16 %v164
    %v998 = vunpack.c.l.b16 %v165
    %v999 = vunpack.c.h.b16 %v165
    %v1000 = vunpack.c.l.b16 %v166
    %v1001 = vunpack.c.h.b16 %v166
    %v1002 = vunpack.c.l.b16 %v167
    %v1003 = vunpack.c.h.b16 %v167
    %v1004 = vunpack.c.l.b16 %v168
    %v1005 = vunpack.c.h.b16 %v168
    %v1006 = vunpack.c.l.b16 %v169
    %v1007 = vunpack.c.h.b16 %v169
    %v1008 = vunpack.c.l.b16 %v170
    %v1009 = vunpack.c.h.b16 %v170
    %v1010 = vunpack.c.l.b16 %v171
    %v1011 = vunpack.c.h.b16 %v171
    %v1012 = vunpack.c.l.b16 %v172
    %v1013 = vunpack.c.h.b16 %v172
    %v1014 = vunpack.c.l.b16 %v173
    %v1015 = vunpack.c.h.b16 %v173
    %v1016 = vunpack.c.l.b16 %v174
    %v1017 = vunpack.c.h.b16 %v174
    %v1018 = vunpack.c.l.b16 %v175
    %v1019 = vunpack.c.h.b16 %v175
    %v1020 = vunpack.c.l.b16 %v176
    %v1021 = vunpack.c.h.b16 %v176
    %v1022 = vunpack.c.l.b16 %v177
    %v1023 = vunpack.c.h.b16 %v177
    %v1024 = vunpack.c.l.b16 %v178
    %v1025 = vunpack.c.h.b16 %v178
    %v1026 = vunpack.c.l.b16 %v179
    %v1027 = vunpack.c.h.b16 %v179
    %v1028 = vunpack.c.l.b16 %v180
    %v1029 = vunpack.c.h.b16 %v180
    %v1030 = vunpack.c.l.b16 %v181
    %v1031 = vunpack.c.h.b16 %v181
    %v1032 = vunpack.c.l.b16 %v182
    %v1033 = vunpack.c.h.b16 %v182
    %v1034 = vunpack.c.l.b16 %v183
    %v1035 = vunpack.c.h.b16 %v183
    %v1036 = vunpack.c.l.b16 %v184
    %v1037 = vunpack.c.h.b16 %v184
    %v1038 = vunpack.c.l.b16 %v185
    %v1039 = vunpack.c.h.b16 %v185
    %v1040 = vunpack.c.l.b16 %v186
    %v1041 = vunpack.c.h.b16 %v186
    %v1042 = vunpack.c.l.b16 %v187
    %v1043 = vunpack.c.h.b16 %v187
    %v1044 = vunpack.c.l.b16 %v188
    %v1045 = vunpack.c.h.b16 %v188
    %v1046 = vunpack.c.l.b16 %v189
    %v1047 = vunpack.c.h.b16 %v189
    %v1048 = vunpack.c.l.b16 %v190
    %v1049 = vunpack.c.h.b16 %v190
    %v1050 = vunpack.c.l.b16 %v191
    %v1051 = vunpack.c.h.b16 %v191
    %v1052 = vunpack.c.l.b16 %v192
    %v1053 = vunpack.c.h.b16 %v192
    %v1054 = vunpack.c.l.b16 %v193
    %v1055 = vunpack.c.h.b16 %v193
    %v1056 = vunpack.c.l.b16 %v194
    %v1057 = vunpack.c.h.b16 %v194
    %v1058 = vunpack.c.l.b16 %v195
    %v1059 = vunpack.c.h.b16 %v195
    %v1060 = vunpack.c.l.b16 %v196
    %v1061 = vunpack.c.h.b16 %v196
    %v1062 = vunpack.c.l.b16 %v197
    %v1063 = vunpack.c.h.b16 %v197
    %v1064 = vunpack.c.l.b16 %v198
    %v1065 = vunpack.c.h.b16 %v198
    %v1066 = vunpack.c.l.b16 %v199
    %v1067 = vunpack.c.h.b16 %v199
    %v1068 = vunpack.c.l.b16 %v200
    %v1069 = vunpack.c.h.b16 %v200
    %v1070 = vunpack.c.l.b16 %v201
    %v1071 = vunpack.c.h.b16 %v201
    %v1072 = vunpack.c.l.b16 %v202
    %v1073 = vunpack.c.h.b16 %v202
    %v1074 = vunpack.c.l.b16 %v203
    %v1075 = vunpack.c.h.b16 %v203
    %v1076 = vunpack.c.l.b16 %v204
    %v1077 = vunpack.c.h.b16 %v204
    %v1078 = vunpack.c.l.b16 %v205
    %v1079 = vunpack.c.h.b16 %v205
    %v1080 = vunpack.c.l.b16 %v206
    %v1081 = vunpack.c.h.b16 %v206
    %v1082 = vunpack.c.l.b16 %v207
    %v1083 = vunpack.c.h.b16 %v207
    %v1084 = vunpack.c.l.b16 %v208
    %v1085 = vunpack.c.h.b16 %v208
    %v1086 = vunpack.c.l.b16 %v209
    %v1087 = vunpack.c.h.b16 %v209
    %v1088 = vunpack.c.l.b16 %v210
    %v1089 = vunpack.c.h.b16 %v210
    %v1090 = vunpack.c.l.b16 %v211
    %v1091 = vunpack.c.h.b16 %v211
    %v1092 = vunpack.c.l.b16 %v212
    %v1093 = vunpack.c.h.b16 %v212
    %v1094 = vunpack.c.l.b16 %v213
    %v1095 = vunpack.c.h.b16 %v213
    %v1096 = vunpack.c.l.b16 %v214
    %v1097 = vunpack.c.h.b16 %v214
    %v1098 = vunpack.c.l.b16 %v215
    %v1099 = vunpack.c.h.b16 %v215
    %v1100 = vunpack.c.l.b16 %v216
    %v1101 = vunpack.c.h.b16 %v216
    %v1102 = vunpack.c.l.b16 %v217
    %v1103 = vunpack.c.h.b16 %v217
    %v1104 = vunpack.c.l.b16 %v218
    %v1105 = vunpack.c.h.b16 %v218
    %v1106 = vunpack.c.l.b16 %v219
    %v1107 = vunpack.c.h.b16 %v219
    %v1108 = vunpack.c.l.b16 %v220
    %v1109 = vunpack.c.h.b16 %v220
    %v1110 = vunpack.c.l.b16 %v221
    %v1111 = vunpack.c.h.b16 %v221
    %v1112 = vunpack.c.l.b16 %v222
    %v1113 = vunpack.c.h.b16 %v222
    %v1114 = vunpack.c.l.b16 %v223
    %v1115 = vunpack.c.h.b16 %v223
    %v1116 = vunpack.c.l.b16 %v224
    %v1117 = vunpack.c.h.b16 %v224
    %v1118 = vunpack.c.l.b16 %v225
    %v1119 = vunpack.c.h.b16 %v225
    %v1120 = vunpack.c.l.b16 %v226
    %v1121 = vunpack.c.h.b16 %v226
    %v1122 = vunpack.c.l.b16 %v227
    %v1123 = vunpack.c.h.b16 %v227
    %v1124 = vunpack.c.l.b16 %v228
    %v1125 = vunpack.c.h.b16 %v228
    %v1126 = vunpack.c.l.b16 %v229
    %v1127 = vunpack.c.h.b16 %v229
    %v1128 = vunpack.c.l.b16 %v230
    %v1129 = vunpack.c.h.b16 %v230
    %v1130 = vunpack.c.l.b16 %v231
    %v1131 = vunpack.c.h.b16 %v231
    %v1132 = vunpack.c.l.b16 %v232
    %v1133 = vunpack.c.h.b16 %v232
    %v1134 = vunpack.c.l.b16 %v233
    %v1135 = vunpack.c.h.b16 %v233
    %v1136 = vunpack.c.l.b16 %v234
    %v1137 = vunpack.c.h.b16 %v234
    %v1138 = vunpack.c.l.b16 %v235
    %v1139 = vunpack.c.h.b16 %v235
    %v1140 = vunpack.c.l.b16 %v236
    %v1141 = vunpack.c.h.b16 %v236
    %v1142 = vunpack.c.l.b16 %v237
    %v1143 = vunpack.c.h.b16 %v237
    %v1144 = vunpack.c.l.b16 %v238
    %v1145 = vunpack.c.h.b16 %v238
    %v1146 = vunpack.c.l.b16 %v239
    %v1147 = vunpack.c.h.b16 %v239
    %v1148 = vunpack.c.l.b16 %v240
    %v1149 = vunpack.c.h.b16 %v240
    %v1150 = vunpack.c.l.b16 %v241
    %v1151 = vunpack.c.h.b16 %v241
    %v1152 = vunpack.c.l.b16 %v242
    %v1153 = vunpack.c.h.b16 %v242
    %v1154 = vunpack.c.l.b16 %v243
    %v1155 = vunpack.c.h.b16 %v243
    %v1156 = vunpack.c.l.b16 %v244
    %v1157 = vunpack.c.h.b16 %v244
    %v1158 = vunpack.c.l.b16 %v245
    %v1159 = vunpack.c.h.b16 %v245
    %v1160 = vunpack.c.l.b16 %v246
    %v1161 = vunpack.c.h.b16 %v246
    %v1162 = vunpack.c.l.b16 %v247
    %v1163 = vunpack.c.h.b16 %v247
    %v1164 = vunpack.c.l.b16 %v248
    %v1165 = vunpack.c.h.b16 %v248
    %v1166 = vunpack.c.l.b16 %v249
    %v1167 = vunpack.c.h.b16 %v249
    %v1168 = vunpack.c.l.b16 %v250
    %v1169 = vunpack.c.h.b16 %v250
    %v1170 = vunpack.c.l.b16 %v251
    %v1171 = vunpack.c.h.b16 %v251
    %v1172 = vunpack.c.l.b16 %v252
    %v1173 = vunpack.c.h.b16 %v252
    %v1174 = vunpack.c.l.b16 %v253
    %v1175 = vunpack.c.h.b16 %v253
    %v1176 = vunpack.c.l.b16 %v254
    %v1177 = vunpack.c.h.b16 %v254
    %v1178 = vunpack.c.l.b16 %v255
    %v1179 = vunpack.c.h.b16 %v255
    %v1180 = vunpack.c.l.b16 %v256
    %v1181 = vunpack.c.h.b16 %v256
    %v1182 = vunpack.c.l.b16 %v257
    %v1183 = vunpack.c.h.b16 %v257
    %v1184 = vunpack.c.l.b16 %v258
    %v1185 = vunpack.c.h.b16 %v258
    %v1186 = vunpack.c.l.b16 %v259
    %v1187 = vunpack.c.h.b16 %v259
    %v1188 = vunpack.c.l.b16 %v260
    %v1189 = vunpack.c.h.b16 %v260
    %v1190 = vunpack.c.l.b16 %v261
    %v1191 = vunpack.c.h.b16 %v261
    %v1192 = vunpack.c.l.b16 %v262
    %v1193 = vunpack.c.h.b16 %v262
    %v1194 = vunpack.c.l.b16 %v263
    %v1195 = vunpack.c.h.b16 %v263
    %v1196 = vunpack.c.l.b16 %v264
    %v1197 = vunpack.c.h.b16 %v264
    %v1198 = vunpack.c.l.b16 %v265
    %v1199 = vunpack.c.h.b16 %v265
    %v1200 = vunpack.c.l.b16 %v266
    %v1201 = vunpack.c.h.b16 %v266
    %v1202 = vunpack.c.l.b16 %v267
    %v1203 = vunpack.c.h.b16 %v267
    %v1204 = vunpack.c.l.b16 %v268
    %v1205 = vunpack.c.h.b16 %v268
    %v1206 = vunpack.c.l.b16 %v269
    %v1207 = vunpack.c.h.b16 %v269
    %v1208 = vunpack.c.l.b16 %v270
    %v1209 = vunpack.c.h.b16 %v270
    %v1210 = vunpack.c.l.b16 %v271
    %v1211 = vunpack.c.h.b16 %v271
    %v1212 = vunpack.c.l.b16 %v272
    %v1213 = vunpack.c.h.b16 %v272
    %v1214 = vunpack.c.l.b16 %v273
    %v1215 = vunpack.c.h.b16 %v273
    %v1216 = vunpack.c.l.b16 %v274
    %v1217 = vunpack.c.h.b16 %v274
    %v1218 = vunpack.c.l.b16 %v275
    %v1219 = vunpack.c.h.b16 %v275
    %v1220 = vunpack.c.l.b16 %v276
    %v1221 = vunpack.c.h.b16 %v276
    %v1222 = vunpack.c.l.b16 %v277
    %v1223 = vunpack.c.h.b16 %v277
    %v1224 = vunpack.c.l.b16 %v278
    %v1225 = vunpack.c.h.b16 %v278
    %v1226 = vunpack.c.l.b16 %v279
    %v1227 = vunpack.c.h.b16 %v279
    %v1228 = vunpack.c.l.b16 %v280
    %v1229 = vunpack.c.h.b16 %v280
    %v1230 = vunpack.c.l.b16 %v281
    %v1231 = vunpack.c.h.b16 %v281
    %v1232 = vunpack.c.l.b16 %v282
    %v1233 = vunpack.c.h.b16 %v282
    %v1234 = vunpack.c.l.b16 %v283
    %v1235 = vunpack.c.h.b16 %v283
    %v1236 = vunpack.c.l.b16 %v284
    %v1237 = vunpack.c.h.b16 %v284
    %v1238 = vunpack.c.l.b16 %v285
    %v1239 = vunpack.c.h.b16 %v285
    %v1240 = vunpack.c.l.b16 %v286
    %v1241 = vunpack.c.h.b16 %v286
    %v1242 = vunpack.c.l.b16 %v287
    %v1243 = vunpack.c.h.b16 %v287
    %v1244 = vunpack.c.l.b16 %v288
    %v1245 = vunpack.c.h.b16 %v288
    %v1246 = vunpack.c.l.b16 %v289
    %v1247 = vunpack.c.h.b16 %v289
    %v1248 = vunpack.c.l.b16 %v290
    %v1249 = vunpack.c.h.b16 %v290
    %v1250 = vunpack.c.l.b16 %v291
    %v1251 = vunpack.c.h.b16 %v291
    %v1252 = vunpack.c.l.b16 %v292
    %v1253 = vunpack.c.h.b16 %v292
    %v1254 = vunpack.c.l.b16 %v293
    %v1255 = vunpack.c.h.b16 %v293
    %v1256 = vunpack.c.l.b16 %v294
    %v1257 = vunpack.c.h.b16 %v294
    %v1258 = vunpack.c.l.b16 %v295
    %v1259 = vunpack.c.h.b16 %v295
    %v1260 = vunpack.c.l.b16 %v296
    %v1261 = vunpack.c.h.b16 %v296
    %v1262 = vunpack.c.l.b16 %v297
    %v1263 = vunpack.c.h.b16 %v297
    %v1264 = vunpack.c.l.b16 %v298
    %v1265 = vunpack.c.h.b16 %v298
    %v1266 = vunpack.c.l.b16 %v299
    %v1267 = vunpack.c.h.b16 %v299
    %v1268 = vunpack.c.l.b16 %v300
    %v1269 = vunpack.c.h.b16 %v300
    %v1270 = vunpack.c.l.b16 %v301
    %v1271 = vunpack.c.h.b16 %v301
    %v1272 = vunpack.c.l.b16 %v302
    %v1273 = vunpack.c.h.b16 %v302
    %v1274 = vunpack.c.l.b16 %v303
    %v1275 = vunpack.c.h.b16 %v303
    %v1276 = vunpack.c.l.b16 %v304
    %v1277 = vunpack.c.h.b16 %v304
    %v1278 = vunpack.c.l.b16 %v305
    %v1279 = vunpack.c.h.b16 %v305
    %v1280 = vunpack.c.l.b16 %v306
    %v1281 = vunpack.c.h.b16 %v306
    %v1282 = vunpack.c.l.b16 %v307
    %v1283 = vunpack.c.h.b16 %v307
    %v1284 = vunpack.c.l.b16 %v308
    %v1285 = vunpack.c.h.b16 %v308
    %v1286 = vunpack.c.l.b16 %v309
    %v1287 = vunpack.c.h.b16 %v309
    %v1288 = vunpack.c.l.b16 %v310
    %v1289 = vunpack.c.h.b16 %v310
    %v1290 = vunpack.c.l.b16 %v311
    %v1291 = vunpack.c.h.b16 %v311
    %v1292 = vunpack.c.l.b16 %v312
    %v1293 = vunpack.c.h.b16 %v312
    %v1294 = vunpack.c.l.b16 %v313
    %v1295 = vunpack.c.h.b16 %v313
    %v1296 = vunpack.c.l.b16 %v314
    %v1297 = vunpack.c.h.b16 %v314
    %v1298 = vunpack.c.l.b16 %v315
    %v1299 = vunpack.c.h.b16 %v315
    %v1300 = vunpack.c.l.b16 %v316
    %v1301 = vunpack.c.h.b16 %v316
    %v1302 = vunpack.c.l.b16 %v317
    %v1303 = vunpack.c.h.b16 %v317
    %v1304 = vunpack.c.l.b16 %v318
    %v1305 = vunpack.c.h.b16 %v318
    %v1306 = vunpack.c.l.b16 %v319
    %v1307 = vunpack.c.h.b16 %v319
    %v1308 = vunpack.c.l.b16 %v320
    %v1309 = vunpack.c.h.b16 %v320
    %v1310 = vunpack.c.l.b16 %v321
    %v1311 = vunpack.c.h.b16 %v321
    %v1312 = vunpack.c.l.b16 %v322
    %v1313 = vunpack.c.h.b16 %v322
    %v1314 = vunpack.c.l.b16 %v323
    %v1315 = vunpack.c.h.b16 %v323
    %v1316 = vunpack.c.l.b16 %v324
    %v1317 = vunpack.c.h.b16 %v324
    %v1318 = vunpack.c.l.b16 %v325
    %v1319 = vunpack.c.h.b16 %v325
    %v1320 = vunpack.c.l.b16 %v326
    %v1321 = vunpack.c.h.b16 %v326
    %v1322 = vunpack.c.l.b16 %v327
    %v1323 = vunpack.c.h.b16 %v327
    %v1324 = vunpack.c.l.b16 %v328
    %v1325 = vunpack.c.h.b16 %v328
    %v1326 = vunpack.c.l.b16 %v329
    %v1327 = vunpack.c.h.b16 %v329
    %v1328 = vunpack.c.l.b16 %v330
    %v1329 = vunpack.c.h.b16 %v330
    %v1330 = vunpack.c.l.b16 %v331
    %v1331 = vunpack.c.h.b16 %v331
    %v1332 = vunpack.c.l.b16 %v332
    %v1333 = vunpack.c.h.b16 %v332
    %v1334 = vunpack.c.l.b16 %v333
    %v1335 = vunpack.c.h.b16 %v333
    %v1336 = vunpack.c.l.b16 %v334
    %v1337 = vunpack.c.h.b16 %v334
    %v1338 = vunpack.c.l.b16 %v335
    %v1339 = vunpack.c.h.b16 %v335
    %v1340 = vunpack.c.l.b16 %v336
    %v1341 = vunpack.c.h.b16 %v336
    %v1342 = vunpack.c.l.b16 %v337
    %v1343 = vunpack.c.h.b16 %v337
    %v1344 = vunpack.c.l.b16 %v338
    %v1345 = vunpack.c.h.b16 %v338
    %v1346 = vunpack.c.l.b16 %v339
    %v1347 = vunpack.c.h.b16 %v339
    %v1348 = vunpack.c.l.b16 %v340
    %v1349 = vunpack.c.h.b16 %v340
    %v1350 = vunpack.c.l.b16 %v341
    %v1351 = vunpack.c.h.b16 %v341
    %v1352 = vunpack.c.l.b16 %v342
    %v1353 = vunpack.c.h.b16 %v342
    %v1354 = vunpack.c.l.b16 %v343
    %v1355 = vunpack.c.h.b16 %v343
    %v1356 = vunpack.c.l.b16 %v344
    %v1357 = vunpack.c.h.b16 %v344
    %v1358 = vunpack.c.l.b16 %v345
    %v1359 = vunpack.c.h.b16 %v345
    %v1360 = vunpack.c.l.b16 %v346
    %v1361 = vunpack.c.h.b16 %v346
    %v1362 = vunpack.c.l.b16 %v347
    %v1363 = vunpack.c.h.b16 %v347
    %v1364 = vunpack.c.l.b16 %v348
    %v1365 = vunpack.c.h.b16 %v348
    %v1366 = vunpack.c.l.b16 %v349
    %v1367 = vunpack.c.h.b16 %v349
    %v1368 = vunpack.c.l.b16 %v350
    %v1369 = vunpack.c.h.b16 %v350
    %v1370 = vunpack.c.l.b16 %v351
    %v1371 = vunpack.c.h.b16 %v351
    %v1372 = vunpack.c.l.b16 %v352
    %v1373 = vunpack.c.h.b16 %v352
    %v1374 = vunpack.c.l.b16 %v353
    %v1375 = vunpack.c.h.b16 %v353
    %v1376 = vunpack.c.l.b16 %v354
    %v1377 = vunpack.c.h.b16 %v354
    %v1378 = vunpack.c.l.b16 %v355
    %v1379 = vunpack.c.h.b16 %v355
    %v1380 = vunpack.c.l.b16 %v356
    %v1381 = vunpack.c.h.b16 %v356
    %v1382 = vunpack.c.l.b16 %v357
    %v1383 = vunpack.c.h.b16 %v357
    %v1384 = vunpack.c.l.b16 %v358
    %v1385 = vunpack.c.h.b16 %v358
    %v1386 = vunpack.c.l.b16 %v359
    %v1387 = vunpack.c.h.b16 %v359
    %v1388 = vunpack.c.l.b16 %v360
    %v1389 = vunpack.c.h.b16 %v360
    %v1390 = vunpack.c.l.b16 %v361
    %v1391 = vunpack.c.h.b16 %v361
    %v1392 = vunpack.c.l.b16 %v362
    %v1393 = vunpack.c.h.b16 %v362
    %v1394 = vunpack.c.l.b16 %v363
    %v1395 = vunpack.c.h.b16 %v363
    %v1396 = vunpack.c.l.b16 %v364
    %v1397 = vunpack.c.h.b16 %v364
    %v1398 = vunpack.c.l.b16 %v365
    %v1399 = vunpack.c.h.b16 %v365
    %v1400 = vunpack.c.l.b16 %v366
    %v1401 = vunpack.c.h.b16 %v366
    %v1402 = vunpack.c.l.b16 %v367
    %v1403 = vunpack.c.h.b16 %v367
    %v1404 = vunpack.c.l.b16 %v368
    %v1405 = vunpack.c.h.b16 %v368
    %v1406 = vunpack.c.l.b16 %v369
    %v1407 = vunpack.c.h.b16 %v369
    %v1408 = vunpack.c.l.b16 %v370
    %v1409 = vunpack.c.h.b16 %v370
    %v1410 = vunpack.c.l.b16 %v371
    %v1411 = vunpack.c.h.b16 %v371
    %v1412 = vunpack.c.l.b16 %v372
    %v1413 = vunpack.c.h.b16 %v372
    %v1414 = vunpack.c.l.b16 %v373
    %v1415 = vunpack.c.h.b16 %v373
    %v1416 = vunpack.c.l.b16 %v374
    %v1417 = vunpack.c.h.b16 %v374
    %v1418 = vunpack.c.l.b16 %v375
    %v1419 = vunpack.c.h.b16 %v375
    %v1420 = vunpack.c.l.b16 %v376
    %v1421 = vunpack.c.h.b16 %v376
    %v1422 = vunpack.c.l.b16 %v377
    %v1423 = vunpack.c.h.b16 %v377
    %v1424 = vunpack.c.l.b16 %v378
    %v1425 = vunpack.c.h.b16 %v378
    %v1426 = vunpack.c.l.b16 %v379
    %v1427 = vunpack.c.h.b16 %v379
    %v1428 = vunpack.c.l.b16 %v380
    %v1429 = vunpack.c.h.b16 %v380
    %v1430 = vunpack.c.l.b16 %v381
    %v1431 = vunpack.c.h.b16 %v381
    %v1432 = vunpack.c.l.b16 %v382
    %v1433 = vunpack.c.h.b16 %v382
    %v1434 = vunpack.c.l.b16 %v383
    %v1435 = vunpack.c.h.b16 %v383
    %v1436 = vunpack.c.l.b16 %v384
    %v1437 = vunpack.c.h.b16 %v384
    %v1438 = vunpack.c.l.b16 %v385
    %v1439 = vunpack.c.h.b16 %v385
    %v1440 = vunpack.c.l.b16 %v386
    %v1441 = vunpack.c.h.b16 %v386
    %v1442 = vunpack.c.l.b16 %v387
    %v1443 = vunpack.c.h.b16 %v387
    %v1444 = vunpack.c.l.b16 %v388
    %v1445 = vunpack.c.h.b16 %v388
    %v1446 = vunpack.c.l.b16 %v389
    %v1447 = vunpack.c.h.b16 %v389
    %v1448 = vunpack.c.l.b16 %v390
    %v1449 = vunpack.c.h.b16 %v390
    %v1450 = vunpack.c.l.b16 %v391
    %v1451 = vunpack.c.h.b16 %v391
    %v1452 = vunpack.c.l.b16 %v392
    %v1453 = vunpack.c.h.b16 %v392
    %v1454 = vunpack.c.l.b16 %v393
    %v1455 = vunpack.c.h.b16 %v393
    %v1456 = vunpack.c.l.b16 %v394
    %v1457 = vunpack.c.h.b16 %v394
    %v1458 = vunpack.c.l.b16 %v395
    %v1459 = vunpack.c.h.b16 %v395
    %v1460 = vunpack.c.l.b16 %v396
    %v1461 = vunpack.c.h.b16 %v396
    %v1462 = vunpack.c.l.b16 %v397
    %v1463 = vunpack.c.h.b16 %v397
    %v1464 = vunpack.c.l.b16 %v398
    %v1465 = vunpack.c.h.b16 %v398
    %v1466 = vunpack.c.l.b16 %v399
    %v1467 = vunpack.c.h.b16 %v399
    %v1468 = vunpack.c.l.b16 %v400
    %v1469 = vunpack.c.h.b16 %v400
    %v1470 = vunpack.c.l.b16 %v401
    %v1471 = vunpack.c.h.b16 %v401
    %v1472 = vunpack.c.l.b16 %v402
    %v1473 = vunpack.c.h.b16 %v402
    %v1474 = vunpack.c.l.b16 %v403
    %v1475 = vunpack.c.h.b16 %v403
    %v1476 = vunpack.c.l.b16 %v404
    %v1477 = vunpack.c.h.b16 %v404
    %v1478 = vunpack.c.l.b16 %v405
    %v1479 = vunpack.c.h.b16 %v405
    %v1480 = vunpack.c.l.b16 %v406
    %v1481 = vunpack.c.h.b16 %v406
    %v1482 = vunpack.c.l.b16 %v407
    %v1483 = vunpack.c.h.b16 %v407
    %v1484 = vunpack.c.l.b16 %v408
    %v1485 = vunpack.c.h.b16 %v408
    %v1486 = vunpack.c.l.b16 %v409
    %v1487 = vunpack.c.h.b16 %v409
    %v1488 = vunpack.c.l.b16 %v410
    %v1489 = vunpack.c.h.b16 %v410
    %v1490 = vunpack.c.l.b16 %v411
    %v1491 = vunpack.c.h.b16 %v411
    %v1492 = vunpack.c.l.b16 %v412
    %v1493 = vunpack.c.h.b16 %v412
    %v1494 = vunpack.c.l.b16 %v413
    %v1495 = vunpack.c.h.b16 %v413
    %v1496 = vunpack.c.l.b16 %v414
    %v1497 = vunpack.c.h.b16 %v414
    %v1498 = vunpack.c.l.b16 %v415
    %v1499 = vunpack.c.h.b16 %v415
    %v1500 = vunpack.c.l.b16 %v416
    %v1501 = vunpack.c.h.b16 %v416
    %v1502 = vunpack.c.l.b16 %v417
    %v1503 = vunpack.c.h.b16 %v417
    %v1504 = vunpack.c.l.b16 %v418
    %v1505 = vunpack.c.h.b16 %v418
    %v1506 = vunpack.c.l.b16 %v419
    %v1507 = vunpack.c.h.b16 %v419
    %v1508 = vunpack.c.l.b16 %v420
    %v1509 = vunpack.c.h.b16 %v420
    %v1510 = vunpack.c.l.b16 %v421
    %v1511 = vunpack.c.h.b16 %v421
    %v1512 = vunpack.c.l.b16 %v422
    %v1513 = vunpack.c.h.b16 %v422
    %v1514 = vunpack.c.l.b16 %v423
    %v1515 = vunpack.c.h.b16 %v423
    %v1516 = vunpack.c.l.b16 %v424
    %v1517 = vunpack.c.h.b16 %v424
    %v1518 = vunpack.c.l.b16 %v425
    %v1519 = vunpack.c.h.b16 %v425
    %v1520 = vunpack.c.l.b16 %v426
    %v1521 = vunpack.c.h.b16 %v426
    %v1522 = vunpack.c.l.b16 %v427
    %v1523 = vunpack.c.h.b16 %v427
    %v1524 = vunpack.c.l.b16 %v428
    %v1525 = vunpack.c.h.b16 %v428
    %v1526 = vunpack.c.l.b16 %v429
    %v1527 = vunpack.c.h.b16 %v429
    %v1528 = vunpack.c.l.b16 %v430
    %v1529 = vunpack.c.h.b16 %v430
    %v1530 = vunpack.c.l.b16 %v431
    %v1531 = vunpack.c.h.b16 %v431
    %v1532 = vunpack.c.l.b16 %v432
    %v1533 = vunpack.c.h.b16 %v432
    %v1534 = vunpack.c.l.b16 %v433
    %v1535 = vunpack.c.h.b16 %v433
    %v1536 = vunpack.c.l.b16 %v434
    %v1537 = vunpack.c.h.b16 %v434
    %v1538 = vunpack.c.l.b16 %v435
    %v1539 = vunpack.c.h.b16 %v435
    %v1540 = vunpack.c.l.b16 %v436
    %v1541 = vunpack.c.h.b16 %v436
    %v1542 = vunpack.c.l.b16 %v437
    %v1543 = vunpack.c.h.b16 %v437
    %v1544 = vunpack.c.l.b16 %v438
    %v1545 = vunpack.c.h.b16 %v438
    %v1546 = vunpack.c.l.b16 %v439
    %v1547 = vunpack.c.h.b16 %v439
    %v1548 = vunpack.c.l.b16 %v440
    %v1549 = vunpack.c.h.b16 %v440
    %v1550 = vunpack.c.l.b16 %v441
    %v1551 = vunpack.c.h.b16 %v441
    %v1552 = vunpack.c.l.b16 %v442
    %v1553 = vunpack.c.h.b16 %v442
    %v1554 = vunpack.c.l.b16 %v443
    %v1555 = vunpack.c.h.b16 %v443
    %v1556 = vunpack.c.l.b16 %v444
    %v1557 = vunpack.c.h.b16 %v444
    %v1558 = vunpack.c.l.b16 %v445
    %v1559 = vunpack.c.h.b16 %v445
    %v1560 = vunpack.c.l.b16 %v446
    %v1561 = vunpack.c.h.b16 %v446
    %v1562 = vunpack.c.l.b16 %v447
    %v1563 = vunpack.c.h.b16 %v447
    %v1564 = vunpack.c.l.b16 %v448
    %v1565 = vunpack.c.h.b16 %v448
    %v1566 = vunpack.c.l.b16 %v449
    %v1567 = vunpack.c.h.b16 %v449
    %v1568 = vunpack.c.l.b16 %v450
    %v1569 = vunpack.c.h.b16 %v450
    %v1570 = vunpack.c.l.b16 %v451
    %v1571 = vunpack.c.h.b16 %v451
    %v1572 = vunpack.c.l.b16 %v452
    %v1573 = vunpack.c.h.b16 %v452
    %v1574 = vunpack.c.l.b16 %v453
    %v1575 = vunpack.c.h.b16 %v453
    %v1576 = vunpack.c.l.b16 %v454
    %v1577 = vunpack.c.h.b16 %v454
    %v1578 = vunpack.c.l.b16 %v455
    %v1579 = vunpack.c.h.b16 %v455
    %v1580 = vunpack.c.l.b16 %v456
    %v1581 = vunpack.c.h.b16 %v456
    %v1582 = vunpack.c.l.b16 %v457
    %v1583 = vunpack.c.h.b16 %v457
    %v1584 = vunpack.c.l.b16 %v458
    %v1585 = vunpack.c.h.b16 %v458
    %v1586 = vunpack.c.l.b16 %v459
    %v1587 = vunpack.c.h.b16 %v459
    %v1588 = vunpack.c.l.b16 %v460
    %v1589 = vunpack.c.h.b16 %v460
    %v1590 = vunpack.c.l.b16 %v461
    %v1591 = vunpack.c.h.b16 %v461
    %v1592 = vunpack.c.l.b16 %v462
    %v1593 = vunpack.c.h.b16 %v462
    %v1594 = vunpack.c.l.b16 %v463
    %v1595 = vunpack.c.h.b16 %v463
    %v1596 = vunpack.c.l.b16 %v464
    %v1597 = vunpack.c.h.b16 %v464
    %v1598 = vunpack.c.l.b16 %v465
    %v1599 = vunpack.c.h.b16 %v465
    %v1600 = vunpack.c.l.b16 %v466
    %v1601 = vunpack.c.h.b16 %v466
    %v1602 = vunpack.c.l.b16 %v467
    %v1603 = vunpack.c.h.b16 %v467
    %v1604 = vunpack.c.l.b16 %v468
    %v1605 = vunpack.c.h.b16 %v468
    %v1606 = vunpack.c.l.b16 %v469
    %v1607 = vunpack.c.h.b16 %v469
    %v1608 = vunpack.c.l.b16 %v470
    %v1609 = vunpack.c.h.b16 %v470
    %v1610 = vunpack.c.l.b16 %v471
    %v1611 = vunpack.c.h.b16 %v471
    %v1612 = vunpack.c.l.b16 %v472
    %v1613 = vunpack.c.h.b16 %v472
    %v1614 = vunpack.c.l.b16 %v473
    %v1615 = vunpack.c.h.b16 %v473
    %v1616 = vunpack.c.l.b16 %v474
    %v1617 = vunpack.c.h.b16 %v474
    %v1618 = vunpack.c.l.b16 %v475
    %v1619 = vunpack.c.h.b16 %v475
    %v1620 = vunpack.c.l.b16 %v476
    %v1621 = vunpack.c.h.b16 %v476
    %v1622 = vunpack.c.l.b16 %v477
    %v1623 = vunpack.c.h.b16 %v477
    %v1624 = vunpack.c.l.b16 %v478
    %v1625 = vunpack.c.h.b16 %v478
    %v1626 = vunpack.c.l.b16 %v479
    %v1627 = vunpack.c.h.b16 %v479
    %v1628 = vunpack.c.l.b16 %v480
    %v1629 = vunpack.c.h.b16 %v480
    %v1630 = vunpack.c.l.b16 %v481
    %v1631 = vunpack.c.h.b16 %v481
    %v1632 = vunpack.c.l.b16 %v482
    %v1633 = vunpack.c.h.b16 %v482
    %v1634 = vunpack.c.l.b16 %v483
    %v1635 = vunpack.c.h.b16 %v483
    %v1636 = vunpack.c.l.b16 %v484
    %v1637 = vunpack.c.h.b16 %v484
    %v1638 = vunpack.c.l.b16 %v485
    %v1639 = vunpack.c.h.b16 %v485
    %v1640 = vunpack.c.l.b16 %v486
    %v1641 = vunpack.c.h.b16 %v486
    %v1642 = vunpack.c.l.b16 %v487
    %v1643 = vunpack.c.h.b16 %v487
    %v1644 = vunpack.c.l.b16 %v488
    %v1645 = vunpack.c.h.b16 %v488
    %v1646 = vunpack.c.l.b16 %v489
    %v1647 = vunpack.c.h.b16 %v489
    %v1648 = vunpack.c.l.b16 %v490
    %v1649 = vunpack.c.h.b16 %v490
    %v1650 = vunpack.c.l.b16 %v491
    %v1651 = vunpack.c.h.b16 %v491
    %v1652 = vunpack.c.l.b16 %v492
    %v1653 = vunpack.c.h.b16 %v492
    %v1654 = vunpack.c.l.b16 %v493
    %v1655 = vunpack.c.h.b16 %v493
    %v1656 = vunpack.c.l.b16 %v494
    %v1657 = vunpack.c.h.b16 %v494
    %v1658 = vunpack.c.l.b16 %v495
    %v1659 = vunpack.c.h.b16 %v495
    %v1660 = vunpack.c.l.b16 %v496
    %v1661 = vunpack.c.h.b16 %v496
    %v1662 = vunpack.c.l.b16 %v497
    %v1663 = vunpack.c.h.b16 %v497
    %v1664 = vunpack.c.l.b16 %v498
    %v1665 = vunpack.c.h.b16 %v498
    %v1666 = vunpack.c.l.b16 %v499
    %v1667 = vunpack.c.h.b16 %v499
    %v1668 = vunpack.c.l.b16 %v500
    %v1669 = vunpack.c.h.b16 %v500
    %v1670 = vunpack.c.l.b16 %v501
    %v1671 = vunpack.c.h.b16 %v501
    %v1672 = vunpack.c.l.b16 %v502
    %v1673 = vunpack.c.h.b16 %v502
    %v1674 = vunpack.c.l.b16 %v503
    %v1675 = vunpack.c.h.b16 %v503
    %v1676 = vunpack.c.l.b16 %v504
    %v1677 = vunpack.c.h.b16 %v504
    %v1678 = vunpack.c.l.b16 %v505
    %v1679 = vunpack.c.h.b16 %v505
    %v1680 = vunpack.c.l.b16 %v506
    %v1681 = vunpack.c.h.b16 %v506
    %v1682 = vunpack.c.l.b16 %v507
    %v1683 = vunpack.c.h.b16 %v507
    %v1684 = vunpack.c.l.b16 %v508
    %v1685 = vunpack.c.h.b16 %v508
    %v1686 = vunpack.c.l.b16 %v509
    %v1687 = vunpack.c.h.b16 %v509
    %v1688 = vunpack.c.l.b16 %v510
    %v1689 = vunpack.c.h.b16 %v510
    %v1690 = vunpack.c.l.b16 %v511
    %v1691 = vunpack.c.h.b16 %v511
    %v1692 = vpack.c.b16 %v930, %v924
    %v1693 = vpack.c.b16 %v931, %v925
    %v1694 = vpack.c.b16 %v932, %v926
    %v1695 = vpack.c.b16 %v933, %v927
    %v1696 = vpack.c.b16 %v934, %v928
    %v1697 = vpack.c.b16 %v935, %v929
    %v1698 = vpack.c.b16 %v942, %v936
    %v1699 = vpack.c.b16 %v943, %v937
    %v1700 = vpack.c.b16 %v944, %v938
    %v1701 = vpack.c.b16 %v945, %v939
    %v1702 = vpack.c.b16 %v946, %v940
    %v1703 = vpack.c.b16 %v947, %v941
    %v1704 = vpack.c.b16 %v954, %v948
    %v1705 = vpack.c.b16 %v955, %v949
    %v1706 = vpack.c.b16 %v956, %v950
    %v1707 = vpack.c.b16 %v957, %v951
    %v1708 = vpack.c.b16 %v958, %v952
    %v1709 = vpack.c.b16 %v959, %v953
    %v1710 = vpack.c.b16 %v966, %v960
    %v1711 = vpack.c.b16 %v967, %v961
    %v1712 = vpack.c.b16 %v968, %v962
    %v1713 = vpack.c.b16 %v969, %v963
    %v1714 = vpack.c.b16 %v970, %v964
    %v1715 = vpack.c.b16 %v971, %v965
    %v1716 = vpack.c.b16 %v978, %v972
    %v1717 = vpack.c.b16 %v979, %v973
    %v1718 = vpack.c.b16 %v980, %v974
    %v1719 = vpack.c.b16 %v981, %v975
    %v1720 = vpack.c.b16 %v982, %v976
    %v1721 = vpack.c.b16 %v983, %v977
    %v1722 = vpack.c.b16 %v990, %v984
    %v1723 = vpack.c.b16 %v991, %v985
    %v1724 = vpack.c.b16 %v992, %v986
    %v1725 = vpack.c.b16 %v993, %v987
    %v1726 = vpack.c.b16 %v994, %v988
    %v1727 = vpack.c.b16 %v995, %v989
    %v1728 = vpack.c.b16 %v1002, %v996
    %v1729 = vpack.c.b16 %v1003, %v997
    %v1730 = vpack.c.b16 %v1004, %v998
    %v1731 = vpack.c.b16 %v1005, %v999
    %v1732 = vpack.c.b16 %v1006, %v1000
    %v1733 = vpack.c.b16 %v1007, %v1001
    %v1734 = vpack.c.b16 %v1014, %v1008
    %v1735 = vpack.c.b16 %v1015, %v1009
    %v1736 = vpack.c.b16 %v1016, %v1010
    %v1737 = vpack.c.b16 %v1017, %v1011
    %v1738 = vpack.c.b16 %v1018, %v1012
    %v1739 = vpack.c.b16 %v1019, %v1013
    %v1740 = vpack.c.b16 %v1026, %v1020
    %v1741 = vpack.c.b16 %v1027, %v1021
    %v1742 = vpack.c.b16 %v1028, %v1022
    %v1743 = vpack.c.b16 %v1029, %v1023
    %v1744 = vpack.c.b16 %v1030, %v1024
    %v1745 = vpack.c.b16 %v1031, %v1025
    %v1746 = vpack.c.b16 %v1038, %v1032
    %v1747 = vpack.c.b16 %v1039, %v1033
    %v1748 = vpack.c.b16 %v1040, %v1034
    %v1749 = vpack.c.b16 %v1041, %v1035
    %v1750 = vpack.c.b16 %v1042, %v1036
    %v1751 = vpack.c.b16 %v1043, %v1037
    %v1752 = vpack.c.b16 %v1050, %v1044
    %v1753 = vpack.c.b16 %v1051, %v1045
    %v1754 = vpack.c.b16 %v1052, %v1046
    %v1755 = vpack.c.b16 %v1053, %v1047
    %v1756 = vpack.c.b16 %v1054, %v1048
    %v1757 = vpack.c.b16 %v1055, %v1049
    %v1758 = vpack.c.b16 %v1062, %v1056
    %v1759 = vpack.c.b16 %v1063, %v1057
    %v1760 = vpack.c.b16 %v1064, %v1058
    %v1761 = vpack.c.b16 %v1065, %v1059
    %v1762 = vpack.c.b16 %v1066, %v1060
    %v1763 = vpack.c.b16 %v1067, %v1061
    %v1764 = vpack.c.b16 %v1074, %v1068
    %v1765 = vpack.c.b16 %v1075, %v1069
    %v1766 = vpack.c.b16 %v1076, %v1070
    %v1767 = vpack.c.b16 %v1077, %v1071
    %v1768 = vpack.c.b16 %v1078, %v1072
    %v1769 = vpack.c.b16 %v1079, %v1073
    %v1770 = vpack.c.b16 %v1086, %v1080
    %v1771 = vpack.c.b16 %v1087, %v1081
    %v1772 = vpack.c.b16 %v1088, %v1082
    %v1773 = vpack.c.b16 %v1089, %v1083
    %v1774 = vpack.c.b16 %v1090, %v1084
    %v1775 = vpack.c.b16 %v1091, %v1085
    %v1776 = vpack.c.b16 %v1098, %v1092
    %v1777 = vpack.c.b16 %v1099, %v1093
    %v1778 = vpack.c.b16 %v1100, %v1094
    %v1779 = vpack.c.b16 %v1101, %v1095
    %v1780 = vpack.c.b16 %v1102, %v1096
    %v1781 = vpack.c.b16 %v1103, %v1097
    %v1782 = vpack.c.b16 %v1110, %v1104
    %v1783 = vpack.c.b16 %v1111, %v1105
    %v1784 = vpack.c.b16 %v1112, %v1106
    %v1785 = vpack.c.b16 %v1113, %v1107
    %v1786 = vpack.c.b16 %v1114, %v1108
    %v1787 = vpack.c.b16 %v1115, %v1109
    %v1788 = vpack.c.b16 %v1122, %v1116
    %v1789 = vpack.c.b16 %v1123, %v1117
    %v1790 = vpack.c.b16 %v1124, %v1118
    %v1791 = vpack.c.b16 %v1125, %v1119
    %v1792 = vpack.c.b16 %v1126, %v1120
    %v1793 = vpack.c.b16 %v1127, %v1121
    %v1794 = vpack.c.b16 %v1134, %v1128
    %v1795 = vpack.c.b16 %v1135, %v1129
    %v1796 = vpack.c.b16 %v1136, %v1130
    %v1797 = vpack.c.b16 %v1137, %v1131
    %v1798 = vpack.c.b16 %v1138, %v1132
    %v1799 = vpack.c.b16 %v1139, %v1133
    %v1800 = vpack.c.b16 %v1146, %v1140
    %v1801 = vpack.c.b16 %v1147, %v1141
    %v1802 = vpack.c.b16 %v1148, %v1142
    %v1803 = vpack.c.b16 %v1149, %v1143
    %v1804 = vpack.c.b16 %v1150, %v1144
    %v1805 = vpack.c.b16 %v1151, %v1145
    %v1806 = vpack.c.b16 %v1158, %v1152
    %v1807 = vpack.c.b16 %v1159, %v1153
    %v1808 = vpack.c.b16 %v1160, %v1154
    %v1809 = vpack.c.b16 %v1161, %v1155
    %v1810 = vpack.c.b16 %v1162, %v1156
    %v1811 = vpack.c.b16 %v1163, %v1157
    %v1812 = vpack.c.b16 %v1170, %v1164
    %v1813 = vpack.c.b16 %v1171, %v1165
    %v1814 = vpack.c.b16 %v1172, %v1166
    %v1815 = vpack.c.b16 %v1173, %v1167
    %v1816 = vpack.c.b16 %v1174, %v1168
    %v1817 = vpack.c.b16 %v1175, %v1169
    %v1818 = vpack.c.b16 %v1182, %v1176
    %v1819 = vpack.c.b16 %v1183, %v1177
    %v1820 = vpack.c.b16 %v1184, %v1178
    %v1821 = vpack.c.b16 %v1185, %v1179
    %v1822 = vpack.c.b16 %v1186, %v1180
    %v1823 = vpack.c.b16 %v1187, %v1181
    %v1824 = vpack.c.b16 %v1194, %v1188
    %v1825 = vpack.c.b16 %v1195, %v1189
    %v1826 = vpack.c.b16 %v1196, %v1190
    %v1827 = vpack.c.b16 %v1197, %v1191
    %v1828 = vpack.c.b16 %v1198, %v1192
    %v1829 = vpack.c.b16 %v1199, %v1193
    %v1830 = vpack.c.b16 %v1206, %v1200
    %v1831 = vpack.c.b16 %v1207, %v1201
    %v1832 = vpack.c.b16 %v1208, %v1202
    %v1833 = vpack.c.b16 %v1209, %v1203
    %v1834 = vpack.c.b16 %v1210, %v1204
    %v1835 = vpack.c.b16 %v1211, %v1205
    %v1836 = vpack.c.b16 %v1218, %v1212
    %v1837 = vpack.c.b16 %v1219, %v1213
    %v1838 = vpack.c.b16 %v1220, %v1214
    %v1839 = vpack.c.b16 %v1221, %v1215
    %v1840 = vpack.c.b16 %v1222, %v1216
    %v1841 = vpack.c.b16 %v1223, %v1217
    %v1842 = vpack.c.b16 %v1230, %v1224
    %v1843 = vpack.c.b16 %v1231, %v1225
    %v1844 = vpack.c.b16 %v1232, %v1226
    %v1845 = vpack.c.b16 %v1233, %v1227
    %v1846 = vpack.c.b16 %v1234, %v1228
    %v1847 = vpack.c.b16 %v1235, %v1229
    %v1848 = vpack.c.b16 %v1242, %v1236
    %v1849 = vpack.c.b16 %v1243, %v1237
    %v1850 = vpack.c.b16 %v1244, %v1238
    %v1851 = vpack.c.b16 %v1245, %v1239
    %v1852 = vpack.c.b16 %v1246, %v1240
    %v1853 = vpack.c.b16 %v1247, %v1241
    %v1854 = vpack.c.b16 %v1254, %v1248
    %v1855 = vpack.c.b16 %v1255, %v1249
    %v1856 = vpack.c.b16 %v1256, %v1250
    %v1857 = vpack.c.b16 %v1257, %v1251
    %v1858 = vpack.c.b16 %v1258, %v1252
    %v1859 = vpack.c.b16 %v1259, %v1253
    %v1860 = vpack.c.b16 %v1266, %v1260
    %v1861 = vpack.c.b16 %v1267, %v1261
    %v1862 = vpack.c.b16 %v1268, %v1262
    %v1863 = vpack.c.b16 %v1269, %v1263
    %v1864 = vpack.c.b16 %v1270, %v1264
    %v1865 = vpack.c.b16 %v1271, %v1265
    %v1866 = vpack.c.b16 %v1278, %v1272
    %v1867 = vpack.c.b16 %v1279, %v1273
    %v1868 = vpack.c.b16 %v1280, %v1274
    %v1869 = vpack.c.b16 %v1281, %v1275
    %v1870 = vpack.c.b16 %v1282, %v1276
    %v1871 = vpack.c.b16 %v1283, %v1277
    %v1872 = vpack.c.b16 %v1290, %v1284
    %v1873 = vpack.c.b16 %v1291, %v1285
    %v1874 = vpack.c.b16 %v1292, %v1286
    %v1875 = vpack.c.b16 %v1293, %v1287
    %v1876 = vpack.c.b16 %v1294, %v1288
    %v1877 = vpack.c.b16 %v1295, %v1289
    %v1878 = vpack.c.b16 %v1302, %v1296
    %v1879 = vpack.c.b16 %v1303, %v1297
    %v1880 = vpack.c.b16 %v1304, %v1298
    %v1881 = vpack.c.b16 %v1305, %v1299
    %v1882 = vpack.c.b16 %v1306, %v1300
    %v1883 = vpack.c.b16 %v1307, %v1301
    %v1884 = vpack.c.b16 %v1314, %v1308
    %v1885 = vpack.c.b16 %v1315, %v1309
    %v1886 = vpack.c.b16 %v1316, %v1310
    %v1887 = vpack.c.b16 %v1317, %v1311
    %v1888 = vpack.c.b16 %v1318, %v1312
    %v1889 = vpack.c.b16 %v1319, %v1313
    %v1890 = vpack.c.b16 %v1326, %v1320
    %v1891 = vpack.c.b16 %v1327, %v1321
    %v1892 = vpack.c.b16 %v1328, %v1322
    %v1893 = vpack.c.b16 %v1329, %v1323
    %v1894 = vpack.c.b16 %v1330, %v1324
    %v1895 = vpack.c.b16 %v1331, %v1325
    %v1896 = vpack.c.b16 %v1338, %v1332
    %v1897 = vpack.c.b16 %v1339, %v1333
    %v1898 = vpack.c.b16 %v1340, %v1334
    %v1899 = vpack.c.b16 %v1341, %v1335
    %v1900 = vpack.c.b16 %v1342, %v1336
    %v1901 = vpack.c.b16 %v1343, %v1337
    %v1902 = vpack.c.b16 %v1350, %v1344
    %v1903 = vpack.c.b16 %v1351, %v1345
    %v1904 = vpack.c.b16 %v1352, %v1346
    %v1905 = vpack.c.b16 %v1353, %v1347
    %v1906 = vpack.c.b16 %v1354, %v1348
    %v1907 = vpack.c.b16 %v1355, %v1349
    %v1908 = vpack.c.b16 %v1362, %v1356
    %v1909 = vpack.c.b16 %v1363, %v1357
    %v1910 = vpack.c.b16 %v1364, %v1358
    %v1911 = vpack.c.b16 %v1365, %v1359
    %v1912 = vpack.c.b16 %v1366, %v1360
    %v1913 = vpack.c.b16 %v1367, %v1361
    %v1914 = vpack.c.b16 %v1374, %v1368
    %v1915 = vpack.c.b16 %v1375, %v1369
    %v1916 = vpack.c.b16 %v1376, %v1370
    %v1917 = vpack.c.b16 %v1377, %v1371
    %v1918 = vpack.c.b16 %v1378, %v1372
    %v1919 = vpack.c.b16 %v1379, %v1373
    %v1920 = vpack.c.b16 %v1386, %v1380
    %v1921 = vpack.c.b16 %v1387, %v1381
    %v1922 = vpack.c.b16 %v1388, %v1382
    %v1923 = vpack.c.b16 %v1389, %v1383
    %v1924 = vpack.c.b16 %v1390, %v1384
    %v1925 = vpack.c.b16 %v1391, %v1385
    %v1926 = vpack.c.b16 %v1398, %v1392
    %v1927 = vpack.c.b16 %v1399, %v1393
    %v1928 = vpack.c.b16 %v1400, %v1394
    %v1929 = vpack.c.b16 %v1401, %v1395
    %v1930 = vpack.c.b16 %v1402, %v1396
    %v1931 = vpack.c.b16 %v1403, %v1397
    %v1932 = vpack.c.b16 %v1410, %v1404
    %v1933 = vpack.c.b16 %v1411, %v1405
    %v1934 = vpack.c.b16 %v1412, %v1406
    %v1935 = vpack.c.b16 %v1413, %v1407
    %v1936 = vpack.c.b16 %v1414, %v1408
    %v1937 = vpack.c.b16 %v1415, %v1409
    %v1938 = vpack.c.b16 %v1422, %v1416
    %v1939 = vpack.c.b16 %v1423, %v1417
    %v1940 = vpack.c.b16 %v1424, %v1418
    %v1941 = vpack.c.b16 %v1425, %v1419
    %v1942 = vpack.c.b16 %v1426, %v1420
    %v1943 = vpack.c.b16 %v1427, %v1421
    %v1944 = vpack.c.b16 %v1434, %v1428
    %v1945 = vpack.c.b16 %v1435, %v1429
    %v1946 = vpack.c.b16 %v1436, %v1430
    %v1947 = vpack.c.b16 %v1437, %v1431
    %v1948 = vpack.c.b16 %v1438, %v1432
    %v1949 = vpack.c.b16 %v1439, %v1433
    %v1950 = vpack.c.b16 %v1446, %v1440
    %v1951 = vpack.c.b16 %v1447, %v1441
    %v1952 = vpack.c.b16 %v1448, %v1442
    %v1953 = vpack.c.b16 %v1449, %v1443
    %v1954 = vpack.c.b16 %v1450, %v1444
    %v1955 = vpack.c.b16 %v1451, %v1445
    %v1956 = vpack.c.b16 %v1458, %v1452
    %v1957 = vpack.c.b16 %v1459, %v1453
    %v1958 = vpack.c.b16 %v1460, %v1454
    %v1959 = vpack.c.b16 %v1461, %v1455
    %v1960 = vpack.c.b16 %v1462, %v1456
    %v1961 = vpack.c.b16 %v1463, %v1457
    %v1962 = vpack.c.b16 %v1470, %v1464
    %v1963 = vpack.c.b16 %v1471, %v1465
    %v1964 = vpack.c.b16 %v1472, %v1466
    %v1965 = vpack.c.b16 %v1473, %v1467
    %v1966 = vpack.c.b16 %v1474, %v1468
    %v1967 = vpack.c.b16 %v1475, %v1469
    %v1968 = vpack.c.b16 %v1482, %v1476
    %v1969 = vpack.c.b16 %v1483, %v1477
    %v1970 = vpack.c.b16 %v1484, %v1478
    %v1971 = vpack.c.b16 %v1485, %v1479
    %v1972 = vpack.c.b16 %v1486, %v1480
    %v1973 = vpack.c.b16 %v1487, %v1481
    %v1974 = vpack.c.b16 %v1494, %v1488
    %v1975 = vpack.c.b16 %v1495, %v1489
    %v1976 = vpack.c.b16 %v1496, %v1490
    %v1977 = vpack.c.b16 %v1497, %v1491
    %v1978 = vpack.c.b16 %v1498, %v1492
    %v1979 = vpack.c.b16 %v1499, %v1493
    %v1980 = vpack.c.b16 %v1506, %v1500
    %v1981 = vpack.c.b16 %v1507, %v1501
    %v1982 = vpack.c.b16 %v1508, %v1502
    %v1983 = vpack.c.b16 %v1509, %v1503
    %v1984 = vpack.c.b16 %v1510, %v1504
    %v1985 = vpack.c.b16 %v1511, %v1505
    %v1986 = vpack.c.b16 %v1518, %v1512
    %v1987 = vpack.c.b16 %v1519, %v1513
    %v1988 = vpack.c.b16 %v1520, %v1514
    %v1989 = vpack.c.b16 %v1521, %v1515
    %v1990 = vpack.c.b16 %v1522, %v1516
    %v1991 = vpack.c.b16 %v1523, %v1517
    %v1992 = vpack.c.b16 %v1530, %v1524
    %v1993 = vpack.c.b16 %v1531, %v1525
    %v1994 = vpack.c.b16 %v1532, %v1526
    %v1995 = vpack.c.b16 %v1533, %v1527
    %v1996 = vpack.c.b16 %v1534, %v1528
    %v1997 = vpack.c.b16 %v1535, %v1529
    %v1998 = vpack.c.b16 %v1542, %v1536
    %v1999 = vpack.c.b16 %v1543, %v1537
    %v2000 = vpack.c.b16 %v1544, %v1538
    %v2001 = vpack.c.b16 %v1545, %v1539
    %v2002 = vpack.c.b16 %v1546, %v1540
    %v2003 = vpack.c.b16 %v1547, %v1541
    %v2004 = vpack.c.b16 %v1554, %v1548
    %v2005 = vpack.c.b16 %v1555, %v1549
    %v2006 = vpack.c.b16 %v1556, %v1550
    %v2007 = vpack.c.b16 %v1557, %v1551
    %v2008 = vpack.c.b16 %v1558, %v1552
    %v2009 = vpack.c.b16 %v1559, %v1553
    %v2010 = vpack.c.b16 %v1566, %v1560
    %v2011 = vpack.c.b16 %v1567, %v1561
    %v2012 = vpack.c.b16 %v1568, %v1562
    %v2013 = vpack.c.b16 %v1569, %v1563
    %v2014 = vpack.c.b16 %v1570, %v1564
    %v2015 = vpack.c.b16 %v1571, %v1565
    %v2016 = vpack.c.b16 %v1578, %v1572
    %v2017 = vpack.c.b16 %v1579, %v1573
    %v2018 = vpack.c.b16 %v1580, %v1574
    %v2019 = vpack.c.b16 %v1581, %v1575
    %v2020 = vpack.c.b16 %v1582, %v1576
    %v2021 = vpack.c.b16 %v1583, %v1577
    %v2022 = vpack.c.b16 %v1590, %v1584
    %v2023 = vpack.c.b16 %v1591, %v1585
    %v2024 = vpack.c.b16 %v1592, %v1586
    %v2025 = vpack.c.b16 %v1593, %v1587
    %v2026 = vpack.c.b16 %v1594, %v1588
    %v2027 = vpack.c.b16 %v1595, %v1589
    %v2028 = vpack.c.b16 %v1602, %v1596
    %v2029 = vpack.c.b16 %v1603, %v1597
    %v2030 = vpack.c.b16 %v1604, %v1598
    %v2031 = vpack.c.b16 %v1605, %v1599
    %v2032 = vpack.c.b16 %v1606, %v1600
    %v2033 = vpack.c.b16 %v1607, %v1601
    %v2034 = vpack.c.b16 %v1614, %v1608
    %v2035 = vpack.c.b16 %v1615, %v1609
    %v2036 = vpack.c.b16 %v1616, %v1610
    %v2037 = vpack.c.b16 %v1617, %v1611
    %v2038 = vpack.c.b16 %v1618, %v1612
    %v2039 = vpack.c.b16 %v1619, %v1613
    %v2040 = vpack.c.b16 %v1626, %v1620
    %v2041 = vpack.c.b16 %v1627, %v1621
    %v2042 = vpack.c.b16 %v1628, %v1622
    %v2043 = vpack.c.b16 %v1629, %v1623
    %v2044 = vpack.c.b16 %v1630, %v1624
    %v2045 = vpack.c.b16 %v1631, %v1625
    %v2046 = vpack.c.b16 %v1638, %v1632
    %v2047 = vpack.c.b16 %v1639, %v1633
    %v2048 = vpack.c.b16 %v1640, %v1634
    %v2049 = vpack.c.b16 %v1641, %v1635
    %v2050 = vpack.c.b16 %v1642, %v1636
    %v2051 = vpack.c.b16 %v1643, %v1637
    %v2052 = vpack.c.b16 %v1650, %v1644
    %v2053 = vpack.c.b16 %v1651, %v1645
    %v2054 = vpack.c.b16 %v1652, %v1646
    %v2055 = vpack.c.b16 %v1653, %v1647
    %v2056 = vpack.c.b16 %v1654, %v1648
    %v2057 = vpack.c.b16 %v1655, %v1649
    %v2058 = vpack.c.b16 %v1662, %v1656
    %v2059 = vpack.c.b16 %v1663, %v1657
    %v2060 = vpack.c.b16 %v1664, %v1658
    %v2061 = vpack.c.b16 %v1665, %v1659
    %v2062 = vpack.c.b16 %v1666, %v1660
    %v2063 = vpack.c.b16 %v1667, %v1661
    %v2064 = vpack.c.b16 %v1674, %v1668
    %v2065 = vpack.c.b16 %v1675, %v1669
    %v2066 = vpack.c.b16 %v1676, %v1670
    %v2067 = vpack.c.b16 %v1677, %v1671
    %v2068 = vpack.c.b16 %v1678, %v1672
    %v2069 = vpack.c.b16 %v1679, %v1673
    %v2070 = vpack.c.b16 %v1686, %v1680
    %v2071 = vpack.c.b16 %v1687, %v1681
    %v2072 = vpack.c.b16 %v1688, %v1682
    %v2073 = vpack.c.b16 %v1689, %v1683
    %v2074 = vpack.c.b16 %v1690, %v1684
    %v2075 = vpack.c.b16 %v1691, %v1685
    %2460 = vmatprep.subr.bf16.mxu0 %v1735
    %2461 = vmatpush1.bf16.msra.mxu0 %v1734
    %2462 = vmatprep.subr.bf16.mxu0 %v1729
    %2463 = vmatpush1.bf16.msra.mxu0 %v1728
    %2464 = vmatprep.subr.bf16.mxu0 %v1723
    %2465 = vmatpush1.bf16.msra.mxu0 %v1722
    %2466 = vmatprep.subr.bf16.mxu0 %v1717
    %2467 = vmatpush1.bf16.msra.mxu0 %v1716
    %2468 = vmatprep.subr.bf16.mxu0 %v1711
    %2469 = vmatpush1.bf16.msra.mxu0 %v1710
    %2470 = vmatprep.subr.bf16.mxu0 %v1705
    %2471 = vmatpush1.bf16.msra.mxu0 %v1704
    %2472 = vmatprep.subr.bf16.mxu0 %v1699
    %2473 = vmatpush1.bf16.msra.mxu0 %v1698
    %2474 = vmatprep.subr.bf16.mxu0 %v1693
    %2475 = vmatpush1.bf16.msra.mxu0 %v1692
    %2476 = vmatprep.subr.bf16.mxu0 %v1783
    %2477 = vmatpush2.bf16.msra.mxu0 %v1782
    %2478 = vmatprep.subr.bf16.mxu0 %v1777
    %2479 = vmatpush2.bf16.msra.mxu0 %v1776
    %2480 = vmatprep.subr.bf16.mxu0 %v1771
    %2481 = vmatpush2.bf16.msra.mxu0 %v1770
    %2482 = vmatprep.subr.bf16.mxu0 %v1765
    %2483 = vmatpush2.bf16.msra.mxu0 %v1764
    %2484 = vmatprep.subr.bf16.mxu0 %v1759
    %2485 = vmatpush2.bf16.msra.mxu0 %v1758
    %2486 = vmatprep.subr.bf16.mxu0 %v1753
    %2487 = vmatpush2.bf16.msra.mxu0 %v1752
    %2488 = vmatprep.subr.bf16.mxu0 %v1747
    %2489 = vmatpush2.bf16.msra.mxu0 %v1746
    %2490 = vmatprep.subr.bf16.mxu0 %v1741
    %2491 = vmatpush2.bf16.msra.mxu0 %v1740
    %2492 = vmatprep.mubr.bf16.mxu0 %v525
    %2493 = vmatmul.mubr.bf16.gmra.mxu0 %v524
    %v2494 = vpop.f32.mrf.mxu0
    %v2495 = vadd.f32 0.0, %v2494
    %v2496 = vpop.f32.mrf.mxu0
    %v2497 = vadd.f32 0.0, %v2496
    %v2498 = vpop.f32.mrf.mxu0
    %v2499 = vpop.f32.mrf.mxu0
    %2500 = vdwg.mxu0
    %2501 = vmatprep.subr.bf16.mxu0 %v1831
    %2502 = vmatpush1.bf16.msra.mxu0 %v1830
    %2503 = vmatprep.subr.bf16.mxu0 %v1825
    %2504 = vmatpush1.bf16.msra.mxu0 %v1824
    %2505 = vmatprep.subr.bf16.mxu0 %v1819
    %2506 = vmatpush1.bf16.msra.mxu0 %v1818
    %2507 = vmatprep.subr.bf16.mxu0 %v1813
    %2508 = vmatpush1.bf16.msra.mxu0 %v1812
    %2509 = vmatprep.subr.bf16.mxu0 %v1807
    %2510 = vmatpush1.bf16.msra.mxu0 %v1806
    %2511 = vmatprep.subr.bf16.mxu0 %v1801
    %2512 = vmatpush1.bf16.msra.mxu0 %v1800
    %2513 = vmatprep.subr.bf16.mxu0 %v1795
    %2514 = vmatpush1.bf16.msra.mxu0 %v1794
    %2515 = vmatprep.subr.bf16.mxu0 %v1789
    %2516 = vmatpush1.bf16.msra.mxu0 %v1788
    %2517 = vmatprep.subr.bf16.mxu0 %v1879
    %2518 = vmatpush2.bf16.msra.mxu0 %v1878
    %2519 = vmatprep.subr.bf16.mxu0 %v1873
    %2520 = vmatpush2.bf16.msra.mxu0 %v1872
    %2521 = vmatprep.subr.bf16.mxu0 %v1867
    %2522 = vmatpush2.bf16.msra.mxu0 %v1866
    %2523 = vmatprep.subr.bf16.mxu0 %v1861
    %2524 = vmatpush2.bf16.msra.mxu0 %v1860
    %2525 = vmatprep.subr.bf16.mxu0 %v1855
    %2526 = vmatpush2.bf16.msra.mxu0 %v1854
    %2527 = vmatprep.subr.bf16.mxu0 %v1849
    %2528 = vmatpush2.bf16.msra.mxu0 %v1848
    %2529 = vmatprep.subr.bf16.mxu0 %v1843
    %2530 = vmatpush2.bf16.msra.mxu0 %v1842
    %2531 = vmatprep.subr.bf16.mxu0 %v1837
    %2532 = vmatpush2.bf16.msra.mxu0 %v1836
    %2533 = vmatprep.mubr.bf16.mxu0 %v527
    %2534 = vmatmul.mubr.bf16.gmra.mxu0 %v526
    %v2535 = vpop.f32.mrf.mxu0
    %v2536 = vadd.f32 %v2495, %v2535
    %v2537 = vpop.f32.mrf.mxu0
    %v2538 = vadd.f32 %v2497, %v2537
    %v2539 = vpop.f32.mrf.mxu0
    %v2540 = vpop.f32.mrf.mxu0
    %2541 = vdwg.mxu0
    %2542 = vmatprep.subr.bf16.mxu0 %v1927
    %2543 = vmatpush1.bf16.msra.mxu0 %v1926
    %2544 = vmatprep.subr.bf16.mxu0 %v1921
    %2545 = vmatpush1.bf16.msra.mxu0 %v1920
    %2546 = vmatprep.subr.bf16.mxu0 %v1915
    %2547 = vmatpush1.bf16.msra.mxu0 %v1914
    %2548 = vmatprep.subr.bf16.mxu0 %v1909
    %2549 = vmatpush1.bf16.msra.mxu0 %v1908
    %2550 = vmatprep.subr.bf16.mxu0 %v1903
    %2551 = vmatpush1.bf16.msra.mxu0 %v1902
    %2552 = vmatprep.subr.bf16.mxu0 %v1897
    %2553 = vmatpush1.bf16.msra.mxu0 %v1896
    %2554 = vmatprep.subr.bf16.mxu0 %v1891
    %2555 = vmatpush1.bf16.msra.mxu0 %v1890
    %2556 = vmatprep.subr.bf16.mxu0 %v1885
    %2557 = vmatpush1.bf16.msra.mxu0 %v1884
    %2558 = vmatprep.subr.bf16.mxu0 %v1975
    %2559 = vmatpush2.bf16.msra.mxu0 %v1974
    %2560 = vmatprep.subr.bf16.mxu0 %v1969
    %2561 = vmatpush2.bf16.msra.mxu0 %v1968
    %2562 = vmatprep.subr.bf16.mxu0 %v1963
    %2563 = vmatpush2.bf16.msra.mxu0 %v1962
    %2564 = vmatprep.subr.bf16.mxu0 %v1957
    %2565 = vmatpush2.bf16.msra.mxu0 %v1956
    %2566 = vmatprep.subr.bf16.mxu0 %v1951
    %2567 = vmatpush2.bf16.msra.mxu0 %v1950
    %2568 = vmatprep.subr.bf16.mxu0 %v1945
    %2569 = vmatpush2.bf16.msra.mxu0 %v1944
    %2570 = vmatprep.subr.bf16.mxu0 %v1939
    %2571 = vmatpush2.bf16.msra.mxu0 %v1938
    %2572 = vmatprep.subr.bf16.mxu0 %v1933
    %2573 = vmatpush2.bf16.msra.mxu0 %v1932
    %2574 = vmatprep.mubr.bf16.mxu0 %v529
    %2575 = vmatmul.mubr.bf16.gmra.mxu0 %v528
    %v2576 = vpop.f32.mrf.mxu0
    %v2577 = vadd.f32 %v2536, %v2576
    %v2578 = vpop.f32.mrf.mxu0
    %v2579 = vadd.f32 %v2538, %v2578
    %v2580 = vpop.f32.mrf.mxu0
    %v2581 = vpop.f32.mrf.mxu0
    %2582 = vdwg.mxu0
    %2583 = vmatprep.subr.bf16.mxu0 %v2023
    %2584 = vmatpush1.bf16.msra.mxu0 %v2022
    %2585 = vmatprep.subr.bf16.mxu0 %v2017
    %2586 = vmatpush1.bf16.msra.mxu0 %v2016
    %2587 = vmatprep.subr.bf16.mxu0 %v2011
    %2588 = vmatpush1.bf16.msra.mxu0 %v2010
    %2589 = vmatprep.subr.bf16.mxu0 %v2005
    %2590 = vmatpush1.bf16.msra.mxu0 %v2004
    %2591 = vmatprep.subr.bf16.mxu0 %v1999
    %2592 = vmatpush1.bf16.msra.mxu0 %v1998
    %2593 = vmatprep.subr.bf16.mxu0 %v1993
    %2594 = vmatpush1.bf16.msra.mxu0 %v1992
    %2595 = vmatprep.subr.bf16.mxu0 %v1987
    %2596 = vmatpush1.bf16.msra.mxu0 %v1986
    %2597 = vmatprep.subr.bf16.mxu0 %v1981
    %2598 = vmatpush1.bf16.msra.mxu0 %v1980
    %2599 = vmatprep.subr.bf16.mxu0 %v2071
    %2600 = vmatpush2.bf16.msra.mxu0 %v2070
    %2601 = vmatprep.subr.bf16.mxu0 %v2065
    %2602 = vmatpush2.bf16.msra.mxu0 %v2064
    %2603 = vmatprep.subr.bf16.mxu0 %v2059
    %2604 = vmatpush2.bf16.msra.mxu0 %v2058
    %2605 = vmatprep.subr.bf16.mxu0 %v2053
    %2606 = vmatpush2.bf16.msra.mxu0 %v2052
    %2607 = vmatprep.subr.bf16.mxu0 %v2047
    %2608 = vmatpush2.bf16.msra.mxu0 %v2046
    %2609 = vmatprep.subr.bf16.mxu0 %v2041
    %2610 = vmatpush2.bf16.msra.mxu0 %v2040
    %2611 = vmatprep.subr.bf16.mxu0 %v2035
    %2612 = vmatpush2.bf16.msra.mxu0 %v2034
    %2613 = vmatprep.subr.bf16.mxu0 %v2029
    %2614 = vmatpush2.bf16.msra.mxu0 %v2028
    %2615 = vmatprep.mubr.bf16.mxu0 %v531
    %2616 = vmatmul.mubr.bf16.gmra.mxu0 %v530
    %v2617 = vpop.f32.mrf.mxu0
    %v2618 = vadd.f32 %v2577, %v2617
    %v2619 = vpop.f32.mrf.mxu0
    %v2620 = vadd.f32 %v2579, %v2619
    %v2621 = vpop.f32.mrf.mxu0
    %v2622 = vpop.f32.mrf.mxu0
    %2623 = vdwg.mxu0
    %2624 = vmatprep.subr.bf16.mxu0 %v1737
    %2625 = vmatpush1.bf16.msra.mxu0 %v1736
    %2626 = vmatprep.subr.bf16.mxu0 %v1731
    %2627 = vmatpush1.bf16.msra.mxu0 %v1730
    %2628 = vmatprep.subr.bf16.mxu0 %v1725
    %2629 = vmatpush1.bf16.msra.mxu0 %v1724
    %2630 = vmatprep.subr.bf16.mxu0 %v1719
    %2631 = vmatpush1.bf16.msra.mxu0 %v1718
    %2632 = vmatprep.subr.bf16.mxu0 %v1713
    %2633 = vmatpush1.bf16.msra.mxu0 %v1712
    %2634 = vmatprep.subr.bf16.mxu0 %v1707
    %2635 = vmatpush1.bf16.msra.mxu0 %v1706
    %2636 = vmatprep.subr.bf16.mxu0 %v1701
    %2637 = vmatpush1.bf16.msra.mxu0 %v1700
    %2638 = vmatprep.subr.bf16.mxu0 %v1695
    %2639 = vmatpush1.bf16.msra.mxu0 %v1694
    %2640 = vmatprep.subr.bf16.mxu0 %v1785
    %2641 = vmatpush2.bf16.msra.mxu0 %v1784
    %2642 = vmatprep.subr.bf16.mxu0 %v1779
    %2643 = vmatpush2.bf16.msra.mxu0 %v1778
    %2644 = vmatprep.subr.bf16.mxu0 %v1773
    %2645 = vmatpush2.bf16.msra.mxu0 %v1772
    %2646 = vmatprep.subr.bf16.mxu0 %v1767
    %2647 = vmatpush2.bf16.msra.mxu0 %v1766
    %2648 = vmatprep.subr.bf16.mxu0 %v1761
    %2649 = vmatpush2.bf16.msra.mxu0 %v1760
    %2650 = vmatprep.subr.bf16.mxu0 %v1755
    %2651 = vmatpush2.bf16.msra.mxu0 %v1754
    %2652 = vmatprep.subr.bf16.mxu0 %v1749
    %2653 = vmatpush2.bf16.msra.mxu0 %v1748
    %2654 = vmatprep.subr.bf16.mxu0 %v1743
    %2655 = vmatpush2.bf16.msra.mxu0 %v1742
    %2656 = vmatprep.mubr.bf16.mxu0 %v525
    %2657 = vmatmul.mubr.bf16.gmra.mxu0 %v524
    %v2658 = vpop.f32.mrf.mxu0
    %v2659 = vadd.f32 0.0, %v2658
    %v2660 = vpop.f32.mrf.mxu0
    %v2661 = vadd.f32 0.0, %v2660
    %v2662 = vpop.f32.mrf.mxu0
    %v2663 = vpop.f32.mrf.mxu0
    %2664 = vdwg.mxu0
    %2665 = vmatprep.subr.bf16.mxu0 %v1833
    %2666 = vmatpush1.bf16.msra.mxu0 %v1832
    %2667 = vmatprep.subr.bf16.mxu0 %v1827
    %2668 = vmatpush1.bf16.msra.mxu0 %v1826
    %2669 = vmatprep.subr.bf16.mxu0 %v1821
    %2670 = vmatpush1.bf16.msra.mxu0 %v1820
    %2671 = vmatprep.subr.bf16.mxu0 %v1815
    %2672 = vmatpush1.bf16.msra.mxu0 %v1814
    %2673 = vmatprep.subr.bf16.mxu0 %v1809
    %2674 = vmatpush1.bf16.msra.mxu0 %v1808
    %2675 = vmatprep.subr.bf16.mxu0 %v1803
    %2676 = vmatpush1.bf16.msra.mxu0 %v1802
    %2677 = vmatprep.subr.bf16.mxu0 %v1797
    %2678 = vmatpush1.bf16.msra.mxu0 %v1796
    %2679 = vmatprep.subr.bf16.mxu0 %v1791
    %2680 = vmatpush1.bf16.msra.mxu0 %v1790
    %2681 = vmatprep.subr.bf16.mxu0 %v1881
    %2682 = vmatpush2.bf16.msra.mxu0 %v1880
    %2683 = vmatprep.subr.bf16.mxu0 %v1875
    %2684 = vmatpush2.bf16.msra.mxu0 %v1874
    %2685 = vmatprep.subr.bf16.mxu0 %v1869
    %2686 = vmatpush2.bf16.msra.mxu0 %v1868
    %2687 = vmatprep.subr.bf16.mxu0 %v1863
    %2688 = vmatpush2.bf16.msra.mxu0 %v1862
    %2689 = vmatprep.subr.bf16.mxu0 %v1857
    %2690 = vmatpush2.bf16.msra.mxu0 %v1856
    %2691 = vmatprep.subr.bf16.mxu0 %v1851
    %2692 = vmatpush2.bf16.msra.mxu0 %v1850
    %2693 = vmatprep.subr.bf16.mxu0 %v1845
    %2694 = vmatpush2.bf16.msra.mxu0 %v1844
    %2695 = vmatprep.subr.bf16.mxu0 %v1839
    %2696 = vmatpush2.bf16.msra.mxu0 %v1838
    %2697 = vmatprep.mubr.bf16.mxu0 %v527
    %2698 = vmatmul.mubr.bf16.gmra.mxu0 %v526
    %v2699 = vpop.f32.mrf.mxu0
    %v2700 = vadd.f32 %v2659, %v2699
    %v2701 = vpop.f32.mrf.mxu0
    %v2702 = vadd.f32 %v2661, %v2701
    %v2703 = vpop.f32.mrf.mxu0
    %v2704 = vpop.f32.mrf.mxu0
    %2705 = vdwg.mxu0
    %2706 = vmatprep.subr.bf16.mxu0 %v1929
    %2707 = vmatpush1.bf16.msra.mxu0 %v1928
    %2708 = vmatprep.subr.bf16.mxu0 %v1923
    %2709 = vmatpush1.bf16.msra.mxu0 %v1922
    %2710 = vmatprep.subr.bf16.mxu0 %v1917
    %2711 = vmatpush1.bf16.msra.mxu0 %v1916
    %2712 = vmatprep.subr.bf16.mxu0 %v1911
    %2713 = vmatpush1.bf16.msra.mxu0 %v1910
    %2714 = vmatprep.subr.bf16.mxu0 %v1905
    %2715 = vmatpush1.bf16.msra.mxu0 %v1904
    %2716 = vmatprep.subr.bf16.mxu0 %v1899
    %2717 = vmatpush1.bf16.msra.mxu0 %v1898
    %2718 = vmatprep.subr.bf16.mxu0 %v1893
    %2719 = vmatpush1.bf16.msra.mxu0 %v1892
    %2720 = vmatprep.subr.bf16.mxu0 %v1887
    %2721 = vmatpush1.bf16.msra.mxu0 %v1886
    %2722 = vmatprep.subr.bf16.mxu0 %v1977
    %2723 = vmatpush2.bf16.msra.mxu0 %v1976
    %2724 = vmatprep.subr.bf16.mxu0 %v1971
    %2725 = vmatpush2.bf16.msra.mxu0 %v1970
    %2726 = vmatprep.subr.bf16.mxu0 %v1965
    %2727 = vmatpush2.bf16.msra.mxu0 %v1964
    %2728 = vmatprep.subr.bf16.mxu0 %v1959
    %2729 = vmatpush2.bf16.msra.mxu0 %v1958
    %2730 = vmatprep.subr.bf16.mxu0 %v1953
    %2731 = vmatpush2.bf16.msra.mxu0 %v1952
    %2732 = vmatprep.subr.bf16.mxu0 %v1947
    %2733 = vmatpush2.bf16.msra.mxu0 %v1946
    %2734 = vmatprep.subr.bf16.mxu0 %v1941
    %2735 = vmatpush2.bf16.msra.mxu0 %v1940
    %2736 = vmatprep.subr.bf16.mxu0 %v1935
    %2737 = vmatpush2.bf16.msra.mxu0 %v1934
    %2738 = vmatprep.mubr.bf16.mxu0 %v529
    %2739 = vmatmul.mubr.bf16.gmra.mxu0 %v528
    %v2740 = vpop.f32.mrf.mxu0
    %v2741 = vadd.f32 %v2700, %v2740
    %v2742 = vpop.f32.mrf.mxu0
    %v2743 = vadd.f32 %v2702, %v2742
    %v2744 = vpop.f32.mrf.mxu0
    %v2745 = vpop.f32.mrf.mxu0
    %2746 = vdwg.mxu0
    %2747 = vmatprep.subr.bf16.mxu0 %v2025
    %2748 = vmatpush1.bf16.msra.mxu0 %v2024
    %2749 = vmatprep.subr.bf16.mxu0 %v2019
    %2750 = vmatpush1.bf16.msra.mxu0 %v2018
    %2751 = vmatprep.subr.bf16.mxu0 %v2013
    %2752 = vmatpush1.bf16.msra.mxu0 %v2012
    %2753 = vmatprep.subr.bf16.mxu0 %v2007
    %2754 = vmatpush1.bf16.msra.mxu0 %v2006
    %2755 = vmatprep.subr.bf16.mxu0 %v2001
    %2756 = vmatpush1.bf16.msra.mxu0 %v2000
    %2757 = vmatprep.subr.bf16.mxu0 %v1995
    %2758 = vmatpush1.bf16.msra.mxu0 %v1994
    %2759 = vmatprep.subr.bf16.mxu0 %v1989
    %2760 = vmatpush1.bf16.msra.mxu0 %v1988
    %2761 = vmatprep.subr.bf16.mxu0 %v1983
    %2762 = vmatpush1.bf16.msra.mxu0 %v1982
    %2763 = vmatprep.subr.bf16.mxu0 %v2073
    %2764 = vmatpush2.bf16.msra.mxu0 %v2072
    %2765 = vmatprep.subr.bf16.mxu0 %v2067
    %2766 = vmatpush2.bf16.msra.mxu0 %v2066
    %2767 = vmatprep.subr.bf16.mxu0 %v2061
    %2768 = vmatpush2.bf16.msra.mxu0 %v2060
    %2769 = vmatprep.subr.bf16.mxu0 %v2055
    %2770 = vmatpush2.bf16.msra.mxu0 %v2054
    %2771 = vmatprep.subr.bf16.mxu0 %v2049
    %2772 = vmatpush2.bf16.msra.mxu0 %v2048
    %2773 = vmatprep.subr.bf16.mxu0 %v2043
    %2774 = vmatpush2.bf16.msra.mxu0 %v2042
    %2775 = vmatprep.subr.bf16.mxu0 %v2037
    %2776 = vmatpush2.bf16.msra.mxu0 %v2036
    %2777 = vmatprep.subr.bf16.mxu0 %v2031
    %2778 = vmatpush2.bf16.msra.mxu0 %v2030
    %2779 = vmatprep.mubr.bf16.mxu0 %v531
    %2780 = vmatmul.mubr.bf16.gmra.mxu0 %v530
    %v2781 = vpop.f32.mrf.mxu0
    %v2782 = vadd.f32 %v2741, %v2781
    %v2783 = vpop.f32.mrf.mxu0
    %v2784 = vadd.f32 %v2743, %v2783
    %v2785 = vpop.f32.mrf.mxu0
    %v2786 = vpop.f32.mrf.mxu0
    %2787 = vdwg.mxu0
    %2788 = vmatprep.subr.bf16.mxu0 %v1739
    %2789 = vmatpush1.bf16.msra.mxu0 %v1738
    %2790 = vmatprep.subr.bf16.mxu0 %v1733
    %2791 = vmatpush1.bf16.msra.mxu0 %v1732
    %2792 = vmatprep.subr.bf16.mxu0 %v1727
    %2793 = vmatpush1.bf16.msra.mxu0 %v1726
    %2794 = vmatprep.subr.bf16.mxu0 %v1721
    %2795 = vmatpush1.bf16.msra.mxu0 %v1720
    %2796 = vmatprep.subr.bf16.mxu0 %v1715
    %2797 = vmatpush1.bf16.msra.mxu0 %v1714
    %2798 = vmatprep.subr.bf16.mxu0 %v1709
    %2799 = vmatpush1.bf16.msra.mxu0 %v1708
    %2800 = vmatprep.subr.bf16.mxu0 %v1703
    %2801 = vmatpush1.bf16.msra.mxu0 %v1702
    %2802 = vmatprep.subr.bf16.mxu0 %v1697
    %2803 = vmatpush1.bf16.msra.mxu0 %v1696
    %2804 = vmatprep.subr.bf16.mxu0 %v1787
    %2805 = vmatpush2.bf16.msra.mxu0 %v1786
    %2806 = vmatprep.subr.bf16.mxu0 %v1781
    %2807 = vmatpush2.bf16.msra.mxu0 %v1780
    %2808 = vmatprep.subr.bf16.mxu0 %v1775
    %2809 = vmatpush2.bf16.msra.mxu0 %v1774
    %2810 = vmatprep.subr.bf16.mxu0 %v1769
    %2811 = vmatpush2.bf16.msra.mxu0 %v1768
    %2812 = vmatprep.subr.bf16.mxu0 %v1763
    %2813 = vmatpush2.bf16.msra.mxu0 %v1762
    %2814 = vmatprep.subr.bf16.mxu0 %v1757
    %2815 = vmatpush2.bf16.msra.mxu0 %v1756
    %2816 = vmatprep.subr.bf16.mxu0 %v1751
    %2817 = vmatpush2.bf16.msra.mxu0 %v1750
    %2818 = vmatprep.subr.bf16.mxu0 %v1745
    %2819 = vmatpush2.bf16.msra.mxu0 %v1744
    %2820 = vmatprep.mubr.bf16.mxu0 %v525
    %2821 = vmatmul.mubr.bf16.gmra.mxu0 %v524
    %v2822 = vpop.f32.mrf.mxu0
    %v2823 = vadd.f32 0.0, %v2822
    %v2824 = vpop.f32.mrf.mxu0
    %v2825 = vadd.f32 0.0, %v2824
    %v2826 = vpop.f32.mrf.mxu0
    %v2827 = vpop.f32.mrf.mxu0
    %2828 = vdwg.mxu0
    %2829 = vmatprep.subr.bf16.mxu0 %v1835
    %2830 = vmatpush1.bf16.msra.mxu0 %v1834
    %2831 = vmatprep.subr.bf16.mxu0 %v1829
    %2832 = vmatpush1.bf16.msra.mxu0 %v1828
    %2833 = vmatprep.subr.bf16.mxu0 %v1823
    %2834 = vmatpush1.bf16.msra.mxu0 %v1822
    %2835 = vmatprep.subr.bf16.mxu0 %v1817
    %2836 = vmatpush1.bf16.msra.mxu0 %v1816
    %2837 = vmatprep.subr.bf16.mxu0 %v1811
    %2838 = vmatpush1.bf16.msra.mxu0 %v1810
    %2839 = vmatprep.subr.bf16.mxu0 %v1805
    %2840 = vmatpush1.bf16.msra.mxu0 %v1804
    %2841 = vmatprep.subr.bf16.mxu0 %v1799
    %2842 = vmatpush1.bf16.msra.mxu0 %v1798
    %2843 = vmatprep.subr.bf16.mxu0 %v1793
    %2844 = vmatpush1.bf16.msra.mxu0 %v1792
    %2845 = vmatprep.subr.bf16.mxu0 %v1883
    %2846 = vmatpush2.bf16.msra.mxu0 %v1882
    %2847 = vmatprep.subr.bf16.mxu0 %v1877
    %2848 = vmatpush2.bf16.msra.mxu0 %v1876
    %2849 = vmatprep.subr.bf16.mxu0 %v1871
    %2850 = vmatpush2.bf16.msra.mxu0 %v1870
    %2851 = vmatprep.subr.bf16.mxu0 %v1865
    %2852 = vmatpush2.bf16.msra.mxu0 %v1864
    %2853 = vmatprep.subr.bf16.mxu0 %v1859
    %2854 = vmatpush2.bf16.msra.mxu0 %v1858
    %2855 = vmatprep.subr.bf16.mxu0 %v1853
    %2856 = vmatpush2.bf16.msra.mxu0 %v1852
    %2857 = vmatprep.subr.bf16.mxu0 %v1847
    %2858 = vmatpush2.bf16.msra.mxu0 %v1846
    %2859 = vmatprep.subr.bf16.mxu0 %v1841
    %2860 = vmatpush2.bf16.msra.mxu0 %v1840
    %2861 = vmatprep.mubr.bf16.mxu0 %v527
    %2862 = vmatmul.mubr.bf16.gmra.mxu0 %v526
    %v2863 = vpop.f32.mrf.mxu0
    %v2864 = vadd.f32 %v2823, %v2863
    %v2865 = vpop.f32.mrf.mxu0
    %v2866 = vadd.f32 %v2825, %v2865
    %v2867 = vpop.f32.mrf.mxu0
    %v2868 = vpop.f32.mrf.mxu0
    %2869 = vdwg.mxu0
    %2870 = vmatprep.subr.bf16.mxu0 %v1931
    %2871 = vmatpush1.bf16.msra.mxu0 %v1930
    %2872 = vmatprep.subr.bf16.mxu0 %v1925
    %2873 = vmatpush1.bf16.msra.mxu0 %v1924
    %2874 = vmatprep.subr.bf16.mxu0 %v1919
    %2875 = vmatpush1.bf16.msra.mxu0 %v1918
    %2876 = vmatprep.subr.bf16.mxu0 %v1913
    %2877 = vmatpush1.bf16.msra.mxu0 %v1912
    %2878 = vmatprep.subr.bf16.mxu0 %v1907
    %2879 = vmatpush1.bf16.msra.mxu0 %v1906
    %2880 = vmatprep.subr.bf16.mxu0 %v1901
    %2881 = vmatpush1.bf16.msra.mxu0 %v1900
    %2882 = vmatprep.subr.bf16.mxu0 %v1895
    %2883 = vmatpush1.bf16.msra.mxu0 %v1894
    %2884 = vmatprep.subr.bf16.mxu0 %v1889
    %2885 = vmatpush1.bf16.msra.mxu0 %v1888
    %2886 = vmatprep.subr.bf16.mxu0 %v1979
    %2887 = vmatpush2.bf16.msra.mxu0 %v1978
    %2888 = vmatprep.subr.bf16.mxu0 %v1973
    %2889 = vmatpush2.bf16.msra.mxu0 %v1972
    %2890 = vmatprep.subr.bf16.mxu0 %v1967
    %2891 = vmatpush2.bf16.msra.mxu0 %v1966
    %2892 = vmatprep.subr.bf16.mxu0 %v1961
    %2893 = vmatpush2.bf16.msra.mxu0 %v1960
    %2894 = vmatprep.subr.bf16.mxu0 %v1955
    %2895 = vmatpush2.bf16.msra.mxu0 %v1954
    %2896 = vmatprep.subr.bf16.mxu0 %v1949
    %2897 = vmatpush2.bf16.msra.mxu0 %v1948
    %2898 = vmatprep.subr.bf16.mxu0 %v1943
    %2899 = vmatpush2.bf16.msra.mxu0 %v1942
    %2900 = vmatprep.subr.bf16.mxu0 %v1937
    %2901 = vmatpush2.bf16.msra.mxu0 %v1936
    %2902 = vmatprep.mubr.bf16.mxu0 %v529
    %2903 = vmatmul.mubr.bf16.gmra.mxu0 %v528
    %v2904 = vpop.f32.mrf.mxu0
    %v2905 = vadd.f32 %v2864, %v2904
    %v2906 = vpop.f32.mrf.mxu0
    %v2907 = vadd.f32 %v2866, %v2906
    %v2908 = vpop.f32.mrf.mxu0
    %v2909 = vpop.f32.mrf.mxu0
    %2910 = vdwg.mxu0
    %2911 = vmatprep.subr.bf16.mxu0 %v2027
    %2912 = vmatpush1.bf16.msra.mxu0 %v2026
    %2913 = vmatprep.subr.bf16.mxu0 %v2021
    %2914 = vmatpush1.bf16.msra.mxu0 %v2020
    %2915 = vmatprep.subr.bf16.mxu0 %v2015
    %2916 = vmatpush1.bf16.msra.mxu0 %v2014
    %2917 = vmatprep.subr.bf16.mxu0 %v2009
    %2918 = vmatpush1.bf16.msra.mxu0 %v2008
    %2919 = vmatprep.subr.bf16.mxu0 %v2003
    %2920 = vmatpush1.bf16.msra.mxu0 %v2002
    %2921 = vmatprep.subr.bf16.mxu0 %v1997
    %2922 = vmatpush1.bf16.msra.mxu0 %v1996
    %2923 = vmatprep.subr.bf16.mxu0 %v1991
    %2924 = vmatpush1.bf16.msra.mxu0 %v1990
    %2925 = vmatprep.subr.bf16.mxu0 %v1985
    %2926 = vmatpush1.bf16.msra.mxu0 %v1984
    %2927 = vmatprep.subr.bf16.mxu0 %v2075
    %2928 = vmatpush2.bf16.msra.mxu0 %v2074
    %2929 = vmatprep.subr.bf16.mxu0 %v2069
    %2930 = vmatpush2.bf16.msra.mxu0 %v2068
    %2931 = vmatprep.subr.bf16.mxu0 %v2063
    %2932 = vmatpush2.bf16.msra.mxu0 %v2062
    %2933 = vmatprep.subr.bf16.mxu0 %v2057
    %2934 = vmatpush2.bf16.msra.mxu0 %v2056
    %2935 = vmatprep.subr.bf16.mxu0 %v2051
    %2936 = vmatpush2.bf16.msra.mxu0 %v2050
    %2937 = vmatprep.subr.bf16.mxu0 %v2045
    %2938 = vmatpush2.bf16.msra.mxu0 %v2044
    %2939 = vmatprep.subr.bf16.mxu0 %v2039
    %2940 = vmatpush2.bf16.msra.mxu0 %v2038
    %2941 = vmatprep.subr.bf16.mxu0 %v2033
    %2942 = vmatpush2.bf16.msra.mxu0 %v2032
    %2943 = vmatprep.mubr.bf16.mxu0 %v531
    %2944 = vmatmul.mubr.bf16.gmra.mxu0 %v530
    %v2945 = vpop.f32.mrf.mxu0
    %v2946 = vadd.f32 %v2905, %v2945
    %v2947 = vpop.f32.mrf.mxu0
    %v2948 = vadd.f32 %v2907, %v2947
    %v2949 = vpop.f32.mrf.mxu0
    %v2950 = vpop.f32.mrf.mxu0
    %2951 = vdwg.mxu0
    %v2952 = vadd.f32 %v118, %v2618
    %v2953 = vadd.f32 %v119, %v2620
    %v2954 = vadd.f32 %v120, %v2782
    %v2955 = vadd.f32 %v121, %v2784
    %v2956 = vadd.f32 %v122, %v2946
    %v2957 = vadd.f32 %v123, %v2948
    %2958 = vst [vmem:[#allocation2] sm:$0x3f] %v2952
    %2959 = vst [vmem:[#allocation2 + $0x8] sm:$0x3f] %v2953
    %2960 = vst [vmem:[#allocation2 + $0x10] sm:$0x3f] %v2954
    %2961 = vst [vmem:[#allocation2 + $0x18] sm:$0x3f] %v2955
    %2962 = vst [vmem:[#allocation2 + $0x20] sm:$0x3f] %v2956
    %2963 = vst [vmem:[#allocation2 + $0x28] sm:$0x3f] %v2957
    // Predicated region
    $region66: #{multi_image_forward.1} parent=1 // pred_check
      %p2964 = pneg %p108
    $region67: #{multi_image_forward.1} parent=1 // pred_check_branch
      %2966 = sbr.rel (%p2964) target = $region69
    $region68: #{multi_image_forward.1} parent=1 // pred_region
      %v2967 = vld [vmem:[#allocation2] sm:$0x3f]
      %v2968 = vld [vmem:[#allocation2 + $0x8] sm:$0x3f]
      %v2969 = vld [vmem:[#allocation2 + $0x10] sm:$0x3f]
      %v2970 = vld [vmem:[#allocation2 + $0x18] sm:$0x3f]
      %v2971 = vld [vmem:[#allocation2 + $0x20] sm:$0x3f]
      %v2972 = vld [vmem:[#allocation2 + $0x28] sm:$0x3f]
      %v2973 = vld [vmem:[#allocation6] sm:$0x3f]
      %v2975 = vlaneseq
      %v2976 = vshrl.u32 %v2975, 7
      %v2977 = vsub.s32 0, %v2976
      %v2978 = vrot.slane %v2973, %v2977
      %v2979 = vlaneseq
      %v2980 = vshrl.u32 %v2979, 7
      %v2981 = vsub.s32 1, %v2980
      %v2982 = vrot.slane %v2973, %v2981
      %v2983 = vlaneseq
      %v2984 = vshrl.u32 %v2983, 7
      %v2985 = vsub.s32 2, %v2984
      %v2986 = vrot.slane %v2973, %v2985
      %v2987 = vlaneseq
      %v2988 = vshrl.u32 %v2987, 7
      %v2989 = vsub.s32 3, %v2988
      %v2990 = vrot.slane %v2973, %v2989
      %v2991 = vlaneseq
      %v2992 = vshrl.u32 %v2991, 7
      %v2993 = vsub.s32 4, %v2992
      %v2994 = vrot.slane %v2973, %v2993
      %v2995 = vlaneseq
      %v2996 = vshrl.u32 %v2995, 7
      %v2997 = vsub.s32 5, %v2996
      %v2998 = vrot.slane %v2973, %v2997
      %v3005 = vadd.f32 %v2967, %v2978
      %v3006 = vadd.f32 %v2968, %v2982
      %v3007 = vadd.f32 %v2969, %v2986
      %v3008 = vadd.f32 %v2970, %v2990
      %v3009 = vadd.f32 %v2971, %v2994
      %v3010 = vadd.f32 %v2972, %v2998
      %v3011 = vmax.f32 %v3005, 0.0
      %v3012 = vmax.f32 %v3006, 0.0
      %v3013 = vmax.f32 %v3007, 0.0
      %v3014 = vmax.f32 %v3008, 0.0
      %v3015 = vmax.f32 %v3009, 0.0
      %v3016 = vmax.f32 %v3010, 0.0
      %v3017 = vpack.c.bf16 %v3011, %v3011
      %v3018 = vpack.c.bf16 %v3012, %v3012
      %v3019 = vpack.c.bf16 %v3013, %v3013
      %v3020 = vpack.c.bf16 %v3014, %v3014
      %v3021 = vpack.c.bf16 %v3015, %v3015
      %v3022 = vpack.c.bf16 %v3016, %v3016
      %v3023 = vld [vmem:[#allocation8] sm:$0xf]
      %v3024 = vld [vmem:[#allocation8 + $0x4] sm:$0xf]
      %v3025 = vld [vmem:[#allocation8 + $0x8] sm:$0xf]
      %v3026 = vld [vmem:[#allocation8 + $0xc] sm:$0xf]
      %v3027 = vld [vmem:[#allocation8 + $0x10] sm:$0xf]
      %v3028 = vld [vmem:[#allocation8 + $0x14] sm:$0xf]
      %v3029 = vld [vmem:[#allocation8 + $0x18] sm:$0xf]
      %v3030 = vld [vmem:[#allocation8 + $0x1c] sm:$0xf]
      %v3031 = vld [vmem:[#allocation8 + $0x20] sm:$0xf]
      %v3032 = vld [vmem:[#allocation8 + $0x24] sm:$0xf]
      %v3033 = vld [vmem:[#allocation8 + $0x28] sm:$0xf]
      %v3034 = vld [vmem:[#allocation8 + $0x2c] sm:$0xf]
      %v3035 = vld [vmem:[#allocation8 + $0x30] sm:$0xf]
      %v3036 = vld [vmem:[#allocation8 + $0x34] sm:$0xf]
      %v3037 = vld [vmem:[#allocation8 + $0x38] sm:$0xf]
      %v3038 = vld [vmem:[#allocation8 + $0x3c] sm:$0xf]
      %v3039 = vld [vmem:[#allocation8 + $0x40] sm:$0xf]
      %v3040 = vld [vmem:[#allocation8 + $0x44] sm:$0xf]
      %v3041 = vld [vmem:[#allocation8 + $0x48] sm:$0xf]
      %v3042 = vld [vmem:[#allocation8 + $0x4c] sm:$0xf]
      %v3043 = vld [vmem:[#allocation8 + $0x50] sm:$0xf]
      %v3044 = vld [vmem:[#allocation8 + $0x54] sm:$0xf]
      %v3045 = vld [vmem:[#allocation8 + $0x58] sm:$0xf]
      %v3046 = vld [vmem:[#allocation8 + $0x5c] sm:$0xf]
      %v3047 = vld [vmem:[#allocation8 + $0x60] sm:$0xf]
      %v3048 = vld [vmem:[#allocation8 + $0x64] sm:$0xf]
      %v3049 = vld [vmem:[#allocation8 + $0x68] sm:$0xf]
      %v3050 = vld [vmem:[#allocation8 + $0x6c] sm:$0xf]
      %v3051 = vld [vmem:[#allocation8 + $0x70] sm:$0xf]
      %v3052 = vld [vmem:[#allocation8 + $0x74] sm:$0xf]
      %v3053 = vld [vmem:[#allocation8 + $0x78] sm:$0xf]
      %v3054 = vld [vmem:[#allocation8 + $0x7c] sm:$0xf]
      %v3055 = vld [vmem:[#allocation8 + $0x80] sm:$0xf]
      %v3056 = vld [vmem:[#allocation8 + $0x84] sm:$0xf]
      %v3057 = vld [vmem:[#allocation8 + $0x88] sm:$0xf]
      %v3058 = vld [vmem:[#allocation8 + $0x8c] sm:$0xf]
      %v3059 = vld [vmem:[#allocation8 + $0x90] sm:$0xf]
      %v3060 = vld [vmem:[#allocation8 + $0x94] sm:$0xf]
      %v3061 = vld [vmem:[#allocation8 + $0x98] sm:$0xf]
      %v3062 = vld [vmem:[#allocation8 + $0x9c] sm:$0xf]
      %v3063 = vld [vmem:[#allocation8 + $0xa0] sm:$0xf]
      %v3064 = vld [vmem:[#allocation8 + $0xa4] sm:$0xf]
      %v3065 = vld [vmem:[#allocation8 + $0xa8] sm:$0xf]
      %v3066 = vld [vmem:[#allocation8 + $0xac] sm:$0xf]
      %v3067 = vld [vmem:[#allocation8 + $0xb0] sm:$0xf]
      %v3068 = vld [vmem:[#allocation8 + $0xb4] sm:$0xf]
      %v3069 = vld [vmem:[#allocation8 + $0xb8] sm:$0xf]
      %v3070 = vld [vmem:[#allocation8 + $0xbc] sm:$0xf]
      %v3071 = vld [vmem:[#allocation8 + $0xc0] sm:$0xf]
      %v3072 = vld [vmem:[#allocation8 + $0xc4] sm:$0xf]
      %v3073 = vld [vmem:[#allocation8 + $0xc8] sm:$0xf]
      %v3074 = vld [vmem:[#allocation8 + $0xcc] sm:$0xf]
      %v3075 = vld [vmem:[#allocation8 + $0xd0] sm:$0xf]
      %v3076 = vld [vmem:[#allocation8 + $0xd4] sm:$0xf]
      %v3077 = vld [vmem:[#allocation8 + $0xd8] sm:$0xf]
      %v3078 = vld [vmem:[#allocation8 + $0xdc] sm:$0xf]
      %v3079 = vld [vmem:[#allocation8 + $0xe0] sm:$0xf]
      %v3080 = vld [vmem:[#allocation8 + $0xe4] sm:$0xf]
      %v3081 = vld [vmem:[#allocation8 + $0xe8] sm:$0xf]
      %v3082 = vld [vmem:[#allocation8 + $0xec] sm:$0xf]
      %v3083 = vld [vmem:[#allocation8 + $0xf0] sm:$0xf]
      %v3084 = vld [vmem:[#allocation8 + $0xf4] sm:$0xf]
      %v3085 = vld [vmem:[#allocation8 + $0xf8] sm:$0xf]
      %v3086 = vld [vmem:[#allocation8 + $0xfc] sm:$0xf]
      %v3087 = vld [vmem:[#allocation8 + $0x100] sm:$0xf]
      %v3088 = vld [vmem:[#allocation8 + $0x104] sm:$0xf]
      %v3089 = vld [vmem:[#allocation8 + $0x108] sm:$0xf]
      %v3090 = vld [vmem:[#allocation8 + $0x10c] sm:$0xf]
      %v3091 = vld [vmem:[#allocation8 + $0x110] sm:$0xf]
      %v3092 = vld [vmem:[#allocation8 + $0x114] sm:$0xf]
      %v3093 = vld [vmem:[#allocation8 + $0x118] sm:$0xf]
      %v3094 = vld [vmem:[#allocation8 + $0x11c] sm:$0xf]
      %v3095 = vld [vmem:[#allocation8 + $0x120] sm:$0xf]
      %v3096 = vld [vmem:[#allocation8 + $0x124] sm:$0xf]
      %v3097 = vld [vmem:[#allocation8 + $0x128] sm:$0xf]
      %v3098 = vld [vmem:[#allocation8 + $0x12c] sm:$0xf]
      %v3099 = vld [vmem:[#allocation8 + $0x130] sm:$0xf]
      %v3100 = vld [vmem:[#allocation8 + $0x134] sm:$0xf]
      %v3101 = vld [vmem:[#allocation8 + $0x138] sm:$0xf]
      %v3102 = vld [vmem:[#allocation8 + $0x13c] sm:$0xf]
      %v3103 = vld [vmem:[#allocation8 + $0x140] sm:$0xf]
      %v3104 = vld [vmem:[#allocation8 + $0x144] sm:$0xf]
      %v3105 = vld [vmem:[#allocation8 + $0x148] sm:$0xf]
      %v3106 = vld [vmem:[#allocation8 + $0x14c] sm:$0xf]
      %v3107 = vld [vmem:[#allocation8 + $0x150] sm:$0xf]
      %v3108 = vld [vmem:[#allocation8 + $0x154] sm:$0xf]
      %v3109 = vld [vmem:[#allocation8 + $0x158] sm:$0xf]
      %v3110 = vld [vmem:[#allocation8 + $0x15c] sm:$0xf]
      %v3111 = vld [vmem:[#allocation8 + $0x160] sm:$0xf]
      %v3112 = vld [vmem:[#allocation8 + $0x164] sm:$0xf]
      %v3113 = vld [vmem:[#allocation8 + $0x168] sm:$0xf]
      %v3114 = vld [vmem:[#allocation8 + $0x16c] sm:$0xf]
      %v3115 = vld [vmem:[#allocation8 + $0x170] sm:$0xf]
      %v3116 = vld [vmem:[#allocation8 + $0x174] sm:$0xf]
      %v3117 = vld [vmem:[#allocation8 + $0x178] sm:$0xf]
      %v3118 = vld [vmem:[#allocation8 + $0x17c] sm:$0xf]
      %v3119 = vld [vmem:[#allocation9] sm:$0x1]
      %v3121 = vlaneseq
      %v3122 = vshrl.u32 %v3121, 7
      %v3123 = vsub.s32 0, %v3122
      %v3124 = vrot.slane %v3119, %v3123
      %v3222 = vunpack.c.l.b16 %v3023
      %v3223 = vunpack.c.l.b16 %v3024
      %v3224 = vunpack.c.l.b16 %v3025
      %v3225 = vunpack.c.l.b16 %v3026
      %v3226 = vunpack.c.l.b16 %v3027
      %v3227 = vunpack.c.l.b16 %v3028
      %v3228 = vunpack.c.l.b16 %v3029
      %v3229 = vunpack.c.l.b16 %v3030
      %v3230 = vunpack.c.l.b16 %v3031
      %v3231 = vunpack.c.l.b16 %v3032
      %v3232 = vunpack.c.l.b16 %v3033
      %v3233 = vunpack.c.l.b16 %v3034
      %v3234 = vunpack.c.l.b16 %v3035
      %v3235 = vunpack.c.l.b16 %v3036
      %v3236 = vunpack.c.l.b16 %v3037
      %v3237 = vunpack.c.l.b16 %v3038
      %v3238 = vunpack.c.l.b16 %v3039
      %v3239 = vunpack.c.l.b16 %v3040
      %v3240 = vunpack.c.l.b16 %v3041
      %v3241 = vunpack.c.l.b16 %v3042
      %v3242 = vunpack.c.l.b16 %v3043
      %v3243 = vunpack.c.l.b16 %v3044
      %v3244 = vunpack.c.l.b16 %v3045
      %v3245 = vunpack.c.l.b16 %v3046
      %v3246 = vunpack.c.l.b16 %v3047
      %v3247 = vunpack.c.l.b16 %v3048
      %v3248 = vunpack.c.l.b16 %v3049
      %v3249 = vunpack.c.l.b16 %v3050
      %v3250 = vunpack.c.l.b16 %v3051
      %v3251 = vunpack.c.l.b16 %v3052
      %v3252 = vunpack.c.l.b16 %v3053
      %v3253 = vunpack.c.l.b16 %v3054
      %v3254 = vunpack.c.l.b16 %v3055
      %v3255 = vunpack.c.l.b16 %v3056
      %v3256 = vunpack.c.l.b16 %v3057
      %v3257 = vunpack.c.l.b16 %v3058
      %v3258 = vunpack.c.l.b16 %v3059
      %v3259 = vunpack.c.l.b16 %v3060
      %v3260 = vunpack.c.l.b16 %v3061
      %v3261 = vunpack.c.l.b16 %v3062
      %v3262 = vunpack.c.l.b16 %v3063
      %v3263 = vunpack.c.l.b16 %v3064
      %v3264 = vunpack.c.l.b16 %v3065
      %v3265 = vunpack.c.l.b16 %v3066
      %v3266 = vunpack.c.l.b16 %v3067
      %v3267 = vunpack.c.l.b16 %v3068
      %v3268 = vunpack.c.l.b16 %v3069
      %v3269 = vunpack.c.l.b16 %v3070
      %v3270 = vunpack.c.l.b16 %v3071
      %v3271 = vunpack.c.l.b16 %v3072
      %v3272 = vunpack.c.l.b16 %v3073
      %v3273 = vunpack.c.l.b16 %v3074
      %v3274 = vunpack.c.l.b16 %v3075
      %v3275 = vunpack.c.l.b16 %v3076
      %v3276 = vunpack.c.l.b16 %v3077
      %v3277 = vunpack.c.l.b16 %v3078
      %v3278 = vunpack.c.l.b16 %v3079
      %v3279 = vunpack.c.l.b16 %v3080
      %v3280 = vunpack.c.l.b16 %v3081
      %v3281 = vunpack.c.l.b16 %v3082
      %v3282 = vunpack.c.l.b16 %v3083
      %v3283 = vunpack.c.l.b16 %v3084
      %v3284 = vunpack.c.l.b16 %v3085
      %v3285 = vunpack.c.l.b16 %v3086
      %v3286 = vunpack.c.l.b16 %v3087
      %v3287 = vunpack.c.l.b16 %v3088
      %v3288 = vunpack.c.l.b16 %v3089
      %v3289 = vunpack.c.l.b16 %v3090
      %v3290 = vunpack.c.l.b16 %v3091
      %v3291 = vunpack.c.l.b16 %v3092
      %v3292 = vunpack.c.l.b16 %v3093
      %v3293 = vunpack.c.l.b16 %v3094
      %v3294 = vunpack.c.l.b16 %v3095
      %v3295 = vunpack.c.l.b16 %v3096
      %v3296 = vunpack.c.l.b16 %v3097
      %v3297 = vunpack.c.l.b16 %v3098
      %v3298 = vunpack.c.l.b16 %v3099
      %v3299 = vunpack.c.l.b16 %v3100
      %v3300 = vunpack.c.l.b16 %v3101
      %v3301 = vunpack.c.l.b16 %v3102
      %v3302 = vunpack.c.l.b16 %v3103
      %v3303 = vunpack.c.l.b16 %v3104
      %v3304 = vunpack.c.l.b16 %v3105
      %v3305 = vunpack.c.l.b16 %v3106
      %v3306 = vunpack.c.l.b16 %v3107
      %v3307 = vunpack.c.l.b16 %v3108
      %v3308 = vunpack.c.l.b16 %v3109
      %v3309 = vunpack.c.l.b16 %v3110
      %v3310 = vunpack.c.l.b16 %v3111
      %v3311 = vunpack.c.l.b16 %v3112
      %v3312 = vunpack.c.l.b16 %v3113
      %v3313 = vunpack.c.l.b16 %v3114
      %v3314 = vunpack.c.l.b16 %v3115
      %v3315 = vunpack.c.l.b16 %v3116
      %v3316 = vunpack.c.l.b16 %v3117
      %v3317 = vunpack.c.l.b16 %v3118
      %v3318 = vpack.c.b16 %v3223, %v3222
      %v3319 = vpack.c.b16 %v3225, %v3224
      %v3320 = vpack.c.b16 %v3227, %v3226
      %v3321 = vpack.c.b16 %v3229, %v3228
      %v3322 = vpack.c.b16 %v3231, %v3230
      %v3323 = vpack.c.b16 %v3233, %v3232
      %v3324 = vpack.c.b16 %v3235, %v3234
      %v3325 = vpack.c.b16 %v3237, %v3236
      %v3326 = vpack.c.b16 %v3239, %v3238
      %v3327 = vpack.c.b16 %v3241, %v3240
      %v3328 = vpack.c.b16 %v3243, %v3242
      %v3329 = vpack.c.b16 %v3245, %v3244
      %v3330 = vpack.c.b16 %v3247, %v3246
      %v3331 = vpack.c.b16 %v3249, %v3248
      %v3332 = vpack.c.b16 %v3251, %v3250
      %v3333 = vpack.c.b16 %v3253, %v3252
      %v3334 = vpack.c.b16 %v3255, %v3254
      %v3335 = vpack.c.b16 %v3257, %v3256
      %v3336 = vpack.c.b16 %v3259, %v3258
      %v3337 = vpack.c.b16 %v3261, %v3260
      %v3338 = vpack.c.b16 %v3263, %v3262
      %v3339 = vpack.c.b16 %v3265, %v3264
      %v3340 = vpack.c.b16 %v3267, %v3266
      %v3341 = vpack.c.b16 %v3269, %v3268
      %v3342 = vpack.c.b16 %v3271, %v3270
      %v3343 = vpack.c.b16 %v3273, %v3272
      %v3344 = vpack.c.b16 %v3275, %v3274
      %v3345 = vpack.c.b16 %v3277, %v3276
      %v3346 = vpack.c.b16 %v3279, %v3278
      %v3347 = vpack.c.b16 %v3281, %v3280
      %v3348 = vpack.c.b16 %v3283, %v3282
      %v3349 = vpack.c.b16 %v3285, %v3284
      %v3350 = vpack.c.b16 %v3287, %v3286
      %v3351 = vpack.c.b16 %v3289, %v3288
      %v3352 = vpack.c.b16 %v3291, %v3290
      %v3353 = vpack.c.b16 %v3293, %v3292
      %v3354 = vpack.c.b16 %v3295, %v3294
      %v3355 = vpack.c.b16 %v3297, %v3296
      %v3356 = vpack.c.b16 %v3299, %v3298
      %v3357 = vpack.c.b16 %v3301, %v3300
      %v3358 = vpack.c.b16 %v3303, %v3302
      %v3359 = vpack.c.b16 %v3305, %v3304
      %v3360 = vpack.c.b16 %v3307, %v3306
      %v3361 = vpack.c.b16 %v3309, %v3308
      %v3362 = vpack.c.b16 %v3311, %v3310
      %v3363 = vpack.c.b16 %v3313, %v3312
      %v3364 = vpack.c.b16 %v3315, %v3314
      %v3365 = vpack.c.b16 %v3317, %v3316
      %3414 = vmatprep.subr.bf16.mxu0 0
      %3415 = vmatpush1.bf16.msra.mxu0 %v3325
      %3416 = vmatprep.subr.bf16.mxu0 0
      %3417 = vmatpush1.bf16.msra.mxu0 %v3324
      %3418 = vmatprep.subr.bf16.mxu0 0
      %3419 = vmatpush1.bf16.msra.mxu0 %v3323
      %3420 = vmatprep.subr.bf16.mxu0 0
      %3421 = vmatpush1.bf16.msra.mxu0 %v3322
      %3422 = vmatprep.subr.bf16.mxu0 0
      %3423 = vmatpush1.bf16.msra.mxu0 %v3321
      %3424 = vmatprep.subr.bf16.mxu0 0
      %3425 = vmatpush1.bf16.msra.mxu0 %v3320
      %3426 = vmatprep.subr.bf16.mxu0 0
      %3427 = vmatpush1.bf16.msra.mxu0 %v3319
      %3428 = vmatprep.subr.bf16.mxu0 0
      %3429 = vmatpush1.bf16.msra.mxu0 %v3318
      %3430 = vmatprep.subr.bf16.mxu0 0
      %3431 = vmatpush2.bf16.msra.mxu0 %v3333
      %3432 = vmatprep.subr.bf16.mxu0 0
      %3433 = vmatpush2.bf16.msra.mxu0 %v3332
      %3434 = vmatprep.subr.bf16.mxu0 0
      %3435 = vmatpush2.bf16.msra.mxu0 %v3331
      %3436 = vmatprep.subr.bf16.mxu0 0
      %3437 = vmatpush2.bf16.msra.mxu0 %v3330
      %3438 = vmatprep.subr.bf16.mxu0 0
      %3439 = vmatpush2.bf16.msra.mxu0 %v3329
      %3440 = vmatprep.subr.bf16.mxu0 0
      %3441 = vmatpush2.bf16.msra.mxu0 %v3328
      %3442 = vmatprep.subr.bf16.mxu0 0
      %3443 = vmatpush2.bf16.msra.mxu0 %v3327
      %3444 = vmatprep.subr.bf16.mxu0 0
      %3445 = vmatpush2.bf16.msra.mxu0 %v3326
      %3446 = vmatprep.mubr.bf16.mxu0 %v3018
      %3447 = vmatmul.mubr.bf16.gmra.mxu0 %v3017
      %v3448 = vpop.f32.mrf.mxu0
      %v3449 = vadd.f32 %v3124, %v3448
      %v3450 = vpop.f32.mrf.mxu0
      %v3451 = vpop.f32.mrf.mxu0
      %v3452 = vpop.f32.mrf.mxu0
      %3453 = vdwg.mxu0
      %3454 = vmatprep.subr.bf16.mxu0 0
      %3455 = vmatpush1.bf16.msra.mxu0 %v3341
      %3456 = vmatprep.subr.bf16.mxu0 0
      %3457 = vmatpush1.bf16.msra.mxu0 %v3340
      %3458 = vmatprep.subr.bf16.mxu0 0
      %3459 = vmatpush1.bf16.msra.mxu0 %v3339
      %3460 = vmatprep.subr.bf16.mxu0 0
      %3461 = vmatpush1.bf16.msra.mxu0 %v3338
      %3462 = vmatprep.subr.bf16.mxu0 0
      %3463 = vmatpush1.bf16.msra.mxu0 %v3337
      %3464 = vmatprep.subr.bf16.mxu0 0
      %3465 = vmatpush1.bf16.msra.mxu0 %v3336
      %3466 = vmatprep.subr.bf16.mxu0 0
      %3467 = vmatpush1.bf16.msra.mxu0 %v3335
      %3468 = vmatprep.subr.bf16.mxu0 0
      %3469 = vmatpush1.bf16.msra.mxu0 %v3334
      %3470 = vmatprep.subr.bf16.mxu0 0
      %3471 = vmatpush2.bf16.msra.mxu0 %v3349
      %3472 = vmatprep.subr.bf16.mxu0 0
      %3473 = vmatpush2.bf16.msra.mxu0 %v3348
      %3474 = vmatprep.subr.bf16.mxu0 0
      %3475 = vmatpush2.bf16.msra.mxu0 %v3347
      %3476 = vmatprep.subr.bf16.mxu0 0
      %3477 = vmatpush2.bf16.msra.mxu0 %v3346
      %3478 = vmatprep.subr.bf16.mxu0 0
      %3479 = vmatpush2.bf16.msra.mxu0 %v3345
      %3480 = vmatprep.subr.bf16.mxu0 0
      %3481 = vmatpush2.bf16.msra.mxu0 %v3344
      %3482 = vmatprep.subr.bf16.mxu0 0
      %3483 = vmatpush2.bf16.msra.mxu0 %v3343
      %3484 = vmatprep.subr.bf16.mxu0 0
      %3485 = vmatpush2.bf16.msra.mxu0 %v3342
      %3486 = vmatprep.mubr.bf16.mxu0 %v3020
      %3487 = vmatmul.mubr.bf16.gmra.mxu0 %v3019
      %v3488 = vpop.f32.mrf.mxu0
      %v3489 = vadd.f32 %v3449, %v3488
      %v3490 = vpop.f32.mrf.mxu0
      %v3491 = vpop.f32.mrf.mxu0
      %v3492 = vpop.f32.mrf.mxu0
      %3493 = vdwg.mxu0
      %3494 = vmatprep.subr.bf16.mxu0 0
      %3495 = vmatpush1.bf16.msra.mxu0 %v3357
      %3496 = vmatprep.subr.bf16.mxu0 0
      %3497 = vmatpush1.bf16.msra.mxu0 %v3356
      %3498 = vmatprep.subr.bf16.mxu0 0
      %3499 = vmatpush1.bf16.msra.mxu0 %v3355
      %3500 = vmatprep.subr.bf16.mxu0 0
      %3501 = vmatpush1.bf16.msra.mxu0 %v3354
      %3502 = vmatprep.subr.bf16.mxu0 0
      %3503 = vmatpush1.bf16.msra.mxu0 %v3353
      %3504 = vmatprep.subr.bf16.mxu0 0
      %3505 = vmatpush1.bf16.msra.mxu0 %v3352
      %3506 = vmatprep.subr.bf16.mxu0 0
      %3507 = vmatpush1.bf16.msra.mxu0 %v3351
      %3508 = vmatprep.subr.bf16.mxu0 0
      %3509 = vmatpush1.bf16.msra.mxu0 %v3350
      %3510 = vmatprep.subr.bf16.mxu0 0
      %3511 = vmatpush2.bf16.msra.mxu0 %v3365
      %3512 = vmatprep.subr.bf16.mxu0 0
      %3513 = vmatpush2.bf16.msra.mxu0 %v3364
      %3514 = vmatprep.subr.bf16.mxu0 0
      %3515 = vmatpush2.bf16.msra.mxu0 %v3363
      %3516 = vmatprep.subr.bf16.mxu0 0
      %3517 = vmatpush2.bf16.msra.mxu0 %v3362
      %3518 = vmatprep.subr.bf16.mxu0 0
      %3519 = vmatpush2.bf16.msra.mxu0 %v3361
      %3520 = vmatprep.subr.bf16.mxu0 0
      %3521 = vmatpush2.bf16.msra.mxu0 %v3360
      %3522 = vmatprep.subr.bf16.mxu0 0
      %3523 = vmatpush2.bf16.msra.mxu0 %v3359
      %3524 = vmatprep.subr.bf16.mxu0 0
      %3525 = vmatpush2.bf16.msra.mxu0 %v3358
      %3526 = vmatprep.mubr.bf16.mxu0 %v3022
      %3527 = vmatmul.mubr.bf16.gmra.mxu0 %v3021
      %v3528 = vpop.f32.mrf.mxu0
      %v3529 = vadd.f32 %v3489, %v3528
      %v3530 = vpop.f32.mrf.mxu0
      %v3531 = vpop.f32.mrf.mxu0
      %v3532 = vpop.f32.mrf.mxu0
      %3533 = vdwg.mxu0
      %v3534 = vlaneseq
      %v3535 = vand.u32 %v3534, 127
      %v3536 = vlaneseq
      %v3537 = vshrl.u32 %v3536, 7
      %v3538 = vmul.u32 %v3537, 3
      %vm3539 = vcmp.eq.s32.totalorder %v3535, %v3538
      %v3540 = vsel %vm3539, 1, 0
      %v3541 = vcvt.s32.f32 %v3540
      %vm3542 = vcmask 48128
      %v3544 = vsel %vm3542, %v3541, 0
      %vm3546 = vcmask 1045504
      %v3548 = vsel %vm3546, %v3529, 0
      %3550 = vmatprep.subr.mxu0 0.0
      %3551 = vmatpush1.msra.mxu0 0.0
      %3552 = vmatprep.subr.mxu0 0.0
      %3553 = vmatpush1.msra.mxu0 0.0
      %3554 = vmatprep.subr.mxu0 0.0
      %3555 = vmatpush1.msra.mxu0 0.0
      %3556 = vmatprep.subr.mxu0 0.0
      %3557 = vmatpush1.msra.mxu0 0.0
      %3558 = vmatprep.subr.mxu0 0.0
      %3559 = vmatpush1.msra.mxu0 0.0
      %3560 = vmatprep.subr.mxu0 0.0
      %3561 = vmatpush1.msra.mxu0 0.0
      %3562 = vmatprep.subr.mxu0 0.0
      %3563 = vmatpush1.msra.mxu0 0.0
      %3564 = vmatprep.subr.mxu0 0.0
      %3565 = vmatpush1.msra.mxu0 0.0
      %3566 = vmatprep.subr.mxu0 0.0
      %3567 = vmatpush1.msra.mxu0 0.0
      %3568 = vmatprep.subr.mxu0 0.0
      %3569 = vmatpush1.msra.mxu0 0.0
      %3570 = vmatprep.subr.mxu0 0.0
      %3571 = vmatpush1.msra.mxu0 0.0
      %3572 = vmatprep.subr.mxu0 0.0
      %3573 = vmatpush1.msra.mxu0 0.0
      %3574 = vmatprep.subr.mxu0 0.0
      %3575 = vmatpush1.msra.mxu0 0.0
      %3576 = vmatprep.subr.mxu0 0.0
      %3577 = vmatpush1.msra.mxu0 0.0
      %3578 = vmatprep.subr.mxu0 0.0
      %3579 = vmatpush1.msra.mxu0 0.0
      %3580 = vmatprep.subr.mxu0 0.0
      %3581 = vmatpush1.msra.mxu0 %v3548
      %3582 = vmatprep.subr.mxu0 0.0
      %3583 = vmatpush2.msra.mxu0 0.0
      %3584 = vmatprep.subr.mxu0 0.0
      %3585 = vmatpush2.msra.mxu0 0.0
      %3586 = vmatprep.subr.mxu0 0.0
      %3587 = vmatpush2.msra.mxu0 0.0
      %3588 = vmatprep.subr.mxu0 0.0
      %3589 = vmatpush2.msra.mxu0 0.0
      %3590 = vmatprep.subr.mxu0 0.0
      %3591 = vmatpush2.msra.mxu0 0.0
      %3592 = vmatprep.subr.mxu0 0.0
      %3593 = vmatpush2.msra.mxu0 0.0
      %3594 = vmatprep.subr.mxu0 0.0
      %3595 = vmatpush2.msra.mxu0 0.0
      %3596 = vmatprep.subr.mxu0 0.0
      %3597 = vmatpush2.msra.mxu0 0.0
      %3598 = vmatprep.subr.mxu0 0.0
      %3599 = vmatpush2.msra.mxu0 0.0
      %3600 = vmatprep.subr.mxu0 0.0
      %3601 = vmatpush2.msra.mxu0 0.0
      %3602 = vmatprep.subr.mxu0 0.0
      %3603 = vmatpush2.msra.mxu0 0.0
      %3604 = vmatprep.subr.mxu0 0.0
      %3605 = vmatpush2.msra.mxu0 0.0
      %3606 = vmatprep.subr.mxu0 0.0
      %3607 = vmatpush2.msra.mxu0 0.0
      %3608 = vmatprep.subr.mxu0 0.0
      %3609 = vmatpush2.msra.mxu0 0.0
      %3610 = vmatprep.subr.mxu0 0.0
      %3611 = vmatpush2.msra.mxu0 0.0
      %3612 = vmatprep.subr.mxu0 0.0
      %3613 = vmatpush2.msra.mxu0 0.0
      %3614 = vmatprep.mubr.f32.mxu0 0.0
      %3615 = vmatmul.mubr.f32.gmra.mxu0 %v3544
      %v3616 = vpop.f32.mrf.mxu0
      %v3617 = vadd.f32 0.0, %v3616
      %v3618 = vpop.f32.mrf.mxu0
      %3619 = vdwg.mxu0
      %v3620 = vld [vmem:[%s5] sm:$0xff]
      %v3621 = vld [vmem:[%s5 + $0x8] sm:$0xff]
      %v3622 = vld [vmem:[%s5 + $0x10] sm:$0xff]
      %v3623 = vld [vmem:[%s5 + $0x18] sm:$0xff]
      %v3624 = vld [vmem:[%s5 + $0x20] sm:$0xff]
      %v3625 = vld [vmem:[%s5 + $0x28] sm:$0xff]
      %v3626 = vld [vmem:[%s5 + $0x30] sm:$0xff]
      %v3627 = vld [vmem:[%s5 + $0x38] sm:$0xff]
      %v3628 = vld [vmem:[%s5 + $0x40] sm:$0xff]
      %v3629 = vld [vmem:[%s5 + $0x48] sm:$0xff]
      %v3630 = vld [vmem:[%s5 + $0x50] sm:$0xff]
      %v3631 = vld [vmem:[%s5 + $0x58] sm:$0xff]
      %v3632 = vld [vmem:[%s5 + $0x60] sm:$0xff]
      %v3633 = vld [vmem:[%s5 + $0x68] sm:$0xff]
      %v3634 = vld [vmem:[%s5 + $0x70] sm:$0xff]
      %v3635 = vld [vmem:[%s5 + $0x78] sm:$0xff]
      %v3636 = vadd.s32 %v3538, 1
      %vm3637 = vcmp.eq.s32.totalorder %v3535, %v3636
      %v3638 = vsel %vm3637, 1, 0
      %v3639 = vcvt.s32.f32 %v3638
      %v3641 = vsel %vm3542, %v3639, 0
      %3643 = vmatprep.subr.mxu0 0.0
      %3644 = vmatpush1.msra.mxu0 0.0
      %3645 = vmatprep.subr.mxu0 0.0
      %3646 = vmatpush1.msra.mxu0 0.0
      %3647 = vmatprep.subr.mxu0 0.0
      %3648 = vmatpush1.msra.mxu0 0.0
      %3649 = vmatprep.subr.mxu0 0.0
      %3650 = vmatpush1.msra.mxu0 0.0
      %3651 = vmatprep.subr.mxu0 0.0
      %3652 = vmatpush1.msra.mxu0 0.0
      %3653 = vmatprep.subr.mxu0 0.0
      %3654 = vmatpush1.msra.mxu0 0.0
      %3655 = vmatprep.subr.mxu0 0.0
      %3656 = vmatpush1.msra.mxu0 0.0
      %3657 = vmatprep.subr.mxu0 0.0
      %3658 = vmatpush1.msra.mxu0 0.0
      %3659 = vmatprep.subr.mxu0 0.0
      %3660 = vmatpush1.msra.mxu0 0.0
      %3661 = vmatprep.subr.mxu0 0.0
      %3662 = vmatpush1.msra.mxu0 0.0
      %3663 = vmatprep.subr.mxu0 0.0
      %3664 = vmatpush1.msra.mxu0 0.0
      %3665 = vmatprep.subr.mxu0 0.0
      %3666 = vmatpush1.msra.mxu0 0.0
      %3667 = vmatprep.subr.mxu0 0.0
      %3668 = vmatpush1.msra.mxu0 0.0
      %3669 = vmatprep.subr.mxu0 0.0
      %3670 = vmatpush1.msra.mxu0 0.0
      %3671 = vmatprep.subr.mxu0 0.0
      %3672 = vmatpush1.msra.mxu0 0.0
      %3673 = vmatprep.subr.mxu0 0.0
      %3674 = vmatpush1.msra.mxu0 %v3548
      %3675 = vmatprep.subr.mxu0 0.0
      %3676 = vmatpush2.msra.mxu0 0.0
      %3677 = vmatprep.subr.mxu0 0.0
      %3678 = vmatpush2.msra.mxu0 0.0
      %3679 = vmatprep.subr.mxu0 0.0
      %3680 = vmatpush2.msra.mxu0 0.0
      %3681 = vmatprep.subr.mxu0 0.0
      %3682 = vmatpush2.msra.mxu0 0.0
      %3683 = vmatprep.subr.mxu0 0.0
      %3684 = vmatpush2.msra.mxu0 0.0
      %3685 = vmatprep.subr.mxu0 0.0
      %3686 = vmatpush2.msra.mxu0 0.0
      %3687 = vmatprep.subr.mxu0 0.0
      %3688 = vmatpush2.msra.mxu0 0.0
      %3689 = vmatprep.subr.mxu0 0.0
      %3690 = vmatpush2.msra.mxu0 0.0
      %3691 = vmatprep.subr.mxu0 0.0
      %3692 = vmatpush2.msra.mxu0 0.0
      %3693 = vmatprep.subr.mxu0 0.0
      %3694 = vmatpush2.msra.mxu0 0.0
      %3695 = vmatprep.subr.mxu0 0.0
      %3696 = vmatpush2.msra.mxu0 0.0
      %3697 = vmatprep.subr.mxu0 0.0
      %3698 = vmatpush2.msra.mxu0 0.0
      %3699 = vmatprep.subr.mxu0 0.0
      %3700 = vmatpush2.msra.mxu0 0.0
      %3701 = vmatprep.subr.mxu0 0.0
      %3702 = vmatpush2.msra.mxu0 0.0
      %3703 = vmatprep.subr.mxu0 0.0
      %3704 = vmatpush2.msra.mxu0 0.0
      %3705 = vmatprep.subr.mxu0 0.0
      %3706 = vmatpush2.msra.mxu0 0.0
      %3707 = vmatprep.mubr.f32.mxu0 0.0
      %3708 = vmatmul.mubr.f32.gmra.mxu0 %v3641
      %v3709 = vpop.f32.mrf.mxu0
      %v3710 = vadd.f32 0.0, %v3709
      %v3711 = vpop.f32.mrf.mxu0
      %3712 = vdwg.mxu0
      %v3713 = vld [vmem:[%s5 + $0x80] sm:$0xff]
      %v3714 = vld [vmem:[%s5 + $0x88] sm:$0xff]
      %v3715 = vld [vmem:[%s5 + $0x90] sm:$0xff]
      %v3716 = vld [vmem:[%s5 + $0x98] sm:$0xff]
      %v3717 = vld [vmem:[%s5 + $0xa0] sm:$0xff]
      %v3718 = vld [vmem:[%s5 + $0xa8] sm:$0xff]
      %v3719 = vld [vmem:[%s5 + $0xb0] sm:$0xff]
      %v3720 = vld [vmem:[%s5 + $0xb8] sm:$0xff]
      %v3721 = vld [vmem:[%s5 + $0xc0] sm:$0xff]
      %v3722 = vld [vmem:[%s5 + $0xc8] sm:$0xff]
      %v3723 = vld [vmem:[%s5 + $0xd0] sm:$0xff]
      %v3724 = vld [vmem:[%s5 + $0xd8] sm:$0xff]
      %v3725 = vld [vmem:[%s5 + $0xe0] sm:$0xff]
      %v3726 = vld [vmem:[%s5 + $0xe8] sm:$0xff]
      %v3727 = vld [vmem:[%s5 + $0xf0] sm:$0xff]
      %v3728 = vld [vmem:[%s5 + $0xf8] sm:$0xff]
      %3729 = vmatprep.subr.mxu0 0.0
      %3730 = vmatpush1.msra.mxu0 %v3728
      %3731 = vmatprep.subr.mxu0 0.0
      %3732 = vmatpush1.msra.mxu0 %v3727
      %3733 = vmatprep.subr.mxu0 0.0
      %3734 = vmatpush1.msra.mxu0 %v3726
      %3735 = vmatprep.subr.mxu0 0.0
      %3736 = vmatpush1.msra.mxu0 %v3725
      %3737 = vmatprep.subr.mxu0 0.0
      %3738 = vmatpush1.msra.mxu0 %v3724
      %3739 = vmatprep.subr.mxu0 0.0
      %3740 = vmatpush1.msra.mxu0 %v3723
      %3741 = vmatprep.subr.mxu0 0.0
      %3742 = vmatpush1.msra.mxu0 %v3722
      %3743 = vmatprep.subr.mxu0 0.0
      %3744 = vmatpush1.msra.mxu0 %v3721
      %3745 = vmatprep.subr.mxu0 0.0
      %3746 = vmatpush1.msra.mxu0 %v3720
      %3747 = vmatprep.subr.mxu0 0.0
      %3748 = vmatpush1.msra.mxu0 %v3719
      %3749 = vmatprep.subr.mxu0 0.0
      %3750 = vmatpush1.msra.mxu0 %v3718
      %3751 = vmatprep.subr.mxu0 0.0
      %3752 = vmatpush1.msra.mxu0 %v3717
      %3753 = vmatprep.subr.mxu0 0.0
      %3754 = vmatpush1.msra.mxu0 %v3716
      %3755 = vmatprep.subr.mxu0 0.0
      %3756 = vmatpush1.msra.mxu0 %v3715
      %3757 = vmatprep.subr.mxu0 0.0
      %3758 = vmatpush1.msra.mxu0 %v3714
      %3759 = vmatprep.subr.mxu0 0.0
      %3760 = vmatpush1.msra.mxu0 %v3713
      %3761 = vmatprep.subr.mxu0 0.0
      %3762 = vmatpush2.msra.mxu0 0.0
      %3763 = vmatprep.subr.mxu0 0.0
      %3764 = vmatpush2.msra.mxu0 0.0
      %3765 = vmatprep.subr.mxu0 0.0
      %3766 = vmatpush2.msra.mxu0 0.0
      %3767 = vmatprep.subr.mxu0 0.0
      %3768 = vmatpush2.msra.mxu0 0.0
      %3769 = vmatprep.subr.mxu0 0.0
      %3770 = vmatpush2.msra.mxu0 0.0
      %3771 = vmatprep.subr.mxu0 0.0
      %3772 = vmatpush2.msra.mxu0 0.0
      %3773 = vmatprep.subr.mxu0 0.0
      %3774 = vmatpush2.msra.mxu0 0.0
      %3775 = vmatprep.subr.mxu0 0.0
      %3776 = vmatpush2.msra.mxu0 0.0
      %3777 = vmatprep.subr.mxu0 0.0
      %3778 = vmatpush2.msra.mxu0 0.0
      %3779 = vmatprep.subr.mxu0 0.0
      %3780 = vmatpush2.msra.mxu0 0.0
      %3781 = vmatprep.subr.mxu0 0.0
      %3782 = vmatpush2.msra.mxu0 0.0
      %3783 = vmatprep.subr.mxu0 0.0
      %3784 = vmatpush2.msra.mxu0 0.0
      %3785 = vmatprep.subr.mxu0 0.0
      %3786 = vmatpush2.msra.mxu0 0.0
      %3787 = vmatprep.subr.mxu0 0.0
      %3788 = vmatpush2.msra.mxu0 0.0
      %3789 = vmatprep.subr.mxu0 0.0
      %3790 = vmatpush2.msra.mxu0 0.0
      %3791 = vmatprep.subr.mxu0 0.0
      %3792 = vmatpush2.msra.mxu0 0.0
      %3793 = vmatprep.mubr.f32.mxu0 0.0
      %3794 = vmatmul.mubr.f32.gmra.mxu0 %v3710
      %v3795 = vpop.f32.mrf.mxu0
      %v3796 = vadd.f32 0.0, %v3795
      %v3797 = vpop.f32.mrf.mxu0
      %3798 = vdwg.mxu0
      %3799 = vmatprep.subr.mxu0 0.0
      %3800 = vmatpush1.msra.mxu0 %v3635
      %3801 = vmatprep.subr.mxu0 0.0
      %3802 = vmatpush1.msra.mxu0 %v3634
      %3803 = vmatprep.subr.mxu0 0.0
      %3804 = vmatpush1.msra.mxu0 %v3633
      %3805 = vmatprep.subr.mxu0 0.0
      %3806 = vmatpush1.msra.mxu0 %v3632
      %3807 = vmatprep.subr.mxu0 0.0
      %3808 = vmatpush1.msra.mxu0 %v3631
      %3809 = vmatprep.subr.mxu0 0.0
      %3810 = vmatpush1.msra.mxu0 %v3630
      %3811 = vmatprep.subr.mxu0 0.0
      %3812 = vmatpush1.msra.mxu0 %v3629
      %3813 = vmatprep.subr.mxu0 0.0
      %3814 = vmatpush1.msra.mxu0 %v3628
      %3815 = vmatprep.subr.mxu0 0.0
      %3816 = vmatpush1.msra.mxu0 %v3627
      %3817 = vmatprep.subr.mxu0 0.0
      %3818 = vmatpush1.msra.mxu0 %v3626
      %3819 = vmatprep.subr.mxu0 0.0
      %3820 = vmatpush1.msra.mxu0 %v3625
      %3821 = vmatprep.subr.mxu0 0.0
      %3822 = vmatpush1.msra.mxu0 %v3624
      %3823 = vmatprep.subr.mxu0 0.0
      %3824 = vmatpush1.msra.mxu0 %v3623
      %3825 = vmatprep.subr.mxu0 0.0
      %3826 = vmatpush1.msra.mxu0 %v3622
      %3827 = vmatprep.subr.mxu0 0.0
      %3828 = vmatpush1.msra.mxu0 %v3621
      %3829 = vmatprep.subr.mxu0 0.0
      %3830 = vmatpush1.msra.mxu0 %v3620
      %3831 = vmatprep.subr.mxu0 0.0
      %3832 = vmatpush2.msra.mxu0 0.0
      %3833 = vmatprep.subr.mxu0 0.0
      %3834 = vmatpush2.msra.mxu0 0.0
      %3835 = vmatprep.subr.mxu0 0.0
      %3836 = vmatpush2.msra.mxu0 0.0
      %3837 = vmatprep.subr.mxu0 0.0
      %3838 = vmatpush2.msra.mxu0 0.0
      %3839 = vmatprep.subr.mxu0 0.0
      %3840 = vmatpush2.msra.mxu0 0.0
      %3841 = vmatprep.subr.mxu0 0.0
      %3842 = vmatpush2.msra.mxu0 0.0
      %3843 = vmatprep.subr.mxu0 0.0
      %3844 = vmatpush2.msra.mxu0 0.0
      %3845 = vmatprep.subr.mxu0 0.0
      %3846 = vmatpush2.msra.mxu0 0.0
      %3847 = vmatprep.subr.mxu0 0.0
      %3848 = vmatpush2.msra.mxu0 0.0
      %3849 = vmatprep.subr.mxu0 0.0
      %3850 = vmatpush2.msra.mxu0 0.0
      %3851 = vmatprep.subr.mxu0 0.0
      %3852 = vmatpush2.msra.mxu0 0.0
      %3853 = vmatprep.subr.mxu0 0.0
      %3854 = vmatpush2.msra.mxu0 0.0
      %3855 = vmatprep.subr.mxu0 0.0
      %3856 = vmatpush2.msra.mxu0 0.0
      %3857 = vmatprep.subr.mxu0 0.0
      %3858 = vmatpush2.msra.mxu0 0.0
      %3859 = vmatprep.subr.mxu0 0.0
      %3860 = vmatpush2.msra.mxu0 0.0
      %3861 = vmatprep.subr.mxu0 0.0
      %3862 = vmatpush2.msra.mxu0 0.0
      %3863 = vmatprep.mubr.f32.mxu0 0.0
      %3864 = vmatmul.mubr.f32.gmra.mxu0 %v3617
      %v3865 = vpop.f32.mrf.mxu0
      %v3866 = vadd.f32 %v3796, %v3865
      %v3867 = vpop.f32.mrf.mxu0
      %3868 = vdwg.mxu0
      %v3869 = vadd.s32 %v3538, 2
      %vm3870 = vcmp.eq.s32.totalorder %v3535, %v3869
      %v3871 = vsel %vm3870, 1, 0
      %v3872 = vcvt.s32.f32 %v3871
      %v3874 = vsel %vm3542, %v3872, 0
      %3876 = vmatprep.subr.mxu0 0.0
      %3877 = vmatpush1.msra.mxu0 0.0
      %3878 = vmatprep.subr.mxu0 0.0
      %3879 = vmatpush1.msra.mxu0 0.0
      %3880 = vmatprep.subr.mxu0 0.0
      %3881 = vmatpush1.msra.mxu0 0.0
      %3882 = vmatprep.subr.mxu0 0.0
      %3883 = vmatpush1.msra.mxu0 0.0
      %3884 = vmatprep.subr.mxu0 0.0
      %3885 = vmatpush1.msra.mxu0 0.0
      %3886 = vmatprep.subr.mxu0 0.0
      %3887 = vmatpush1.msra.mxu0 0.0
      %3888 = vmatprep.subr.mxu0 0.0
      %3889 = vmatpush1.msra.mxu0 0.0
      %3890 = vmatprep.subr.mxu0 0.0
      %3891 = vmatpush1.msra.mxu0 0.0
      %3892 = vmatprep.subr.mxu0 0.0
      %3893 = vmatpush1.msra.mxu0 0.0
      %3894 = vmatprep.subr.mxu0 0.0
      %3895 = vmatpush1.msra.mxu0 0.0
      %3896 = vmatprep.subr.mxu0 0.0
      %3897 = vmatpush1.msra.mxu0 0.0
      %3898 = vmatprep.subr.mxu0 0.0
      %3899 = vmatpush1.msra.mxu0 0.0
      %3900 = vmatprep.subr.mxu0 0.0
      %3901 = vmatpush1.msra.mxu0 0.0
      %3902 = vmatprep.subr.mxu0 0.0
      %3903 = vmatpush1.msra.mxu0 0.0
      %3904 = vmatprep.subr.mxu0 0.0
      %3905 = vmatpush1.msra.mxu0 0.0
      %3906 = vmatprep.subr.mxu0 0.0
      %3907 = vmatpush1.msra.mxu0 %v3548
      %3908 = vmatprep.subr.mxu0 0.0
      %3909 = vmatpush2.msra.mxu0 0.0
      %3910 = vmatprep.subr.mxu0 0.0
      %3911 = vmatpush2.msra.mxu0 0.0
      %3912 = vmatprep.subr.mxu0 0.0
      %3913 = vmatpush2.msra.mxu0 0.0
      %3914 = vmatprep.subr.mxu0 0.0
      %3915 = vmatpush2.msra.mxu0 0.0
      %3916 = vmatprep.subr.mxu0 0.0
      %3917 = vmatpush2.msra.mxu0 0.0
      %3918 = vmatprep.subr.mxu0 0.0
      %3919 = vmatpush2.msra.mxu0 0.0
      %3920 = vmatprep.subr.mxu0 0.0
      %3921 = vmatpush2.msra.mxu0 0.0
      %3922 = vmatprep.subr.mxu0 0.0
      %3923 = vmatpush2.msra.mxu0 0.0
      %3924 = vmatprep.subr.mxu0 0.0
      %3925 = vmatpush2.msra.mxu0 0.0
      %3926 = vmatprep.subr.mxu0 0.0
      %3927 = vmatpush2.msra.mxu0 0.0
      %3928 = vmatprep.subr.mxu0 0.0
      %3929 = vmatpush2.msra.mxu0 0.0
      %3930 = vmatprep.subr.mxu0 0.0
      %3931 = vmatpush2.msra.mxu0 0.0
      %3932 = vmatprep.subr.mxu0 0.0
      %3933 = vmatpush2.msra.mxu0 0.0
      %3934 = vmatprep.subr.mxu0 0.0
      %3935 = vmatpush2.msra.mxu0 0.0
      %3936 = vmatprep.subr.mxu0 0.0
      %3937 = vmatpush2.msra.mxu0 0.0
      %3938 = vmatprep.subr.mxu0 0.0
      %3939 = vmatpush2.msra.mxu0 0.0
      %3940 = vmatprep.mubr.f32.mxu0 0.0
      %3941 = vmatmul.mubr.f32.gmra.mxu0 %v3874
      %v3942 = vpop.f32.mrf.mxu0
      %v3943 = vadd.f32 0.0, %v3942
      %v3944 = vpop.f32.mrf.mxu0
      %3945 = vdwg.mxu0
      %v3946 = vld [vmem:[%s5 + $0x100] sm:$0xff]
      %v3947 = vld [vmem:[%s5 + $0x108] sm:$0xff]
      %v3948 = vld [vmem:[%s5 + $0x110] sm:$0xff]
      %v3949 = vld [vmem:[%s5 + $0x118] sm:$0xff]
      %v3950 = vld [vmem:[%s5 + $0x120] sm:$0xff]
      %v3951 = vld [vmem:[%s5 + $0x128] sm:$0xff]
      %v3952 = vld [vmem:[%s5 + $0x130] sm:$0xff]
      %v3953 = vld [vmem:[%s5 + $0x138] sm:$0xff]
      %v3954 = vld [vmem:[%s5 + $0x140] sm:$0xff]
      %v3955 = vld [vmem:[%s5 + $0x148] sm:$0xff]
      %v3956 = vld [vmem:[%s5 + $0x150] sm:$0xff]
      %v3957 = vld [vmem:[%s5 + $0x158] sm:$0xff]
      %v3958 = vld [vmem:[%s5 + $0x160] sm:$0xff]
      %v3959 = vld [vmem:[%s5 + $0x168] sm:$0xff]
      %v3960 = vld [vmem:[%s5 + $0x170] sm:$0xff]
      %v3961 = vld [vmem:[%s5 + $0x178] sm:$0xff]
      %3962 = vmatprep.subr.mxu0 0.0
      %3963 = vmatpush1.msra.mxu0 %v3961
      %3964 = vmatprep.subr.mxu0 0.0
      %3965 = vmatpush1.msra.mxu0 %v3960
      %3966 = vmatprep.subr.mxu0 0.0
      %3967 = vmatpush1.msra.mxu0 %v3959
      %3968 = vmatprep.subr.mxu0 0.0
      %3969 = vmatpush1.msra.mxu0 %v3958
      %3970 = vmatprep.subr.mxu0 0.0
      %3971 = vmatpush1.msra.mxu0 %v3957
      %3972 = vmatprep.subr.mxu0 0.0
      %3973 = vmatpush1.msra.mxu0 %v3956
      %3974 = vmatprep.subr.mxu0 0.0
      %3975 = vmatpush1.msra.mxu0 %v3955
      %3976 = vmatprep.subr.mxu0 0.0
      %3977 = vmatpush1.msra.mxu0 %v3954
      %3978 = vmatprep.subr.mxu0 0.0
      %3979 = vmatpush1.msra.mxu0 %v3953
      %3980 = vmatprep.subr.mxu0 0.0
      %3981 = vmatpush1.msra.mxu0 %v3952
      %3982 = vmatprep.subr.mxu0 0.0
      %3983 = vmatpush1.msra.mxu0 %v3951
      %3984 = vmatprep.subr.mxu0 0.0
      %3985 = vmatpush1.msra.mxu0 %v3950
      %3986 = vmatprep.subr.mxu0 0.0
      %3987 = vmatpush1.msra.mxu0 %v3949
      %3988 = vmatprep.subr.mxu0 0.0
      %3989 = vmatpush1.msra.mxu0 %v3948
      %3990 = vmatprep.subr.mxu0 0.0
      %3991 = vmatpush1.msra.mxu0 %v3947
      %3992 = vmatprep.subr.mxu0 0.0
      %3993 = vmatpush1.msra.mxu0 %v3946
      %3994 = vmatprep.subr.mxu0 0.0
      %3995 = vmatpush2.msra.mxu0 0.0
      %3996 = vmatprep.subr.mxu0 0.0
      %3997 = vmatpush2.msra.mxu0 0.0
      %3998 = vmatprep.subr.mxu0 0.0
      %3999 = vmatpush2.msra.mxu0 0.0
      %4000 = vmatprep.subr.mxu0 0.0
      %4001 = vmatpush2.msra.mxu0 0.0
      %4002 = vmatprep.subr.mxu0 0.0
      %4003 = vmatpush2.msra.mxu0 0.0
      %4004 = vmatprep.subr.mxu0 0.0
      %4005 = vmatpush2.msra.mxu0 0.0
      %4006 = vmatprep.subr.mxu0 0.0
      %4007 = vmatpush2.msra.mxu0 0.0
      %4008 = vmatprep.subr.mxu0 0.0
      %4009 = vmatpush2.msra.mxu0 0.0
      %4010 = vmatprep.subr.mxu0 0.0
      %4011 = vmatpush2.msra.mxu0 0.0
      %4012 = vmatprep.subr.mxu0 0.0
      %4013 = vmatpush2.msra.mxu0 0.0
      %4014 = vmatprep.subr.mxu0 0.0
      %4015 = vmatpush2.msra.mxu0 0.0
      %4016 = vmatprep.subr.mxu0 0.0
      %4017 = vmatpush2.msra.mxu0 0.0
      %4018 = vmatprep.subr.mxu0 0.0
      %4019 = vmatpush2.msra.mxu0 0.0
      %4020 = vmatprep.subr.mxu0 0.0
      %4021 = vmatpush2.msra.mxu0 0.0
      %4022 = vmatprep.subr.mxu0 0.0
      %4023 = vmatpush2.msra.mxu0 0.0
      %4024 = vmatprep.subr.mxu0 0.0
      %4025 = vmatpush2.msra.mxu0 0.0
      %4026 = vmatprep.mubr.f32.mxu0 0.0
      %4027 = vmatmul.mubr.f32.gmra.mxu0 %v3943
      %v4028 = vpop.f32.mrf.mxu0
      %v4029 = vadd.f32 0.0, %v4028
      %v4030 = vpop.f32.mrf.mxu0
      %4031 = vdwg.mxu0
      %v4032 = vadd.f32 %v3866, %v4029
      %v4033 = vld [vmem:[#allocation11] sm:$0x1]
      %v4035 = vlaneseq
      %v4036 = vshrl.u32 %v4035, 7
      %v4037 = vsub.s32 0, %v4036
      %v4038 = vrot.slane %v4033, %v4037
      %v4040 = vadd.f32 %v4032, %v4038
      %v4041 = vmax.f32 %v4040, 0.0
      %v4042 = vld [vmem:[%s7] sm:$0xff]
      %v4043 = vld [vmem:[%s7 + $0x8] sm:$0xff]
      %v4044 = vld [vmem:[%s7 + $0x10] sm:$0xff]
      %v4045 = vld [vmem:[%s7 + $0x18] sm:$0xff]
      %v4046 = vld [vmem:[%s7 + $0x20] sm:$0xff]
      %v4047 = vld [vmem:[%s7 + $0x28] sm:$0xff]
      %v4048 = vld [vmem:[%s7 + $0x30] sm:$0xff]
      %v4049 = vld [vmem:[%s7 + $0x38] sm:$0xff]
      %v4050 = vld [vmem:[#allocation12] sm:$0x1]
      %v4052 = vlaneseq
      %v4053 = vshrl.u32 %v4052, 7
      %v4054 = vsub.s32 0, %v4053
      %v4055 = vrot.slane %v4050, %v4054
      %vm4057 = vcmask 523264
      %v4059 = vsel %vm4057, %v4041, 0
      %4061 = vmatprep.subr.mxu0 0.0
      %4062 = vmatpush1.msra.mxu0 0.0
      %4063 = vmatprep.subr.mxu0 0.0
      %4064 = vmatpush1.msra.mxu0 0.0
      %4065 = vmatprep.subr.mxu0 0.0
      %4066 = vmatpush1.msra.mxu0 0.0
      %4067 = vmatprep.subr.mxu0 0.0
      %4068 = vmatpush1.msra.mxu0 0.0
      %4069 = vmatprep.subr.mxu0 0.0
      %4070 = vmatpush1.msra.mxu0 0.0
      %4071 = vmatprep.subr.mxu0 0.0
      %4072 = vmatpush1.msra.mxu0 0.0
      %4073 = vmatprep.subr.mxu0 0.0
      %4074 = vmatpush1.msra.mxu0 0.0
      %4075 = vmatprep.subr.mxu0 0.0
      %4076 = vmatpush1.msra.mxu0 0.0
      %4077 = vmatprep.subr.mxu0 0.0
      %4078 = vmatpush1.msra.mxu0 %v4049
      %4079 = vmatprep.subr.mxu0 0.0
      %4080 = vmatpush1.msra.mxu0 %v4048
      %4081 = vmatprep.subr.mxu0 0.0
      %4082 = vmatpush1.msra.mxu0 %v4047
      %4083 = vmatprep.subr.mxu0 0.0
      %4084 = vmatpush1.msra.mxu0 %v4046
      %4085 = vmatprep.subr.mxu0 0.0
      %4086 = vmatpush1.msra.mxu0 %v4045
      %4087 = vmatprep.subr.mxu0 0.0
      %4088 = vmatpush1.msra.mxu0 %v4044
      %4089 = vmatprep.subr.mxu0 0.0
      %4090 = vmatpush1.msra.mxu0 %v4043
      %4091 = vmatprep.subr.mxu0 0.0
      %4092 = vmatpush1.msra.mxu0 %v4042
      %4093 = vmatprep.subr.mxu0 0.0
      %4094 = vmatpush2.msra.mxu0 0.0
      %4095 = vmatprep.subr.mxu0 0.0
      %4096 = vmatpush2.msra.mxu0 0.0
      %4097 = vmatprep.subr.mxu0 0.0
      %4098 = vmatpush2.msra.mxu0 0.0
      %4099 = vmatprep.subr.mxu0 0.0
      %4100 = vmatpush2.msra.mxu0 0.0
      %4101 = vmatprep.subr.mxu0 0.0
      %4102 = vmatpush2.msra.mxu0 0.0
      %4103 = vmatprep.subr.mxu0 0.0
      %4104 = vmatpush2.msra.mxu0 0.0
      %4105 = vmatprep.subr.mxu0 0.0
      %4106 = vmatpush2.msra.mxu0 0.0
      %4107 = vmatprep.subr.mxu0 0.0
      %4108 = vmatpush2.msra.mxu0 0.0
      %4109 = vmatprep.subr.mxu0 0.0
      %4110 = vmatpush2.msra.mxu0 0.0
      %4111 = vmatprep.subr.mxu0 0.0
      %4112 = vmatpush2.msra.mxu0 0.0
      %4113 = vmatprep.subr.mxu0 0.0
      %4114 = vmatpush2.msra.mxu0 0.0
      %4115 = vmatprep.subr.mxu0 0.0
      %4116 = vmatpush2.msra.mxu0 0.0
      %4117 = vmatprep.subr.mxu0 0.0
      %4118 = vmatpush2.msra.mxu0 0.0
      %4119 = vmatprep.subr.mxu0 0.0
      %4120 = vmatpush2.msra.mxu0 0.0
      %4121 = vmatprep.subr.mxu0 0.0
      %4122 = vmatpush2.msra.mxu0 0.0
      %4123 = vmatprep.subr.mxu0 0.0
      %4124 = vmatpush2.msra.mxu0 0.0
      %4125 = vmatprep.mubr.f32.mxu0 0.0
      %4126 = vmatmul.mubr.f32.gmra.mxu0 %v4059
      %v4127 = vpop.f32.mrf.mxu0
      %v4128 = vadd.f32 %v4055, %v4127
      %v4129 = vpop.f32.mrf.mxu0
      %4130 = vdwg.mxu0
      %vm4131 = vcmask 9216
      %4132 = vst.msk [vmem:[#allocation14] sm:$0x3] %vm4131, %v4128
    $region69: #{multi_image_forward.1} parent=1 // pred_fallthru
      _
    // Predicated region
    $region70: #{multi_image_forward.1} parent=1 // pred_check
      _
    $region71: #{multi_image_forward.1} parent=1 // pred_check_branch
      %4134 = sbr.rel (0) target = $region73
    $region72: #{multi_image_forward.1} parent=1 // pred_region
      %s4136 = ssub.s32 32, 32
      %4137 = vsyncadd [#allocation5], %s4136
      %s4139 = sshll.u32 [#allocation14], 4
      %s4140 = int_to_ptr.vmem [resolvable:$true] %s4139
      %4142 = dma.vmem_to_hbm [thread:$0]  %s4140, 32, %s9, [#allocation5]
    $region73: #{multi_image_forward.1} parent=1 // pred_fallthru
      _
    // Predicated region
    $region74: #{multi_image_forward.1} parent=1 // pred_check
      _
    $region75: #{multi_image_forward.1} parent=1 // pred_check_branch
      %4144 = sbr.rel (0) target = $region77
    $region76: #{multi_image_forward.1} parent=1 // pred_region
      %4145 = dma.done [#allocation5], 32
    $region77: #{multi_image_forward.1} parent=1 // pred_fallthru
      _
    %4146 = vsyncpa [#allocation4], 1
    %4147 = vsyncpa [#allocation7], 1
    %4148 = vsyncpa [#allocation10], 1
    %4149 = vsyncpa [#allocation13], 1
    %4150 = vsyncpa [#allocation5], 1

</llo_original>
